<compile_context>
chip_gen: v6e
topology: v6e:2x2x1
jax: 0.10.0
libtpu: 0.0.40
codegen_flags: <defaults>
</compile_context>

<pallas_src>
import functools

import jax
import jax.numpy as jnp
from jax.experimental import pallas as pl
from jax.experimental.pallas import tpu as pltpu

# ---------------------------------------------------------------------------
# Model hyper-parameters (small stand-in for CLIP ViT-B/32 text tower:
# width 512 -> 128 (kept a multiple of 128 for lane-dense stores),
# heads 8 -> 4, layers 12 -> 2, ctx 77 -> 8, vocab 49408 -> 64,
# embed_dim 512 -> 16).
# ---------------------------------------------------------------------------
VOCAB = 64
CTX = 8            # L  (context length / sequence length)
WIDTH = 128        # D  (transformer width, lane-dense)
HEADS = 4          # H
HEAD_DIM = WIDTH // HEADS
LAYERS = 2
EMBED = 16         # E  (text_projection output dim)
EMBED_PAD = 128    # lane-dense padded projection output (sliced to EMBED)
LN_EPS = 1e-5
MASK_NEG = -1e30   # finite "-inf" for the causal mask (NaN-safe)

_VMEM = pl.BlockSpec(memory_space=pltpu.MemorySpace.VMEM)
_SMEM = pl.BlockSpec(memory_space=pltpu.MemorySpace.SMEM)

# Stacked per-layer parameter names, in kernel-argument order.
_LAYER_KEYS = ("ln1_w", "ln1_b", "wq", "wk", "wv", "bq", "bk", "bv",
               "wout", "bout", "ln2_w", "ln2_b", "wfc", "bfc", "wproj",
               "bproj")


# ---------------------------------------------------------------------------
# Helpers
# ---------------------------------------------------------------------------
def _layer_norm(x, w, b):
    """LayerNorm with statistics computed in f32 (inputs may be bf16)."""
    xf = x.astype(jnp.float32)
    mu = jnp.mean(xf, axis=-1, keepdims=True)
    var = jnp.mean(jnp.square(xf - mu), axis=-1, keepdims=True)
    return ((xf - mu) * jax.lax.rsqrt(var + LN_EPS) * w.astype(jnp.float32)
            + b.astype(jnp.float32))


def _stacked_spec(shape):
    """BlockSpec for a (LAYERS, ...) stacked weight: stream one layer/step."""
    ndim = len(shape)
    block = (None,) + tuple(shape[1:])      # layer dim squeezed in the kernel
    return pl.BlockSpec(block, lambda i, l, _n=ndim: (l,) + (0,) * (_n - 1))


# ---------------------------------------------------------------------------
# Pallas kernels
# ---------------------------------------------------------------------------
def layers_kernel(x_ref,
                  ln1_w_ref, ln1_b_ref,
                  wq_ref, wk_ref, wv_ref, bq_ref, bk_ref, bv_ref,
                  wout_ref, bout_ref,
                  ln2_w_ref, ln2_b_ref,
                  wfc_ref, bfc_ref, wproj_ref, bproj_ref,
                  o_ref, ctx_slab):
    """One residual attention block per grid step.

    grid = (batch_tiles, LAYERS):
      * axis 0 ("parallel"): one sequence per tile (megacore shardable on
        v7x; attention never crosses a tile boundary).
      * axis 1 ("arbitrary"): layer index.  The f32 residual stream lives in
        the VMEM-resident output block (same block index for every layer =>
        written back to HBM only after the last layer); per-layer weights
        are streamed / double-buffered by their (l, ...) BlockSpecs.
    """
    # First layer step of each tile: seed the resident residual stream.
    @pl.when(pl.program_id(1) == 0)
    def _():
        o_ref[...] = x_ref[...]

    seq, _ = o_ref.shape                     # (L, WIDTH)
    x = o_ref[...]                           # f32 residual stream

    # Causal mask built in-kernel (no extra HBM input / VMEM buffer).
    row = jax.lax.broadcasted_iota(jnp.int32, (seq, seq), 0)
    col = jax.lax.broadcasted_iota(jnp.int32, (seq, seq), 1)
    causal = jnp.where(col > row, jnp.float32(MASK_NEG), jnp.float32(0.0))

    # ---- multi-head causal self-attention --------------------------------
    h = _layer_norm(x, ln1_w_ref[...], ln1_b_ref[...]).astype(jnp.bfloat16)
    # Per-head (WIDTH, HEAD_DIM) q/k/v projections: full-K contractions, no
    # lane-axis slicing of a fused qkv result.  1/sqrt(HEAD_DIM) is folded
    # statically into wq / bq.
    # TODO(synk): at production HEADS, switch this static loop to
    # lax.fori_loop(..., unroll=True) (or a head grid axis) to bound vreg
    # pressure.
    for hd in range(HEADS):
        qh = (jnp.dot(h, wq_ref[hd], preferred_element_type=jnp.float32)
              + bq_ref[hd]).astype(jnp.bfloat16)
        kh = (jnp.dot(h, wk_ref[hd], preferred_element_type=jnp.float32)
              + bk_ref[hd]).astype(jnp.bfloat16)
        vh = (jnp.dot(h, wv_ref[hd], preferred_element_type=jnp.float32)
              + bv_ref[hd]).astype(jnp.bfloat16)
        s = jax.lax.dot_general(qh, kh, (((1,), (1,)), ((), ())),
                                preferred_element_type=jnp.float32) + causal
        m = jnp.max(s, axis=-1, keepdims=True)
        e = jnp.exp(s - m)
        p = e * pl.reciprocal(jnp.sum(e, axis=-1, keepdims=True), approx=True)
        ctx = jnp.dot(p.astype(jnp.bfloat16), vh,
                      preferred_element_type=jnp.float32)
        # Head context goes into its lane slice of the (L, WIDTH) slab; heads
        # are recombined by ONE full-K out-projection matmul below.
        ctx_slab[:, pl.ds(hd * HEAD_DIM, HEAD_DIM)] = ctx.astype(jnp.bfloat16)

    attn = jnp.dot(ctx_slab[...], wout_ref[...],
                   preferred_element_type=jnp.float32) + bout_ref[...]
    x = x + attn

    # ---- MLP with QuickGELU ----------------------------------------------
    h2 = _layer_norm(x, ln2_w_ref[...], ln2_b_ref[...]).astype(jnp.bfloat16)
    h2 = jnp.dot(h2, wfc_ref[...], preferred_element_type=jnp.float32) + bfc_ref[...]
    h2 = h2 * jax.nn.sigmoid(1.702 * h2)     # QuickGELU (f32)
    h2 = jnp.dot(h2.astype(jnp.bfloat16), wproj_ref[...],
                 preferred_element_type=jnp.float32) + bproj_ref[...]
    x = x + h2

    o_ref[...] = x                            # residual stays f32 (no rounding)


def final_kernel(eot_ref, x_ref, lnf_w_ref, lnf_b_ref, proj_ref,
                 hidden_ref, emb_ref, eot_buf, *, batch):
    """ln_final, EOT-row gather (SMEM-indexed) and text_projection matmul."""
    n, _ = x_ref.shape
    seq = n // batch

    xn = _layer_norm(x_ref[...], lnf_w_ref[...], lnf_b_ref[...])   # (B*L, D)
    hidden_ref[...] = xn.astype(hidden_ref.dtype)

    # Gather EOT rows from the already-normalized hidden (no redundant
    # LayerNorm, no concatenate): SMEM indices drive dynamic row copies into
    # a (B, D) VMEM scratch.
    for b in range(batch):
        row = b * seq + eot_ref[b]
        eot_buf[pl.ds(b, 1), :] = hidden_ref[pl.ds(row, 1), :]

    emb_ref[...] = jnp.dot(eot_buf[...].astype(jnp.bfloat16), proj_ref[...],
                           preferred_element_type=jnp.float32
                           ).astype(emb_ref.dtype)


# ---------------------------------------------------------------------------
# Parameter construction (deterministic synthetic init, kernel-ready layout)
# ---------------------------------------------------------------------------
def init_params(key):
    ks = iter(jax.random.split(key, 16))

    def nrm(shape, scale=0.02, dtype=jnp.float32):
        return (scale * jax.random.normal(next(ks), shape,
                                          dtype=jnp.float32)).astype(dtype)

    qk_scale = jnp.float32(HEAD_DIM) ** -0.5   # folded into wq / bq (static)
    params = {
        "token_embedding": nrm((VOCAB, WIDTH)),
        "positional_embedding": nrm((CTX, WIDTH), 0.01),
        "ln_final_w": jnp.ones((1, WIDTH), jnp.float32),
        "ln_final_b": jnp.zeros((1, WIDTH), jnp.float32),
        "text_projection": nrm((WIDTH, EMBED), WIDTH ** -0.5),
        # ---- stacked per-layer transformer weights (leading LAYERS axis) --
        # Matmul weights are stored pre-transposed (in_dim, out_dim) and in
        # bf16 (native MXU path); LayerNorm params and biases stay f32.
        "ln1_w": jnp.ones((LAYERS, 1, WIDTH), jnp.float32),
        "ln1_b": jnp.zeros((LAYERS, 1, WIDTH), jnp.float32),
        # Per-head (WIDTH, HEAD_DIM) projections; q is pre-scaled so no
        # in-kernel multiply by 1/sqrt(HEAD_DIM) is needed.
        "wq": (nrm((LAYERS, HEADS, WIDTH, HEAD_DIM)) * qk_scale
               ).astype(jnp.bfloat16),
        "wk": nrm((LAYERS, HEADS, WIDTH, HEAD_DIM), dtype=jnp.bfloat16),
        "wv": nrm((LAYERS, HEADS, WIDTH, HEAD_DIM), dtype=jnp.bfloat16),
        # bq carries the same folded scale (zeros here, kept for semantics).
        "bq": jnp.zeros((LAYERS, HEADS, 1, HEAD_DIM), jnp.float32),
        "bk": jnp.zeros((LAYERS, HEADS, 1, HEAD_DIM), jnp.float32),
        "bv": jnp.zeros((LAYERS, HEADS, 1, HEAD_DIM), jnp.float32),
        # Full-width out-projection: heads recombined by a single matmul.
        "wout": nrm((LAYERS, WIDTH, WIDTH), dtype=jnp.bfloat16),
        "bout": jnp.zeros((LAYERS, 1, WIDTH), jnp.float32),
        "ln2_w": jnp.ones((LAYERS, 1, WIDTH), jnp.float32),
        "ln2_b": jnp.zeros((LAYERS, 1, WIDTH), jnp.float32),
        "wfc": nrm((LAYERS, WIDTH, 4 * WIDTH), dtype=jnp.bfloat16),
        "bfc": jnp.zeros((LAYERS, 1, 4 * WIDTH), jnp.float32),
        "wproj": nrm((LAYERS, 4 * WIDTH, WIDTH), dtype=jnp.bfloat16),
        "bproj": jnp.zeros((LAYERS, 1, WIDTH), jnp.float32),
    }
    return params


# ---------------------------------------------------------------------------
# Forward pass
# ---------------------------------------------------------------------------
@jax.jit
def clip_text_forward(tokens, params):
    """tokens: (B, L) int32, EOT token has the highest id in each row.

    Returns dict(text_emb=(B, E), hidden=(B, L, D), mask=(B, L) bool).
    """
    B, L = tokens.shape
    N = B * L

    # token embedding + positional embedding (gather = glue, stays in XLA)
    x = jnp.take(params["token_embedding"], tokens, axis=0)        # (B, L, D)
    x = x + params["positional_embedding"][None, :, :]
    # f32 residual stream, flattened so every tile is a 2D (L, WIDTH) block
    x = x.reshape(N, WIDTH).astype(jnp.float32)

    # ---- all transformer layers in a single pallas_call ------------------
    layer_in_specs = [
        pl.BlockSpec((L, WIDTH), lambda i, l: (i, 0)),   # residual stream
    ] + [_stacked_spec(params[k].shape) for k in _LAYER_KEYS]

    x = pl.pallas_call(
        layers_kernel,
        grid=(B, LAYERS),                     # (batch tile = 1 sequence, layer)
        in_specs=layer_in_specs,
        out_specs=pl.BlockSpec((L, WIDTH), lambda i, l: (i, 0)),
        out_shape=jax.ShapeDtypeStruct((N, WIDTH), jnp.float32),
        scratch_shapes=[pltpu.VMEM((L, WIDTH), jnp.bfloat16)],     # ctx slab
        # Residual input buffer donated / aliased to the residual output.
        input_output_aliases={0: 0},
        compiler_params=pltpu.CompilerParams(
            # batch-tile axis parallel (v7x 2 TCs), layer axis carries the
            # resident residual stream -> sequential.
            dimension_semantics=("parallel", "arbitrary"),
            # Fits v7x's 64 MiB scoped VMEM with headroom; raise toward
            # ~96-112 MiB on v5e/v6e when scaling to production widths.
            vmem_limit_bytes=48 * 1024 * 1024,
        ),
        # TODO(synk): on v5e at production width, consider
        # pipeline_mode=pl.Buffered(3) on the wfc/wproj specs if the weight
        # DMA turns out to be exposed behind compute.
    )(x, *(params[k] for k in _LAYER_KEYS))

    # ---- ln_final + EOT gather + text projection -------------------------
    lengths = jnp.argmax(tokens, axis=-1).astype(jnp.int32)        # EOT pos
    # pad the projection to a lane-dense 128-wide output, slice afterwards
    proj_pad = jnp.zeros((WIDTH, EMBED_PAD), jnp.bfloat16)
    proj_pad = proj_pad.at[:, :EMBED].set(
        params["text_projection"].astype(jnp.bfloat16))

    hidden_flat, emb_pad = pl.pallas_call(
        functools.partial(final_kernel, batch=B),
        out_shape=(jax.ShapeDtypeStruct((N, WIDTH), jnp.float32),
                   jax.ShapeDtypeStruct((B, EMBED_PAD), jnp.float32)),
        in_specs=[_SMEM, _VMEM, _VMEM, _VMEM, _VMEM],
        out_specs=(_VMEM, _VMEM),
        scratch_shapes=[pltpu.VMEM((B, WIDTH), jnp.float32)],
    )(lengths, x, params["ln_final_w"], params["ln_final_b"], proj_pad)

    hidden = hidden_flat.reshape(B, L, WIDTH)
    text_emb = emb_pad[:, :EMBED]

    # lengths_to_mask semantics of the reference: mask[b, i] = i < argmax(row)
    mask = jnp.arange(L)[None, :] < lengths[:, None]
    # TODO(synk): PyTorch truncates `hidden`/`mask` to max(lengths), which is
    # a data-dependent shape; we return the full (B, L) versions instead.
    return {"text_emb": text_emb, "hidden": hidden, "mask": mask}


# ---------------------------------------------------------------------------
if __name__ == "__main__":
    # TODO(synk): clip.tokenize (BPE string tokenization) has no Pallas
    # equivalent; we synthesize token ids directly with the EOT token
    # (highest id) placed at the end of each "sentence".
    key = jax.random.PRNGKey(0)
    pkey, tkey = jax.random.split(key)
    params = init_params(pkey)

    B = 2
    EOT = VOCAB - 1
    body = jax.random.randint(tkey, (B, CTX), 1, VOCAB - 4, dtype=jnp.int32)
    tokens = jnp.zeros((B, CTX), jnp.int32)
    # sentence 0: 5 content tokens then EOT at position 5; sentence 1: EOT at 7
    tokens = tokens.at[0, :5].set(body[0, :5]).at[0, 5].set(EOT)
    tokens = tokens.at[1, :7].set(body[1, :7]).at[1, 7].set(EOT)

    out = clip_text_forward(tokens, params)
    jax.block_until_ready(out)

    assert out["text_emb"].shape == (B, EMBED)
    assert out["hidden"].shape == (B, CTX, WIDTH)
    assert out["mask"].shape == (B, CTX)
    assert bool(jnp.all(jnp.isfinite(out["text_emb"])))
    assert bool(jnp.all(jnp.isfinite(out["hidden"])))
    print("KERNEL_OK")
</pallas_src>

<mosaic_0001>
module attributes {stable_mosaic.version = 11 : i64} {
  func.func @layers_kernel(%arg0: i32, %arg1: i32, %arg2: memref<8x128xf32, #tpu.memory_space<vmem>>, %arg3: memref<1x1x128xf32, #tpu.memory_space<vmem>>, %arg4: memref<1x1x128xf32, #tpu.memory_space<vmem>>, %arg5: memref<1x4x128x32xbf16, #tpu.memory_space<vmem>>, %arg6: memref<1x4x128x32xbf16, #tpu.memory_space<vmem>>, %arg7: memref<1x4x128x32xbf16, #tpu.memory_space<vmem>>, %arg8: memref<1x4x1x32xf32, #tpu.memory_space<vmem>>, %arg9: memref<1x4x1x32xf32, #tpu.memory_space<vmem>>, %arg10: memref<1x4x1x32xf32, #tpu.memory_space<vmem>>, %arg11: memref<1x128x128xbf16, #tpu.memory_space<vmem>>, %arg12: memref<1x1x128xf32, #tpu.memory_space<vmem>>, %arg13: memref<1x1x128xf32, #tpu.memory_space<vmem>>, %arg14: memref<1x1x128xf32, #tpu.memory_space<vmem>>, %arg15: memref<1x128x512xbf16, #tpu.memory_space<vmem>>, %arg16: memref<1x1x512xf32, #tpu.memory_space<vmem>>, %arg17: memref<1x512x128xbf16, #tpu.memory_space<vmem>>, %arg18: memref<1x1x128xf32, #tpu.memory_space<vmem>>, %arg19: memref<8x128xf32, #tpu.memory_space<vmem>>, %arg20: memref<8x128xbf16, #tpu.memory_space<vmem>>) attributes {dimension_semantics = [#tpu.dimension_semantics<parallel>, #tpu.dimension_semantics<arbitrary>], iteration_bounds = array<i64: 2, 2>, scalar_prefetch = 0 : i64, scratch_operands = 1 : i64, tpu.core_type = #tpu.core_type<tc>, window_params = [{transform_indices = @transform_0, window_bounds = array<i64: 8, 128>}, {transform_indices = @transform_1, window_bounds = array<i64: 1, 1, 128>}, {transform_indices = @transform_2, window_bounds = array<i64: 1, 1, 128>}, {transform_indices = @transform_3, window_bounds = array<i64: 1, 4, 128, 32>}, {transform_indices = @transform_4, window_bounds = array<i64: 1, 4, 128, 32>}, {transform_indices = @transform_5, window_bounds = array<i64: 1, 4, 128, 32>}, {transform_indices = @transform_6, window_bounds = array<i64: 1, 4, 1, 32>}, {transform_indices = @transform_7, window_bounds = array<i64: 1, 4, 1, 32>}, {transform_indices = @transform_8, window_bounds = array<i64: 1, 4, 1, 32>}, {transform_indices = @transform_9, window_bounds = array<i64: 1, 128, 128>}, {transform_indices = @transform_10, window_bounds = array<i64: 1, 1, 128>}, {transform_indices = @transform_11, window_bounds = array<i64: 1, 1, 128>}, {transform_indices = @transform_12, window_bounds = array<i64: 1, 1, 128>}, {transform_indices = @transform_13, window_bounds = array<i64: 1, 128, 512>}, {transform_indices = @transform_14, window_bounds = array<i64: 1, 1, 512>}, {transform_indices = @transform_15, window_bounds = array<i64: 1, 512, 128>}, {transform_indices = @transform_16, window_bounds = array<i64: 1, 1, 128>}, {transform_indices = @transform_17, window_bounds = array<i64: 8, 128>}]} {
    %c0_i32 = arith.constant 0 : i32
    %0 = arith.cmpi eq, %arg1, %c0_i32 : i32
    %1 = arith.extui %0 : i1 to i32
    %c0_i32_0 = arith.constant 0 : i32
    %2 = arith.cmpi ne, %1, %c0_i32_0 : i32
    scf.if %2 {
      %c0_178 = arith.constant 0 : index
      %c0_179 = arith.constant 0 : index
      %258 = vector.load %arg2[%c0_178, %c0_179] : memref<8x128xf32, #tpu.memory_space<vmem>>, vector<8x128xf32>
      %c0_180 = arith.constant 0 : index
      %c0_181 = arith.constant 0 : index
      %259 = vector.load %arg19[%c0_180, %c0_181] : memref<8x128xf32, #tpu.memory_space<vmem>>, vector<8x128xf32>
      tpu.vector_store %arg19[%c0_180, %c0_181], %258 {strides = array<i32>} : memref<8x128xf32, #tpu.memory_space<vmem>>, vector<8x128xf32>,
    } else {
    }
    %c0 = arith.constant 0 : index
    %c0_1 = arith.constant 0 : index
    %3 = vector.load %arg19[%c0, %c0_1] : memref<8x128xf32, #tpu.memory_space<vmem>>, vector<8x128xf32>
    %4 = tpu.iota {dimensions = array<i32: 0>} : vector<8x8xi32>
    %5 = tpu.iota {dimensions = array<i32: 1>} : vector<8x8xi32>
    %6 = arith.cmpi sgt, %5, %4 : vector<8x8xi32>
    %cst = arith.constant -1.000000e+30 : f32
    %cst_2 = arith.constant 0.000000e+00 : f32
    %7 = vector.broadcast %cst : f32 to vector<8x8xf32>
    %8 = vector.broadcast %cst_2 : f32 to vector<8x8xf32>
    %9 = arith.select %6, %7, %8 : vector<8x8xi1>, vector<8x8xf32>
    %c0_3 = arith.constant 0 : index
    %c0_4 = arith.constant 0 : index
    %c0_5 = arith.constant 0 : index
    %10 = vector.load %arg3[%c0_3, %c0_4, %c0_5] : memref<1x1x128xf32, #tpu.memory_space<vmem>>, vector<1x1x128xf32>
    %11 = vector.shape_cast %10 : vector<1x1x128xf32> to vector<1x128xf32>
    %c0_6 = arith.constant 0 : index
    %c0_7 = arith.constant 0 : index
    %c0_8 = arith.constant 0 : index
    %12 = vector.load %arg4[%c0_6, %c0_7, %c0_8] : memref<1x1x128xf32, #tpu.memory_space<vmem>>, vector<1x1x128xf32>
    %13 = vector.shape_cast %12 : vector<1x1x128xf32> to vector<1x128xf32>
    %cst_9 = arith.constant dense<0.000000e+00> : vector<8xf32>
    %14 = vector.multi_reduction <add>, %3, %cst_9 [1] : vector<8x128xf32> to vector<8xf32>
    %15 = vector.shape_cast %14 : vector<8xf32> to vector<8x1xf32>
    %cst_10 = arith.constant 1.280000e+02 : f32
    %16 = vector.broadcast %cst_10 : f32 to vector<8x1xf32>
    %17 = arith.divf %15, %16 : vector<8x1xf32>
    %18 = vector.broadcast %17 : vector<8x1xf32> to vector<8x128xf32>
    %19 = arith.subf %3, %18 : vector<8x128xf32>
    %20 = arith.mulf %19, %19 : vector<8x128xf32>
    %cst_11 = arith.constant dense<0.000000e+00> : vector<8xf32>
    %21 = vector.multi_reduction <add>, %20, %cst_11 [1] : vector<8x128xf32> to vector<8xf32>
    %22 = vector.shape_cast %21 : vector<8xf32> to vector<8x1xf32>
    %cst_12 = arith.constant 1.280000e+02 : f32
    %23 = vector.broadcast %cst_12 : f32 to vector<8x1xf32>
    %24 = arith.divf %22, %23 : vector<8x1xf32>
    %25 = vector.broadcast %17 : vector<8x1xf32> to vector<8x128xf32>
    %26 = arith.subf %3, %25 : vector<8x128xf32>
    %cst_13 = arith.constant 9.99999974E-6 : f32
    %27 = vector.broadcast %cst_13 : f32 to vector<8x1xf32>
    %28 = arith.addf %24, %27 : vector<8x1xf32>
    %29 = math.rsqrt %28 : vector<8x1xf32>
    %30 = vector.broadcast %29 : vector<8x1xf32> to vector<8x128xf32>
    %31 = arith.mulf %26, %30 : vector<8x128xf32>
    %32 = vector.broadcast %11 : vector<1x128xf32> to vector<8x128xf32>
    %33 = arith.mulf %31, %32 : vector<8x128xf32>
    %34 = vector.broadcast %13 : vector<1x128xf32> to vector<8x128xf32>
    %35 = arith.addf %33, %34 : vector<8x128xf32>
    %36 = arith.truncf %35 : vector<8x128xf32> to vector<8x128xbf16>
    %c0_14 = arith.constant 0 : index
    %c0_15 = arith.constant 0 : index
    %c0_16 = arith.constant 0 : index
    %c0_17 = arith.constant 0 : index
    %37 = vector.load %arg5[%c0_14, %c0_15, %c0_16, %c0_17] : memref<1x4x128x32xbf16, #tpu.memory_space<vmem>>, vector<1x1x128x32xbf16>
    %38 = vector.shape_cast %37 : vector<1x1x128x32xbf16> to vector<128x32xbf16>
    %cst_18 = arith.constant dense<0.000000e+00> : vector<8x32xf32>
    %39 = tpu.matmul %36, %38, %cst_18 {dimension_numbers = #tpu.dot_dimension_numbers<[1], [0], [0], [1], [0, 0, 1, 1], [], []>} : vector<8x128xbf16>, vector<128x32xbf16>, vector<8x32xf32> -> vector<8x32xf32>
    %c0_19 = arith.constant 0 : index
    %c0_20 = arith.constant 0 : index
    %c0_21 = arith.constant 0 : index
    %c0_22 = arith.constant 0 : index
    %40 = vector.load %arg8[%c0_19, %c0_20, %c0_21, %c0_22] : memref<1x4x1x32xf32, #tpu.memory_space<vmem>>, vector<1x1x1x32xf32>
    %41 = vector.shape_cast %40 : vector<1x1x1x32xf32> to vector<1x32xf32>
    %42 = vector.broadcast %41 : vector<1x32xf32> to vector<8x32xf32>
    %43 = arith.addf %39, %42 : vector<8x32xf32>
    %44 = arith.truncf %43 : vector<8x32xf32> to vector<8x32xbf16>
    %c0_23 = arith.constant 0 : index
    %c0_24 = arith.constant 0 : index
    %c0_25 = arith.constant 0 : index
    %c0_26 = arith.constant 0 : index
    %45 = vector.load %arg6[%c0_23, %c0_24, %c0_25, %c0_26] : memref<1x4x128x32xbf16, #tpu.memory_space<vmem>>, vector<1x1x128x32xbf16>
    %46 = vector.shape_cast %45 : vector<1x1x128x32xbf16> to vector<128x32xbf16>
    %cst_27 = arith.constant dense<0.000000e+00> : vector<8x32xf32>
    %47 = tpu.matmul %36, %46, %cst_27 {dimension_numbers = #tpu.dot_dimension_numbers<[1], [0], [0], [1], [0, 0, 1, 1], [], []>} : vector<8x128xbf16>, vector<128x32xbf16>, vector<8x32xf32> -> vector<8x32xf32>
    %c0_28 = arith.constant 0 : index
    %c0_29 = arith.constant 0 : index
    %c0_30 = arith.constant 0 : index
    %c0_31 = arith.constant 0 : index
    %48 = vector.load %arg9[%c0_28, %c0_29, %c0_30, %c0_31] : memref<1x4x1x32xf32, #tpu.memory_space<vmem>>, vector<1x1x1x32xf32>
    %49 = vector.shape_cast %48 : vector<1x1x1x32xf32> to vector<1x32xf32>
    %50 = vector.broadcast %49 : vector<1x32xf32> to vector<8x32xf32>
    %51 = arith.addf %47, %50 : vector<8x32xf32>
    %52 = arith.truncf %51 : vector<8x32xf32> to vector<8x32xbf16>
    %c0_32 = arith.constant 0 : index
    %c0_33 = arith.constant 0 : index
    %c0_34 = arith.constant 0 : index
    %c0_35 = arith.constant 0 : index
    %53 = vector.load %arg7[%c0_32, %c0_33, %c0_34, %c0_35] : memref<1x4x128x32xbf16, #tpu.memory_space<vmem>>, vector<1x1x128x32xbf16>
    %54 = vector.shape_cast %53 : vector<1x1x128x32xbf16> to vector<128x32xbf16>
    %cst_36 = arith.constant dense<0.000000e+00> : vector<8x32xf32>
    %55 = tpu.matmul %36, %54, %cst_36 {dimension_numbers = #tpu.dot_dimension_numbers<[1], [0], [0], [1], [0, 0, 1, 1], [], []>} : vector<8x128xbf16>, vector<128x32xbf16>, vector<8x32xf32> -> vector<8x32xf32>
    %c0_37 = arith.constant 0 : index
    %c0_38 = arith.constant 0 : index
    %c0_39 = arith.constant 0 : index
    %c0_40 = arith.constant 0 : index
    %56 = vector.load %arg10[%c0_37, %c0_38, %c0_39, %c0_40] : memref<1x4x1x32xf32, #tpu.memory_space<vmem>>, vector<1x1x1x32xf32>
    %57 = vector.shape_cast %56 : vector<1x1x1x32xf32> to vector<1x32xf32>
    %58 = vector.broadcast %57 : vector<1x32xf32> to vector<8x32xf32>
    %59 = arith.addf %55, %58 : vector<8x32xf32>
    %60 = arith.truncf %59 : vector<8x32xf32> to vector<8x32xbf16>
    %cst_41 = arith.constant dense<0.000000e+00> : vector<8x8xf32>
    %61 = tpu.matmul %44, %52, %cst_41 {dimension_numbers = #tpu.dot_dimension_numbers<[1], [1], [0], [0], [0, 0, 1, 0], [], []>} : vector<8x32xbf16>, vector<8x32xbf16>, vector<8x8xf32> -> vector<8x8xf32>
    %62 = arith.addf %61, %9 : vector<8x8xf32>
    %cst_42 = arith.constant dense<0xFF800000> : vector<8xf32>
    %63 = vector.multi_reduction <maximumf>, %62, %cst_42 [1] : vector<8x8xf32> to vector<8xf32>
    %64 = vector.shape_cast %63 : vector<8xf32> to vector<8x1xf32>
    %65 = vector.broadcast %64 : vector<8x1xf32> to vector<8x8xf32>
    %66 = arith.subf %62, %65 : vector<8x8xf32>
    %67 = math.exp %66 : vector<8x8xf32>
    %cst_43 = arith.constant dense<0.000000e+00> : vector<8xf32>
    %68 = vector.multi_reduction <add>, %67, %cst_43 [1] : vector<8x8xf32> to vector<8xf32>
    %69 = vector.shape_cast %68 : vector<8xf32> to vector<8x1xf32>
    %70 = tpu.reciprocal %69 {approx = true} : vector<8x1xf32> -> vector<8x1xf32>
    %71 = vector.broadcast %70 : vector<8x1xf32> to vector<8x8xf32>
    %72 = arith.mulf %67, %71 : vector<8x8xf32>
    %73 = arith.truncf %72 : vector<8x8xf32> to vector<8x8xbf16>
    %cst_44 = arith.constant dense<0.000000e+00> : vector<8x32xf32>
    %74 = tpu.matmul %73, %60, %cst_44 {dimension_numbers = #tpu.dot_dimension_numbers<[1], [0], [0], [1], [0, 0, 1, 1], [], []>} : vector<8x8xbf16>, vector<8x32xbf16>, vector<8x32xf32> -> vector<8x32xf32>
    %75 = arith.truncf %74 : vector<8x32xf32> to vector<8x32xbf16>
    %c0_45 = arith.constant 0 : index
    %c0_46 = arith.constant 0 : index
    %76 = vector.load %arg20[%c0_45, %c0_46] : memref<8x128xbf16, #tpu.memory_space<vmem>>, vector<8x32xbf16>
    tpu.vector_store %arg20[%c0_45, %c0_46], %75 {strides = array<i32>} : memref<8x128xbf16, #tpu.memory_space<vmem>>, vector<8x32xbf16>,
    %c0_47 = arith.constant 0 : index
    %c1 = arith.constant 1 : index
    %c0_48 = arith.constant 0 : index
    %c0_49 = arith.constant 0 : index
    %77 = vector.load %arg5[%c0_47, %c1, %c0_48, %c0_49] : memref<1x4x128x32xbf16, #tpu.memory_space<vmem>>, vector<1x1x128x32xbf16>
    %78 = vector.shape_cast %77 : vector<1x1x128x32xbf16> to vector<128x32xbf16>
    %cst_50 = arith.constant dense<0.000000e+00> : vector<8x32xf32>
    %79 = tpu.matmul %36, %78, %cst_50 {dimension_numbers = #tpu.dot_dimension_numbers<[1], [0], [0], [1], [0, 0, 1, 1], [], []>} : vector<8x128xbf16>, vector<128x32xbf16>, vector<8x32xf32> -> vector<8x32xf32>
    %c0_51 = arith.constant 0 : index
    %c1_52 = arith.constant 1 : index
    %c0_53 = arith.constant 0 : index
    %c0_54 = arith.constant 0 : index
    %80 = vector.load %arg8[%c0_51, %c1_52, %c0_53, %c0_54] : memref<1x4x1x32xf32, #tpu.memory_space<vmem>>, vector<1x1x1x32xf32>
    %81 = vector.shape_cast %80 : vector<1x1x1x32xf32> to vector<1x32xf32>
    %82 = vector.broadcast %81 : vector<1x32xf32> to vector<8x32xf32>
    %83 = arith.addf %79, %82 : vector<8x32xf32>
    %84 = arith.truncf %83 : vector<8x32xf32> to vector<8x32xbf16>
    %c0_55 = arith.constant 0 : index
    %c1_56 = arith.constant 1 : index
    %c0_57 = arith.constant 0 : index
    %c0_58 = arith.constant 0 : index
    %85 = vector.load %arg6[%c0_55, %c1_56, %c0_57, %c0_58] : memref<1x4x128x32xbf16, #tpu.memory_space<vmem>>, vector<1x1x128x32xbf16>
    %86 = vector.shape_cast %85 : vector<1x1x128x32xbf16> to vector<128x32xbf16>
    %cst_59 = arith.constant dense<0.000000e+00> : vector<8x32xf32>
    %87 = tpu.matmul %36, %86, %cst_59 {dimension_numbers = #tpu.dot_dimension_numbers<[1], [0], [0], [1], [0, 0, 1, 1], [], []>} : vector<8x128xbf16>, vector<128x32xbf16>, vector<8x32xf32> -> vector<8x32xf32>
    %c0_60 = arith.constant 0 : index
    %c1_61 = arith.constant 1 : index
    %c0_62 = arith.constant 0 : index
    %c0_63 = arith.constant 0 : index
    %88 = vector.load %arg9[%c0_60, %c1_61, %c0_62, %c0_63] : memref<1x4x1x32xf32, #tpu.memory_space<vmem>>, vector<1x1x1x32xf32>
    %89 = vector.shape_cast %88 : vector<1x1x1x32xf32> to vector<1x32xf32>
    %90 = vector.broadcast %89 : vector<1x32xf32> to vector<8x32xf32>
    %91 = arith.addf %87, %90 : vector<8x32xf32>
    %92 = arith.truncf %91 : vector<8x32xf32> to vector<8x32xbf16>
    %c0_64 = arith.constant 0 : index
    %c1_65 = arith.constant 1 : index
    %c0_66 = arith.constant 0 : index
    %c0_67 = arith.constant 0 : index
    %93 = vector.load %arg7[%c0_64, %c1_65, %c0_66, %c0_67] : memref<1x4x128x32xbf16, #tpu.memory_space<vmem>>, vector<1x1x128x32xbf16>
    %94 = vector.shape_cast %93 : vector<1x1x128x32xbf16> to vector<128x32xbf16>
    %cst_68 = arith.constant dense<0.000000e+00> : vector<8x32xf32>
    %95 = tpu.matmul %36, %94, %cst_68 {dimension_numbers = #tpu.dot_dimension_numbers<[1], [0], [0], [1], [0, 0, 1, 1], [], []>} : vector<8x128xbf16>, vector<128x32xbf16>, vector<8x32xf32> -> vector<8x32xf32>
    %c0_69 = arith.constant 0 : index
    %c1_70 = arith.constant 1 : index
    %c0_71 = arith.constant 0 : index
    %c0_72 = arith.constant 0 : index
    %96 = vector.load %arg10[%c0_69, %c1_70, %c0_71, %c0_72] : memref<1x4x1x32xf32, #tpu.memory_space<vmem>>, vector<1x1x1x32xf32>
    %97 = vector.shape_cast %96 : vector<1x1x1x32xf32> to vector<1x32xf32>
    %98 = vector.broadcast %97 : vector<1x32xf32> to vector<8x32xf32>
    %99 = arith.addf %95, %98 : vector<8x32xf32>
    %100 = arith.truncf %99 : vector<8x32xf32> to vector<8x32xbf16>
    %cst_73 = arith.constant dense<0.000000e+00> : vector<8x8xf32>
    %101 = tpu.matmul %84, %92, %cst_73 {dimension_numbers = #tpu.dot_dimension_numbers<[1], [1], [0], [0], [0, 0, 1, 0], [], []>} : vector<8x32xbf16>, vector<8x32xbf16>, vector<8x8xf32> -> vector<8x8xf32>
    %102 = arith.addf %101, %9 : vector<8x8xf32>
    %cst_74 = arith.constant dense<0xFF800000> : vector<8xf32>
    %103 = vector.multi_reduction <maximumf>, %102, %cst_74 [1] : vector<8x8xf32> to vector<8xf32>
    %104 = vector.shape_cast %103 : vector<8xf32> to vector<8x1xf32>
    %105 = vector.broadcast %104 : vector<8x1xf32> to vector<8x8xf32>
    %106 = arith.subf %102, %105 : vector<8x8xf32>
    %107 = math.exp %106 : vector<8x8xf32>
    %cst_75 = arith.constant dense<0.000000e+00> : vector<8xf32>
    %108 = vector.multi_reduction <add>, %107, %cst_75 [1] : vector<8x8xf32> to vector<8xf32>
    %109 = vector.shape_cast %108 : vector<8xf32> to vector<8x1xf32>
    %110 = tpu.reciprocal %109 {approx = true} : vector<8x1xf32> -> vector<8x1xf32>
    %111 = vector.broadcast %110 : vector<8x1xf32> to vector<8x8xf32>
    %112 = arith.mulf %107, %111 : vector<8x8xf32>
    %113 = arith.truncf %112 : vector<8x8xf32> to vector<8x8xbf16>
    %cst_76 = arith.constant dense<0.000000e+00> : vector<8x32xf32>
    %114 = tpu.matmul %113, %100, %cst_76 {dimension_numbers = #tpu.dot_dimension_numbers<[1], [0], [0], [1], [0, 0, 1, 1], [], []>} : vector<8x8xbf16>, vector<8x32xbf16>, vector<8x32xf32> -> vector<8x32xf32>
    %115 = arith.truncf %114 : vector<8x32xf32> to vector<8x32xbf16>
    %c0_77 = arith.constant 0 : index
    %c32 = arith.constant 32 : index
    %116 = vector.load %arg20[%c0_77, %c32] : memref<8x128xbf16, #tpu.memory_space<vmem>>, vector<8x32xbf16>
    tpu.vector_store %arg20[%c0_77, %c32], %115 {strides = array<i32>} : memref<8x128xbf16, #tpu.memory_space<vmem>>, vector<8x32xbf16>,
    %c0_78 = arith.constant 0 : index
    %c2 = arith.constant 2 : index
    %c0_79 = arith.constant 0 : index
    %c0_80 = arith.constant 0 : index
    %117 = vector.load %arg5[%c0_78, %c2, %c0_79, %c0_80] : memref<1x4x128x32xbf16, #tpu.memory_space<vmem>>, vector<1x1x128x32xbf16>
    %118 = vector.shape_cast %117 : vector<1x1x128x32xbf16> to vector<128x32xbf16>
    %cst_81 = arith.constant dense<0.000000e+00> : vector<8x32xf32>
    %119 = tpu.matmul %36, %118, %cst_81 {dimension_numbers = #tpu.dot_dimension_numbers<[1], [0], [0], [1], [0, 0, 1, 1], [], []>} : vector<8x128xbf16>, vector<128x32xbf16>, vector<8x32xf32> -> vector<8x32xf32>
    %c0_82 = arith.constant 0 : index
    %c2_83 = arith.constant 2 : index
    %c0_84 = arith.constant 0 : index
    %c0_85 = arith.constant 0 : index
    %120 = vector.load %arg8[%c0_82, %c2_83, %c0_84, %c0_85] : memref<1x4x1x32xf32, #tpu.memory_space<vmem>>, vector<1x1x1x32xf32>
    %121 = vector.shape_cast %120 : vector<1x1x1x32xf32> to vector<1x32xf32>
    %122 = vector.broadcast %121 : vector<1x32xf32> to vector<8x32xf32>
    %123 = arith.addf %119, %122 : vector<8x32xf32>
    %124 = arith.truncf %123 : vector<8x32xf32> to vector<8x32xbf16>
    %c0_86 = arith.constant 0 : index
    %c2_87 = arith.constant 2 : index
    %c0_88 = arith.constant 0 : index
    %c0_89 = arith.constant 0 : index
    %125 = vector.load %arg6[%c0_86, %c2_87, %c0_88, %c0_89] : memref<1x4x128x32xbf16, #tpu.memory_space<vmem>>, vector<1x1x128x32xbf16>
    %126 = vector.shape_cast %125 : vector<1x1x128x32xbf16> to vector<128x32xbf16>
    %cst_90 = arith.constant dense<0.000000e+00> : vector<8x32xf32>
    %127 = tpu.matmul %36, %126, %cst_90 {dimension_numbers = #tpu.dot_dimension_numbers<[1], [0], [0], [1], [0, 0, 1, 1], [], []>} : vector<8x128xbf16>, vector<128x32xbf16>, vector<8x32xf32> -> vector<8x32xf32>
    %c0_91 = arith.constant 0 : index
    %c2_92 = arith.constant 2 : index
    %c0_93 = arith.constant 0 : index
    %c0_94 = arith.constant 0 : index
    %128 = vector.load %arg9[%c0_91, %c2_92, %c0_93, %c0_94] : memref<1x4x1x32xf32, #tpu.memory_space<vmem>>, vector<1x1x1x32xf32>
    %129 = vector.shape_cast %128 : vector<1x1x1x32xf32> to vector<1x32xf32>
    %130 = vector.broadcast %129 : vector<1x32xf32> to vector<8x32xf32>
    %131 = arith.addf %127, %130 : vector<8x32xf32>
    %132 = arith.truncf %131 : vector<8x32xf32> to vector<8x32xbf16>
    %c0_95 = arith.constant 0 : index
    %c2_96 = arith.constant 2 : index
    %c0_97 = arith.constant 0 : index
    %c0_98 = arith.constant 0 : index
    %133 = vector.load %arg7[%c0_95, %c2_96, %c0_97, %c0_98] : memref<1x4x128x32xbf16, #tpu.memory_space<vmem>>, vector<1x1x128x32xbf16>
    %134 = vector.shape_cast %133 : vector<1x1x128x32xbf16> to vector<128x32xbf16>
    %cst_99 = arith.constant dense<0.000000e+00> : vector<8x32xf32>
    %135 = tpu.matmul %36, %134, %cst_99 {dimension_numbers = #tpu.dot_dimension_numbers<[1], [0], [0], [1], [0, 0, 1, 1], [], []>} : vector<8x128xbf16>, vector<128x32xbf16>, vector<8x32xf32> -> vector<8x32xf32>
    %c0_100 = arith.constant 0 : index
    %c2_101 = arith.constant 2 : index
    %c0_102 = arith.constant 0 : index
    %c0_103 = arith.constant 0 : index
    %136 = vector.load %arg10[%c0_100, %c2_101, %c0_102, %c0_103] : memref<1x4x1x32xf32, #tpu.memory_space<vmem>>, vector<1x1x1x32xf32>
    %137 = vector.shape_cast %136 : vector<1x1x1x32xf32> to vector<1x32xf32>
    %138 = vector.broadcast %137 : vector<1x32xf32> to vector<8x32xf32>
    %139 = arith.addf %135, %138 : vector<8x32xf32>
    %140 = arith.truncf %139 : vector<8x32xf32> to vector<8x32xbf16>
    %cst_104 = arith.constant dense<0.000000e+00> : vector<8x8xf32>
    %141 = tpu.matmul %124, %132, %cst_104 {dimension_numbers = #tpu.dot_dimension_numbers<[1], [1], [0], [0], [0, 0, 1, 0], [], []>} : vector<8x32xbf16>, vector<8x32xbf16>, vector<8x8xf32> -> vector<8x8xf32>
    %142 = arith.addf %141, %9 : vector<8x8xf32>
    %cst_105 = arith.constant dense<0xFF800000> : vector<8xf32>
    %143 = vector.multi_reduction <maximumf>, %142, %cst_105 [1] : vector<8x8xf32> to vector<8xf32>
    %144 = vector.shape_cast %143 : vector<8xf32> to vector<8x1xf32>
    %145 = vector.broadcast %144 : vector<8x1xf32> to vector<8x8xf32>
    %146 = arith.subf %142, %145 : vector<8x8xf32>
    %147 = math.exp %146 : vector<8x8xf32>
    %cst_106 = arith.constant dense<0.000000e+00> : vector<8xf32>
    %148 = vector.multi_reduction <add>, %147, %cst_106 [1] : vector<8x8xf32> to vector<8xf32>
    %149 = vector.shape_cast %148 : vector<8xf32> to vector<8x1xf32>
    %150 = tpu.reciprocal %149 {approx = true} : vector<8x1xf32> -> vector<8x1xf32>
    %151 = vector.broadcast %150 : vector<8x1xf32> to vector<8x8xf32>
    %152 = arith.mulf %147, %151 : vector<8x8xf32>
    %153 = arith.truncf %152 : vector<8x8xf32> to vector<8x8xbf16>
    %cst_107 = arith.constant dense<0.000000e+00> : vector<8x32xf32>
    %154 = tpu.matmul %153, %140, %cst_107 {dimension_numbers = #tpu.dot_dimension_numbers<[1], [0], [0], [1], [0, 0, 1, 1], [], []>} : vector<8x8xbf16>, vector<8x32xbf16>, vector<8x32xf32> -> vector<8x32xf32>
    %155 = arith.truncf %154 : vector<8x32xf32> to vector<8x32xbf16>
    %c0_108 = arith.constant 0 : index
    %c64 = arith.constant 64 : index
    %156 = vector.load %arg20[%c0_108, %c64] : memref<8x128xbf16, #tpu.memory_space<vmem>>, vector<8x32xbf16>
    tpu.vector_store %arg20[%c0_108, %c64], %155 {strides = array<i32>} : memref<8x128xbf16, #tpu.memory_space<vmem>>, vector<8x32xbf16>,
    %c0_109 = arith.constant 0 : index
    %c3 = arith.constant 3 : index
    %c0_110 = arith.constant 0 : index
    %c0_111 = arith.constant 0 : index
    %157 = vector.load %arg5[%c0_109, %c3, %c0_110, %c0_111] : memref<1x4x128x32xbf16, #tpu.memory_space<vmem>>, vector<1x1x128x32xbf16>
    %158 = vector.shape_cast %157 : vector<1x1x128x32xbf16> to vector<128x32xbf16>
    %cst_112 = arith.constant dense<0.000000e+00> : vector<8x32xf32>
    %159 = tpu.matmul %36, %158, %cst_112 {dimension_numbers = #tpu.dot_dimension_numbers<[1], [0], [0], [1], [0, 0, 1, 1], [], []>} : vector<8x128xbf16>, vector<128x32xbf16>, vector<8x32xf32> -> vector<8x32xf32>
    %c0_113 = arith.constant 0 : index
    %c3_114 = arith.constant 3 : index
    %c0_115 = arith.constant 0 : index
    %c0_116 = arith.constant 0 : index
    %160 = vector.load %arg8[%c0_113, %c3_114, %c0_115, %c0_116] : memref<1x4x1x32xf32, #tpu.memory_space<vmem>>, vector<1x1x1x32xf32>
    %161 = vector.shape_cast %160 : vector<1x1x1x32xf32> to vector<1x32xf32>
    %162 = vector.broadcast %161 : vector<1x32xf32> to vector<8x32xf32>
    %163 = arith.addf %159, %162 : vector<8x32xf32>
    %164 = arith.truncf %163 : vector<8x32xf32> to vector<8x32xbf16>
    %c0_117 = arith.constant 0 : index
    %c3_118 = arith.constant 3 : index
    %c0_119 = arith.constant 0 : index
    %c0_120 = arith.constant 0 : index
    %165 = vector.load %arg6[%c0_117, %c3_118, %c0_119, %c0_120] : memref<1x4x128x32xbf16, #tpu.memory_space<vmem>>, vector<1x1x128x32xbf16>
    %166 = vector.shape_cast %165 : vector<1x1x128x32xbf16> to vector<128x32xbf16>
    %cst_121 = arith.constant dense<0.000000e+00> : vector<8x32xf32>
    %167 = tpu.matmul %36, %166, %cst_121 {dimension_numbers = #tpu.dot_dimension_numbers<[1], [0], [0], [1], [0, 0, 1, 1], [], []>} : vector<8x128xbf16>, vector<128x32xbf16>, vector<8x32xf32> -> vector<8x32xf32>
    %c0_122 = arith.constant 0 : index
    %c3_123 = arith.constant 3 : index
    %c0_124 = arith.constant 0 : index
    %c0_125 = arith.constant 0 : index
    %168 = vector.load %arg9[%c0_122, %c3_123, %c0_124, %c0_125] : memref<1x4x1x32xf32, #tpu.memory_space<vmem>>, vector<1x1x1x32xf32>
    %169 = vector.shape_cast %168 : vector<1x1x1x32xf32> to vector<1x32xf32>
    %170 = vector.broadcast %169 : vector<1x32xf32> to vector<8x32xf32>
    %171 = arith.addf %167, %170 : vector<8x32xf32>
    %172 = arith.truncf %171 : vector<8x32xf32> to vector<8x32xbf16>
    %c0_126 = arith.constant 0 : index
    %c3_127 = arith.constant 3 : index
    %c0_128 = arith.constant 0 : index
    %c0_129 = arith.constant 0 : index
    %173 = vector.load %arg7[%c0_126, %c3_127, %c0_128, %c0_129] : memref<1x4x128x32xbf16, #tpu.memory_space<vmem>>, vector<1x1x128x32xbf16>
    %174 = vector.shape_cast %173 : vector<1x1x128x32xbf16> to vector<128x32xbf16>
    %cst_130 = arith.constant dense<0.000000e+00> : vector<8x32xf32>
    %175 = tpu.matmul %36, %174, %cst_130 {dimension_numbers = #tpu.dot_dimension_numbers<[1], [0], [0], [1], [0, 0, 1, 1], [], []>} : vector<8x128xbf16>, vector<128x32xbf16>, vector<8x32xf32> -> vector<8x32xf32>
    %c0_131 = arith.constant 0 : index
    %c3_132 = arith.constant 3 : index
    %c0_133 = arith.constant 0 : index
    %c0_134 = arith.constant 0 : index
    %176 = vector.load %arg10[%c0_131, %c3_132, %c0_133, %c0_134] : memref<1x4x1x32xf32, #tpu.memory_space<vmem>>, vector<1x1x1x32xf32>
    %177 = vector.shape_cast %176 : vector<1x1x1x32xf32> to vector<1x32xf32>
    %178 = vector.broadcast %177 : vector<1x32xf32> to vector<8x32xf32>
    %179 = arith.addf %175, %178 : vector<8x32xf32>
    %180 = arith.truncf %179 : vector<8x32xf32> to vector<8x32xbf16>
    %cst_135 = arith.constant dense<0.000000e+00> : vector<8x8xf32>
    %181 = tpu.matmul %164, %172, %cst_135 {dimension_numbers = #tpu.dot_dimension_numbers<[1], [1], [0], [0], [0, 0, 1, 0], [], []>} : vector<8x32xbf16>, vector<8x32xbf16>, vector<8x8xf32> -> vector<8x8xf32>
    %182 = arith.addf %181, %9 : vector<8x8xf32>
    %cst_136 = arith.constant dense<0xFF800000> : vector<8xf32>
    %183 = vector.multi_reduction <maximumf>, %182, %cst_136 [1] : vector<8x8xf32> to vector<8xf32>
    %184 = vector.shape_cast %183 : vector<8xf32> to vector<8x1xf32>
    %185 = vector.broadcast %184 : vector<8x1xf32> to vector<8x8xf32>
    %186 = arith.subf %182, %185 : vector<8x8xf32>
    %187 = math.exp %186 : vector<8x8xf32>
    %cst_137 = arith.constant dense<0.000000e+00> : vector<8xf32>
    %188 = vector.multi_reduction <add>, %187, %cst_137 [1] : vector<8x8xf32> to vector<8xf32>
    %189 = vector.shape_cast %188 : vector<8xf32> to vector<8x1xf32>
    %190 = tpu.reciprocal %189 {approx = true} : vector<8x1xf32> -> vector<8x1xf32>
    %191 = vector.broadcast %190 : vector<8x1xf32> to vector<8x8xf32>
    %192 = arith.mulf %187, %191 : vector<8x8xf32>
    %193 = arith.truncf %192 : vector<8x8xf32> to vector<8x8xbf16>
    %cst_138 = arith.constant dense<0.000000e+00> : vector<8x32xf32>
    %194 = tpu.matmul %193, %180, %cst_138 {dimension_numbers = #tpu.dot_dimension_numbers<[1], [0], [0], [1], [0, 0, 1, 1], [], []>} : vector<8x8xbf16>, vector<8x32xbf16>, vector<8x32xf32> -> vector<8x32xf32>
    %195 = arith.truncf %194 : vector<8x32xf32> to vector<8x32xbf16>
    %c0_139 = arith.constant 0 : index
    %c96 = arith.constant 96 : index
    %196 = vector.load %arg20[%c0_139, %c96] : memref<8x128xbf16, #tpu.memory_space<vmem>>, vector<8x32xbf16>
    tpu.vector_store %arg20[%c0_139, %c96], %195 {strides = array<i32>} : memref<8x128xbf16, #tpu.memory_space<vmem>>, vector<8x32xbf16>,
    %c0_140 = arith.constant 0 : index
    %c0_141 = arith.constant 0 : index
    %197 = vector.load %arg20[%c0_140, %c0_141] : memref<8x128xbf16, #tpu.memory_space<vmem>>, vector<8x128xbf16>
    %c0_142 = arith.constant 0 : index
    %c0_143 = arith.constant 0 : index
    %c0_144 = arith.constant 0 : index
    %198 = vector.load %arg11[%c0_142, %c0_143, %c0_144] : memref<1x128x128xbf16, #tpu.memory_space<vmem>>, vector<1x128x128xbf16>
    %199 = vector.shape_cast %198 : vector<1x128x128xbf16> to vector<128x128xbf16>
    %cst_145 = arith.constant dense<0.000000e+00> : vector<8x128xf32>
    %200 = tpu.matmul %197, %199, %cst_145 {dimension_numbers = #tpu.dot_dimension_numbers<[1], [0], [0], [1], [0, 0, 1, 1], [], []>} : vector<8x128xbf16>, vector<128x128xbf16>, vector<8x128xf32> -> vector<8x128xf32>
    %c0_146 = arith.constant 0 : index
    %c0_147 = arith.constant 0 : index
    %c0_148 = arith.constant 0 : index
    %201 = vector.load %arg12[%c0_146, %c0_147, %c0_148] : memref<1x1x128xf32, #tpu.memory_space<vmem>>, vector<1x1x128xf32>
    %202 = vector.shape_cast %201 : vector<1x1x128xf32> to vector<1x128xf32>
    %203 = vector.broadcast %202 : vector<1x128xf32> to vector<8x128xf32>
    %204 = arith.addf %200, %203 : vector<8x128xf32>
    %205 = arith.addf %3, %204 : vector<8x128xf32>
    %c0_149 = arith.constant 0 : index
    %c0_150 = arith.constant 0 : index
    %c0_151 = arith.constant 0 : index
    %206 = vector.load %arg13[%c0_149, %c0_150, %c0_151] : memref<1x1x128xf32, #tpu.memory_space<vmem>>, vector<1x1x128xf32>
    %207 = vector.shape_cast %206 : vector<1x1x128xf32> to vector<1x128xf32>
    %c0_152 = arith.constant 0 : index
    %c0_153 = arith.constant 0 : index
    %c0_154 = arith.constant 0 : index
    %208 = vector.load %arg14[%c0_152, %c0_153, %c0_154] : memref<1x1x128xf32, #tpu.memory_space<vmem>>, vector<1x1x128xf32>
    %209 = vector.shape_cast %208 : vector<1x1x128xf32> to vector<1x128xf32>
    %cst_155 = arith.constant dense<0.000000e+00> : vector<8xf32>
    %210 = vector.multi_reduction <add>, %205, %cst_155 [1] : vector<8x128xf32> to vector<8xf32>
    %211 = vector.shape_cast %210 : vector<8xf32> to vector<8x1xf32>
    %cst_156 = arith.constant 1.280000e+02 : f32
    %212 = vector.broadcast %cst_156 : f32 to vector<8x1xf32>
    %213 = arith.divf %211, %212 : vector<8x1xf32>
    %214 = vector.broadcast %213 : vector<8x1xf32> to vector<8x128xf32>
    %215 = arith.subf %205, %214 : vector<8x128xf32>
    %216 = arith.mulf %215, %215 : vector<8x128xf32>
    %cst_157 = arith.constant dense<0.000000e+00> : vector<8xf32>
    %217 = vector.multi_reduction <add>, %216, %cst_157 [1] : vector<8x128xf32> to vector<8xf32>
    %218 = vector.shape_cast %217 : vector<8xf32> to vector<8x1xf32>
    %cst_158 = arith.constant 1.280000e+02 : f32
    %219 = vector.broadcast %cst_158 : f32 to vector<8x1xf32>
    %220 = arith.divf %218, %219 : vector<8x1xf32>
    %221 = vector.broadcast %213 : vector<8x1xf32> to vector<8x128xf32>
    %222 = arith.subf %205, %221 : vector<8x128xf32>
    %cst_159 = arith.constant 9.99999974E-6 : f32
    %223 = vector.broadcast %cst_159 : f32 to vector<8x1xf32>
    %224 = arith.addf %220, %223 : vector<8x1xf32>
    %225 = math.rsqrt %224 : vector<8x1xf32>
    %226 = vector.broadcast %225 : vector<8x1xf32> to vector<8x128xf32>
    %227 = arith.mulf %222, %226 : vector<8x128xf32>
    %228 = vector.broadcast %207 : vector<1x128xf32> to vector<8x128xf32>
    %229 = arith.mulf %227, %228 : vector<8x128xf32>
    %230 = vector.broadcast %209 : vector<1x128xf32> to vector<8x128xf32>
    %231 = arith.addf %229, %230 : vector<8x128xf32>
    %232 = arith.truncf %231 : vector<8x128xf32> to vector<8x128xbf16>
    %c0_160 = arith.constant 0 : index
    %c0_161 = arith.constant 0 : index
    %c0_162 = arith.constant 0 : index
    %233 = vector.load %arg15[%c0_160, %c0_161, %c0_162] : memref<1x128x512xbf16, #tpu.memory_space<vmem>>, vector<1x128x512xbf16>
    %234 = vector.shape_cast %233 : vector<1x128x512xbf16> to vector<128x512xbf16>
    %cst_163 = arith.constant dense<0.000000e+00> : vector<8x512xf32>
    %235 = tpu.matmul %232, %234, %cst_163 {dimension_numbers = #tpu.dot_dimension_numbers<[1], [0], [0], [1], [0, 0, 1, 1], [], []>} : vector<8x128xbf16>, vector<128x512xbf16>, vector<8x512xf32> -> vector<8x512xf32>
    %c0_164 = arith.constant 0 : index
    %c0_165 = arith.constant 0 : index
    %c0_166 = arith.constant 0 : index
    %236 = vector.load %arg16[%c0_164, %c0_165, %c0_166] : memref<1x1x512xf32, #tpu.memory_space<vmem>>, vector<1x1x512xf32>
    %237 = vector.shape_cast %236 : vector<1x1x512xf32> to vector<1x512xf32>
    %238 = vector.broadcast %237 : vector<1x512xf32> to vector<8x512xf32>
    %239 = arith.addf %235, %238 : vector<8x512xf32>
    %cst_167 = arith.constant 1.702000e+00 : f32
    %240 = vector.broadcast %cst_167 : f32 to vector<8x512xf32>
    %241 = arith.mulf %240, %239 : vector<8x512xf32>
    %242 = arith.negf %241 : vector<8x512xf32>
    %243 = math.exp %242 : vector<8x512xf32>
    %cst_168 = arith.constant 1.000000e+00 : f32
    %244 = vector.broadcast %cst_168 : f32 to vector<8x512xf32>
    %245 = arith.addf %244, %243 : vector<8x512xf32>
    %246 = arith.divf %244, %245 : vector<8x512xf32>
    %247 = arith.mulf %239, %246 : vector<8x512xf32>
    %248 = arith.truncf %247 : vector<8x512xf32> to vector<8x512xbf16>
    %c0_169 = arith.constant 0 : index
    %c0_170 = arith.constant 0 : index
    %c0_171 = arith.constant 0 : index
    %249 = vector.load %arg17[%c0_169, %c0_170, %c0_171] : memref<1x512x128xbf16, #tpu.memory_space<vmem>>, vector<1x512x128xbf16>
    %250 = vector.shape_cast %249 : vector<1x512x128xbf16> to vector<512x128xbf16>
    %cst_172 = arith.constant dense<0.000000e+00> : vector<8x128xf32>
    %251 = tpu.matmul %248, %250, %cst_172 {dimension_numbers = #tpu.dot_dimension_numbers<[1], [0], [0], [1], [0, 0, 1, 1], [], []>} : vector<8x512xbf16>, vector<512x128xbf16>, vector<8x128xf32> -> vector<8x128xf32>
    %c0_173 = arith.constant 0 : index
    %c0_174 = arith.constant 0 : index
    %c0_175 = arith.constant 0 : index
    %252 = vector.load %arg18[%c0_173, %c0_174, %c0_175] : memref<1x1x128xf32, #tpu.memory_space<vmem>>, vector<1x1x128xf32>
    %253 = vector.shape_cast %252 : vector<1x1x128xf32> to vector<1x128xf32>
    %254 = vector.broadcast %253 : vector<1x128xf32> to vector<8x128xf32>
    %255 = arith.addf %251, %254 : vector<8x128xf32>
    %256 = arith.addf %205, %255 : vector<8x128xf32>
    %c0_176 = arith.constant 0 : index
    %c0_177 = arith.constant 0 : index
    %257 = vector.load %arg19[%c0_176, %c0_177] : memref<8x128xf32, #tpu.memory_space<vmem>>, vector<8x128xf32>
    tpu.vector_store %arg19[%c0_176, %c0_177], %256 {strides = array<i32>} : memref<8x128xf32, #tpu.memory_space<vmem>>, vector<8x128xf32>,
    return
  }
  func.func @transform_0(%arg0: i32, %arg1: i32) -> (i32, i32) {
    %c0_i32 = arith.constant 0 : i32
    %c0_i32_0 = arith.constant 0 : i32
    return %arg0, %c0_i32 : i32, i32
  }
  func.func @transform_1(%arg0: i32, %arg1: i32) -> (i32, i32, i32) {
    %c0_i32 = arith.constant 0 : i32
    %c0_i32_0 = arith.constant 0 : i32
    %c0_i32_1 = arith.constant 0 : i32
    return %arg1, %c0_i32, %c0_i32_0 : i32, i32, i32
  }
  func.func @transform_2(%arg0: i32, %arg1: i32) -> (i32, i32, i32) {
    %c0_i32 = arith.constant 0 : i32
    %c0_i32_0 = arith.constant 0 : i32
    %c0_i32_1 = arith.constant 0 : i32
    return %arg1, %c0_i32, %c0_i32_0 : i32, i32, i32
  }
  func.func @transform_3(%arg0: i32, %arg1: i32) -> (i32, i32, i32, i32) {
    %c0_i32 = arith.constant 0 : i32
    %c0_i32_0 = arith.constant 0 : i32
    %c0_i32_1 = arith.constant 0 : i32
    %c0_i32_2 = arith.constant 0 : i32
    return %arg1, %c0_i32, %c0_i32_0, %c0_i32_1 : i32, i32, i32, i32
  }
  func.func @transform_4(%arg0: i32, %arg1: i32) -> (i32, i32, i32, i32) {
    %c0_i32 = arith.constant 0 : i32
    %c0_i32_0 = arith.constant 0 : i32
    %c0_i32_1 = arith.constant 0 : i32
    %c0_i32_2 = arith.constant 0 : i32
    return %arg1, %c0_i32, %c0_i32_0, %c0_i32_1 : i32, i32, i32, i32
  }
  func.func @transform_5(%arg0: i32, %arg1: i32) -> (i32, i32, i32, i32) {
    %c0_i32 = arith.constant 0 : i32
    %c0_i32_0 = arith.constant 0 : i32
    %c0_i32_1 = arith.constant 0 : i32
    %c0_i32_2 = arith.constant 0 : i32
    return %arg1, %c0_i32, %c0_i32_0, %c0_i32_1 : i32, i32, i32, i32
  }
  func.func @transform_6(%arg0: i32, %arg1: i32) -> (i32, i32, i32, i32) {
    %c0_i32 = arith.constant 0 : i32
    %c0_i32_0 = arith.constant 0 : i32
    %c0_i32_1 = arith.constant 0 : i32
    %c0_i32_2 = arith.constant 0 : i32
    return %arg1, %c0_i32, %c0_i32_0, %c0_i32_1 : i32, i32, i32, i32
  }
  func.func @transform_7(%arg0: i32, %arg1: i32) -> (i32, i32, i32, i32) {
    %c0_i32 = arith.constant 0 : i32
    %c0_i32_0 = arith.constant 0 : i32
    %c0_i32_1 = arith.constant 0 : i32
    %c0_i32_2 = arith.constant 0 : i32
    return %arg1, %c0_i32, %c0_i32_0, %c0_i32_1 : i32, i32, i32, i32
  }
  func.func @transform_8(%arg0: i32, %arg1: i32) -> (i32, i32, i32, i32) {
    %c0_i32 = arith.constant 0 : i32
    %c0_i32_0 = arith.constant 0 : i32
    %c0_i32_1 = arith.constant 0 : i32
    %c0_i32_2 = arith.constant 0 : i32
    return %arg1, %c0_i32, %c0_i32_0, %c0_i32_1 : i32, i32, i32, i32
  }
  func.func @transform_9(%arg0: i32, %arg1: i32) -> (i32, i32, i32) {
    %c0_i32 = arith.constant 0 : i32
    %c0_i32_0 = arith.constant 0 : i32
    %c0_i32_1 = arith.constant 0 : i32
    return %arg1, %c0_i32, %c0_i32_0 : i32, i32, i32
  }
  func.func @transform_10(%arg0: i32, %arg1: i32) -> (i32, i32, i32) {
    %c0_i32 = arith.constant 0 : i32
    %c0_i32_0 = arith.constant 0 : i32
    %c0_i32_1 = arith.constant 0 : i32
    return %arg1, %c0_i32, %c0_i32_0 : i32, i32, i32
  }
  func.func @transform_11(%arg0: i32, %arg1: i32) -> (i32, i32, i32) {
    %c0_i32 = arith.constant 0 : i32
    %c0_i32_0 = arith.constant 0 : i32
    %c0_i32_1 = arith.constant 0 : i32
    return %arg1, %c0_i32, %c0_i32_0 : i32, i32, i32
  }
  func.func @transform_12(%arg0: i32, %arg1: i32) -> (i32, i32, i32) {
    %c0_i32 = arith.constant 0 : i32
    %c0_i32_0 = arith.constant 0 : i32
    %c0_i32_1 = arith.constant 0 : i32
    return %arg1, %c0_i32, %c0_i32_0 : i32, i32, i32
  }
  func.func @transform_13(%arg0: i32, %arg1: i32) -> (i32, i32, i32) {
    %c0_i32 = arith.constant 0 : i32
    %c0_i32_0 = arith.constant 0 : i32
    %c0_i32_1 = arith.constant 0 : i32
    return %arg1, %c0_i32, %c0_i32_0 : i32, i32, i32
  }
  func.func @transform_14(%arg0: i32, %arg1: i32) -> (i32, i32, i32) {
    %c0_i32 = arith.constant 0 : i32
    %c0_i32_0 = arith.constant 0 : i32
    %c0_i32_1 = arith.constant 0 : i32
    return %arg1, %c0_i32, %c0_i32_0 : i32, i32, i32
  }
  func.func @transform_15(%arg0: i32, %arg1: i32) -> (i32, i32, i32) {
    %c0_i32 = arith.constant 0 : i32
    %c0_i32_0 = arith.constant 0 : i32
    %c0_i32_1 = arith.constant 0 : i32
    return %arg1, %c0_i32, %c0_i32_0 : i32, i32, i32
  }
  func.func @transform_16(%arg0: i32, %arg1: i32) -> (i32, i32, i32) {
    %c0_i32 = arith.constant 0 : i32
    %c0_i32_0 = arith.constant 0 : i32
    %c0_i32_1 = arith.constant 0 : i32
    return %arg1, %c0_i32, %c0_i32_0 : i32, i32, i32
  }
  func.func @transform_17(%arg0: i32, %arg1: i32) -> (i32, i32) {
    %c0_i32 = arith.constant 0 : i32
    %c0_i32_0 = arith.constant 0 : i32
    return %arg0, %c0_i32 : i32, i32
  }
}

module attributes {stable_mosaic.version = 11 : i64} {
  func.func @final_kernel(%arg0: memref<2xi32, #tpu.memory_space<smem>>, %arg1: memref<16x128xf32, #tpu.memory_space<vmem>>, %arg2: memref<1x128xf32, #tpu.memory_space<vmem>>, %arg3: memref<1x128xf32, #tpu.memory_space<vmem>>, %arg4: memref<128x128xbf16, #tpu.memory_space<vmem>>, %arg5: memref<16x128xf32, #tpu.memory_space<vmem>>, %arg6: memref<2x128xf32, #tpu.memory_space<vmem>>, %arg7: memref<2x128xf32, #tpu.memory_space<vmem>>) attributes {dimension_semantics = [], scalar_prefetch = 0 : i64, scratch_operands = 1 : i64, tpu.core_type = #tpu.core_type<tc>} {
    %c0 = arith.constant 0 : index
    %c0_0 = arith.constant 0 : index
    %0 = vector.load %arg1[%c0, %c0_0] : memref<16x128xf32, #tpu.memory_space<vmem>>, vector<16x128xf32>
    %c0_1 = arith.constant 0 : index
    %c0_2 = arith.constant 0 : index
    %1 = vector.load %arg2[%c0_1, %c0_2] : memref<1x128xf32, #tpu.memory_space<vmem>>, vector<1x128xf32>
    %c0_3 = arith.constant 0 : index
    %c0_4 = arith.constant 0 : index
    %2 = vector.load %arg3[%c0_3, %c0_4] : memref<1x128xf32, #tpu.memory_space<vmem>>, vector<1x128xf32>
    %cst = arith.constant dense<0.000000e+00> : vector<16xf32>
    %3 = vector.multi_reduction <add>, %0, %cst [1] : vector<16x128xf32> to vector<16xf32>
    %4 = vector.shape_cast %3 : vector<16xf32> to vector<16x1xf32>
    %cst_5 = arith.constant 1.280000e+02 : f32
    %5 = vector.broadcast %cst_5 : f32 to vector<16x1xf32>
    %6 = arith.divf %4, %5 : vector<16x1xf32>
    %7 = vector.broadcast %6 : vector<16x1xf32> to vector<16x128xf32>
    %8 = arith.subf %0, %7 : vector<16x128xf32>
    %9 = arith.mulf %8, %8 : vector<16x128xf32>
    %cst_6 = arith.constant dense<0.000000e+00> : vector<16xf32>
    %10 = vector.multi_reduction <add>, %9, %cst_6 [1] : vector<16x128xf32> to vector<16xf32>
    %11 = vector.shape_cast %10 : vector<16xf32> to vector<16x1xf32>
    %cst_7 = arith.constant 1.280000e+02 : f32
    %12 = vector.broadcast %cst_7 : f32 to vector<16x1xf32>
    %13 = arith.divf %11, %12 : vector<16x1xf32>
    %14 = vector.broadcast %6 : vector<16x1xf32> to vector<16x128xf32>
    %15 = arith.subf %0, %14 : vector<16x128xf32>
    %cst_8 = arith.constant 9.99999974E-6 : f32
    %16 = vector.broadcast %cst_8 : f32 to vector<16x1xf32>
    %17 = arith.addf %13, %16 : vector<16x1xf32>
    %18 = math.rsqrt %17 : vector<16x1xf32>
    %19 = vector.broadcast %18 : vector<16x1xf32> to vector<16x128xf32>
    %20 = arith.mulf %15, %19 : vector<16x128xf32>
    %21 = vector.broadcast %1 : vector<1x128xf32> to vector<16x128xf32>
    %22 = arith.mulf %20, %21 : vector<16x128xf32>
    %23 = vector.broadcast %2 : vector<1x128xf32> to vector<16x128xf32>
    %24 = arith.addf %22, %23 : vector<16x128xf32>
    %c0_9 = arith.constant 0 : index
    %c0_10 = arith.constant 0 : index
    %25 = vector.load %arg5[%c0_9, %c0_10] : memref<16x128xf32, #tpu.memory_space<vmem>>, vector<16x128xf32>
    tpu.vector_store %arg5[%c0_9, %c0_10], %24 {strides = array<i32>} : memref<16x128xf32, #tpu.memory_space<vmem>>, vector<16x128xf32>,
    %c0_11 = arith.constant 0 : index
    %26 = memref.load %arg0[%c0_11] : memref<2xi32, #tpu.memory_space<smem>>
    %c0_i32 = arith.constant 0 : i32
    %27 = arith.addi %c0_i32, %26 : i32
    %28 = arith.index_cast %27 : i32 to index
    %c0_12 = arith.constant 0 : index
    %29 = vector.load %arg5[%28, %c0_12] : memref<16x128xf32, #tpu.memory_space<vmem>>, vector<1x128xf32>
    %c0_13 = arith.constant 0 : index
    %c0_14 = arith.constant 0 : index
    %30 = vector.load %arg7[%c0_13, %c0_14] : memref<2x128xf32, #tpu.memory_space<vmem>>, vector<1x128xf32>
    tpu.vector_store %arg7[%c0_13, %c0_14], %29 {strides = array<i32>} : memref<2x128xf32, #tpu.memory_space<vmem>>, vector<1x128xf32>,
    %c1 = arith.constant 1 : index
    %31 = memref.load %arg0[%c1] : memref<2xi32, #tpu.memory_space<smem>>
    %c8_i32 = arith.constant 8 : i32
    %32 = arith.addi %c8_i32, %31 : i32
    %33 = arith.index_cast %32 : i32 to index
    %c0_15 = arith.constant 0 : index
    %34 = vector.load %arg5[%33, %c0_15] : memref<16x128xf32, #tpu.memory_space<vmem>>, vector<1x128xf32>
    %c1_16 = arith.constant 1 : index
    %c0_17 = arith.constant 0 : index
    %35 = vector.load %arg7[%c1_16, %c0_17] : memref<2x128xf32, #tpu.memory_space<vmem>>, vector<1x128xf32>
    tpu.vector_store %arg7[%c1_16, %c0_17], %34 {strides = array<i32>} : memref<2x128xf32, #tpu.memory_space<vmem>>, vector<1x128xf32>,
    %c0_18 = arith.constant 0 : index
    %c0_19 = arith.constant 0 : index
    %36 = vector.load %arg7[%c0_18, %c0_19] : memref<2x128xf32, #tpu.memory_space<vmem>>, vector<2x128xf32>
    %37 = arith.truncf %36 : vector<2x128xf32> to vector<2x128xbf16>
    %c0_20 = arith.constant 0 : index
    %c0_21 = arith.constant 0 : index
    %38 = vector.load %arg4[%c0_20, %c0_21] : memref<128x128xbf16, #tpu.memory_space<vmem>>, vector<128x128xbf16>
    %cst_22 = arith.constant dense<0.000000e+00> : vector<2x128xf32>
    %39 = tpu.matmul %37, %38, %cst_22 {dimension_numbers = #tpu.dot_dimension_numbers<[1], [0], [0], [1], [0, 0, 1, 1], [], []>} : vector<2x128xbf16>, vector<128x128xbf16>, vector<2x128xf32> -> vector<2x128xf32>
    %c0_23 = arith.constant 0 : index
    %c0_24 = arith.constant 0 : index
    %40 = vector.load %arg6[%c0_23, %c0_24] : memref<2x128xf32, #tpu.memory_space<vmem>>, vector<2x128xf32>
    tpu.vector_store %arg6[%c0_23, %c0_24], %39 {strides = array<i32>} : memref<2x128xf32, #tpu.memory_space<vmem>>, vector<2x128xf32>,
    return
  }
}

</mosaic_0001>

<llo_original>
// kernel: clip_text_forward.3
$region0: #{clip_text_forward.3}
  #allocation0 [shape = 'u32[]', space=smem, size = 0x4, offset = 0x4, fixed_abs, tag = 'smem constant byte address 0x4 - core index']
  #allocation1 [shape = 'u32[144,128]{1,0:T(1,128)}', space=vmem, size = 0x12000, scoped, tag = 'internal scratch']
  #allocation2 [shape = 'f32[2,128]{1,0:T(2,128)}', space=vmem, size = 0x400, scoped, tag = 'scratch operand']
  %s0 = inlined_call_operand.vmem [shape: s32[2], index: 0, kind: input, shape index: {}]
  %s1 = inlined_call_operand.vmem [shape: f32[16,128], index: 1, kind: input, shape index: {}]
  %s2 = inlined_call_operand.vmem [shape: f32[1,128], index: 2, kind: input, shape index: {}]
  %s3 = inlined_call_operand.vmem [shape: f32[1,128], index: 3, kind: input, shape index: {}]
  %s4 = inlined_call_operand.vmem [shape: bf16[128,128], index: 4, kind: input, shape index: {}]
  %s5 = inlined_call_operand.hbm [shape: f32[16,128], index: 5, kind: output, shape index: {0}]
  %s6 = inlined_call_operand.hbm [shape: f32[2,128], index: 6, kind: output, shape index: {1}]
  %7 = xla_tuple %s5, %s6
  %s8 = sld [smem:[#allocation0]]
  $region42: #{clip_text_forward.3} parent=0
    _
  %s10 = ssub.s32 1, %s8
  %s11 = scalar_select 0, %s10, %s8
  $region1: #{clip_text_forward.3} parent=0
    #allocation3 [shape = 'u8[512]{0}', space=smem, size = 0x200, scoped, tag = 'input window, operand 0, single buffered']
    #allocation4 [shape = 's32[1]{0}', space=sflag, size = 0x4, scoped, tag = 'scoped memory for clip_text_forward.3']
    #allocation5 [shape = 's32[1]{0}', space=sflag, size = 0x4, scoped, tag = 'scoped memory for clip_text_forward.3']
    #allocation6 [shape = 'u8[8192]{0}', space=vmem, size = 0x2000, scoped, tag = 'output window, operand 0, single buffered']
    #allocation7 [shape = 'u8[1024]{0}', space=vmem, size = 0x400, scoped, tag = 'output window, operand 1, single buffered']
    #allocation8 [shape = 's32[1]{0}', space=sflag, size = 0x4, scoped, tag = 'scoped memory for clip_text_forward.3']
    %12 = vsyncpa [#allocation5], 0
    %13 = vsyncpa [#allocation4], 0
    %14 = vsyncpa [#allocation8], 0
    // Predicated region
    $region2: #{clip_text_forward.3} parent=1 // pred_check
      _
    $region3: #{clip_text_forward.3} parent=1 // pred_check_branch
      %16 = sbr.rel (0) target = $region5
    $region4: #{clip_text_forward.3} parent=1 // pred_region
      %s18 = ssub.s32 16, 16
      %19 = vsyncadd [#allocation5], %s18
      %s21 = sshll.u32 %s0, 4
      %s22 = int_to_ptr.vmem [resolvable:$true] %s21
      %24 = dma.vmem_to_smem %s22, 16, [#allocation3], [#allocation5]
    $region5: #{clip_text_forward.3} parent=1 // pred_fallthru
      _
    // Predicated region
    $region6: #{clip_text_forward.3} parent=1 // pred_check
      _
    $region7: #{clip_text_forward.3} parent=1 // pred_check_branch
      %26 = sbr.rel (0) target = $region9
    $region8: #{clip_text_forward.3} parent=1 // pred_region
      _
    $region9: #{clip_text_forward.3} parent=1 // pred_fallthru
      _
    // Predicated region
    $region10: #{clip_text_forward.3} parent=1 // pred_check
      _
    $region11: #{clip_text_forward.3} parent=1 // pred_check_branch
      %28 = sbr.rel (0) target = $region13
    $region12: #{clip_text_forward.3} parent=1 // pred_region
      _
    $region13: #{clip_text_forward.3} parent=1 // pred_fallthru
      _
    // Predicated region
    $region14: #{clip_text_forward.3} parent=1 // pred_check
      _
    $region15: #{clip_text_forward.3} parent=1 // pred_check_branch
      %30 = sbr.rel (0) target = $region17
    $region16: #{clip_text_forward.3} parent=1 // pred_region
      _
    $region17: #{clip_text_forward.3} parent=1 // pred_fallthru
      _
    // Predicated region
    $region18: #{clip_text_forward.3} parent=1 // pred_check
      _
    $region19: #{clip_text_forward.3} parent=1 // pred_check_branch
      %32 = sbr.rel (0) target = $region21
    $region20: #{clip_text_forward.3} parent=1 // pred_region
      _
    $region21: #{clip_text_forward.3} parent=1 // pred_fallthru
      _
    // Predicated region
    $region22: #{clip_text_forward.3} parent=1 // pred_check
      _
    $region23: #{clip_text_forward.3} parent=1 // pred_check_branch
      %34 = sbr.rel (0) target = $region25
    $region24: #{clip_text_forward.3} parent=1 // pred_region
      %35 = dma.done [#allocation5], 16
    $region25: #{clip_text_forward.3} parent=1 // pred_fallthru
      _
    %36 = sfence
    %v38 = vld [vmem:[%s1] sm:$0xff]
    %v39 = vld [vmem:[%s1 + $0x8] sm:$0xff]
    %v40 = vld [vmem:[%s2] sm:$0x1]
    %v41 = vld [vmem:[%s3] sm:$0x1]
    %42 = vadd.xlane.f32.xlu0 %v38
    %v43 = vpop.xlane.xlu0 %42
    %44 = vadd.xlane.f32.xlu0 %v39
    %v45 = vpop.xlane.xlu0 %44
    %v46 = vrcp.pop 128.0
    %v47 = vmul.f32 %v43, %v46
    %v48 = vmul.f32 %v45, %v46
    %v49 = vsub.f32 %v38, %v47
    %v50 = vsub.f32 %v39, %v48
    %v51 = vmul.f32 %v49, %v49
    %v52 = vmul.f32 %v50, %v50
    %53 = vadd.xlane.f32.xlu0 %v51
    %v54 = vpop.xlane.xlu0 %53
    %55 = vadd.xlane.f32.xlu0 %v52
    %v56 = vpop.xlane.xlu0 %55
    %v57 = vmul.f32 %v54, %v46
    %v58 = vmul.f32 %v56, %v46
    %v59 = vadd.f32 %v57, 1e-05
    %v60 = vadd.f32 %v58, 1e-05
    %v61 = vrsqrt.pop %v59
    %v62 = vrsqrt.pop %v60
    %v63 = vmul.f32 %v49, %v61
    %v64 = vmul.f32 %v50, %v62
    %v66 = vlaneseq
    %v67 = vshrl.u32 %v66, 7
    %v68 = vsub.s32 0, %v67
    %v69 = vrot.slane %v40, %v68
    %v71 = vmul.f32 %v63, %v69
    %v72 = vmul.f32 %v64, %v69
    %v74 = vlaneseq
    %v75 = vshrl.u32 %v74, 7
    %v76 = vsub.s32 0, %v75
    %v77 = vrot.slane %v41, %v76
    %v79 = vadd.f32 %v71, %v77
    %v80 = vadd.f32 %v72, %v77
    %81 = vst [vmem:[#allocation6] sm:$0xff] %v79
    %82 = vst [vmem:[#allocation6 + $0x8] sm:$0xff] %v80
    %s83 = sld [smem:[#allocation3]]
    %s84 = scalar_lea.vmem [#allocation6], %s83
    %v85 = vld [vmem:[%s84] sm:$0x1]
    %86 = vst [vmem:[#allocation2] sm:$0x1] %v85
    %s87 = sld [smem:[#allocation3 + $0x1]]
    %s88 = sadd.s32 %s87, 8
    %s89 = scalar_lea.vmem [#allocation6], %s88
    %v90 = vld [vmem:[%s89] sm:$0x1]
    %91 = vst [vmem:[#allocation2 + $0x1] sm:$0x1] %v90
    %v92 = vld [vmem:[#allocation2] sm:$0x3]
    %v93 = vpack.c.bf16 %v92, %v92
    %v94 = vld [vmem:[%s4] sm:$0xf]
    %v95 = vld [vmem:[%s4 + $0x4] sm:$0xf]
    %v96 = vld [vmem:[%s4 + $0x8] sm:$0xf]
    %v97 = vld [vmem:[%s4 + $0xc] sm:$0xf]
    %v98 = vld [vmem:[%s4 + $0x10] sm:$0xf]
    %v99 = vld [vmem:[%s4 + $0x14] sm:$0xf]
    %v100 = vld [vmem:[%s4 + $0x18] sm:$0xf]
    %v101 = vld [vmem:[%s4 + $0x1c] sm:$0xf]
    %v102 = vld [vmem:[%s4 + $0x20] sm:$0xf]
    %v103 = vld [vmem:[%s4 + $0x24] sm:$0xf]
    %v104 = vld [vmem:[%s4 + $0x28] sm:$0xf]
    %v105 = vld [vmem:[%s4 + $0x2c] sm:$0xf]
    %v106 = vld [vmem:[%s4 + $0x30] sm:$0xf]
    %v107 = vld [vmem:[%s4 + $0x34] sm:$0xf]
    %v108 = vld [vmem:[%s4 + $0x38] sm:$0xf]
    %v109 = vld [vmem:[%s4 + $0x3c] sm:$0xf]
    %v126 = vunpack.c.l.b16 %v94
    %v127 = vunpack.c.l.b16 %v95
    %v128 = vunpack.c.l.b16 %v96
    %v129 = vunpack.c.l.b16 %v97
    %v130 = vunpack.c.l.b16 %v98
    %v131 = vunpack.c.l.b16 %v99
    %v132 = vunpack.c.l.b16 %v100
    %v133 = vunpack.c.l.b16 %v101
    %v134 = vunpack.c.l.b16 %v102
    %v135 = vunpack.c.l.b16 %v103
    %v136 = vunpack.c.l.b16 %v104
    %v137 = vunpack.c.l.b16 %v105
    %v138 = vunpack.c.l.b16 %v106
    %v139 = vunpack.c.l.b16 %v107
    %v140 = vunpack.c.l.b16 %v108
    %v141 = vunpack.c.l.b16 %v109
    %v142 = vpack.c.b16 %v127, %v126
    %v143 = vpack.c.b16 %v129, %v128
    %v144 = vpack.c.b16 %v131, %v130
    %v145 = vpack.c.b16 %v133, %v132
    %v146 = vpack.c.b16 %v135, %v134
    %v147 = vpack.c.b16 %v137, %v136
    %v148 = vpack.c.b16 %v139, %v138
    %v149 = vpack.c.b16 %v141, %v140
    %158 = vmatprep.subr.bf16.mxu0 0
    %159 = vmatpush1.bf16.msra.mxu0 %v149
    %160 = vmatprep.subr.bf16.mxu0 0
    %161 = vmatpush1.bf16.msra.mxu0 %v148
    %162 = vmatprep.subr.bf16.mxu0 0
    %163 = vmatpush1.bf16.msra.mxu0 %v147
    %164 = vmatprep.subr.bf16.mxu0 0
    %165 = vmatpush1.bf16.msra.mxu0 %v146
    %166 = vmatprep.subr.bf16.mxu0 0
    %167 = vmatpush1.bf16.msra.mxu0 %v145
    %168 = vmatprep.subr.bf16.mxu0 0
    %169 = vmatpush1.bf16.msra.mxu0 %v144
    %170 = vmatprep.subr.bf16.mxu0 0
    %171 = vmatpush1.bf16.msra.mxu0 %v143
    %172 = vmatprep.subr.bf16.mxu0 0
    %173 = vmatpush1.bf16.msra.mxu0 %v142
    %174 = vmatprep.subr.bf16.mxu0 0
    %175 = vmatpush2.bf16.msra.mxu0 0
    %176 = vmatprep.subr.bf16.mxu0 0
    %177 = vmatpush2.bf16.msra.mxu0 0
    %178 = vmatprep.subr.bf16.mxu0 0
    %179 = vmatpush2.bf16.msra.mxu0 0
    %180 = vmatprep.subr.bf16.mxu0 0
    %181 = vmatpush2.bf16.msra.mxu0 0
    %182 = vmatprep.subr.bf16.mxu0 0
    %183 = vmatpush2.bf16.msra.mxu0 0
    %184 = vmatprep.subr.bf16.mxu0 0
    %185 = vmatpush2.bf16.msra.mxu0 0
    %186 = vmatprep.subr.bf16.mxu0 0
    %187 = vmatpush2.bf16.msra.mxu0 0
    %188 = vmatprep.subr.bf16.mxu0 0
    %189 = vmatpush2.bf16.msra.mxu0 0
    %190 = vmatprep.mubr.bf16.mxu0 0
    %191 = vmatmul.mubr.bf16.gmra.mxu0 %v93
    %v192 = vpop.f32.mrf.mxu0
    %v193 = vadd.f32 0.0, %v192
    %v194 = vpop.f32.mrf.mxu0
    %v195 = vpop.f32.mrf.mxu0
    %v196 = vpop.f32.mrf.mxu0
    %197 = vdwg.mxu0
    %198 = vst [vmem:[#allocation7] sm:$0x3] %v193
    // Predicated region
    $region26: #{clip_text_forward.3} parent=1 // pred_check
      _
    $region27: #{clip_text_forward.3} parent=1 // pred_check_branch
      %200 = sbr.rel (0) target = $region29
    $region28: #{clip_text_forward.3} parent=1 // pred_region
      %s202 = ssub.s32 256, 256
      %203 = vsyncadd [#allocation4], %s202
      %s204 = sshll.u32 [#allocation6], 4
      %s205 = int_to_ptr.vmem [resolvable:$true] %s204
      %210 = dma.vmem_to_hbm [thread:$0]  %s205, 256, %s5, [#allocation4], 128, 128, 8
    $region29: #{clip_text_forward.3} parent=1 // pred_fallthru
      _
    // Predicated region
    $region30: #{clip_text_forward.3} parent=1 // pred_check
      _
    $region31: #{clip_text_forward.3} parent=1 // pred_check_branch
      %212 = sbr.rel (0) target = $region33
    $region32: #{clip_text_forward.3} parent=1 // pred_region
      %s214 = ssub.s32 32, 32
      %215 = vsyncadd [#allocation8], %s214
      %s217 = sshll.u32 [#allocation7], 4
      %s218 = int_to_ptr.vmem [resolvable:$true] %s217
      %220 = dma.vmem_to_hbm [thread:$0]  %s218, 32, %s6, [#allocation8]
    $region33: #{clip_text_forward.3} parent=1 // pred_fallthru
      _
    // Predicated region
    $region34: #{clip_text_forward.3} parent=1 // pred_check
      _
    $region35: #{clip_text_forward.3} parent=1 // pred_check_branch
      %222 = sbr.rel (0) target = $region37
    $region36: #{clip_text_forward.3} parent=1 // pred_region
      %223 = dma.done [#allocation4], 256
    $region37: #{clip_text_forward.3} parent=1 // pred_fallthru
      _
    // Predicated region
    $region38: #{clip_text_forward.3} parent=1 // pred_check
      _
    $region39: #{clip_text_forward.3} parent=1 // pred_check_branch
      %225 = sbr.rel (0) target = $region41
    $region40: #{clip_text_forward.3} parent=1 // pred_region
      %226 = dma.done [#allocation8], 32
    $region41: #{clip_text_forward.3} parent=1 // pred_fallthru
      _
    %227 = vsyncpa [#allocation4], 1
    %228 = vsyncpa [#allocation8], 1
    %229 = vsyncpa [#allocation5], 1

// kernel: clip_text_forward.2
$region0: #{clip_text_forward.2}
  #allocation0 [shape = 'u32[]', space=smem, size = 0x4, offset = 0x4, fixed_abs, tag = 'smem constant byte address 0x4 - core index']
  #allocation1 [shape = 'u32[144,128]{1,0:T(1,128)}', space=vmem, size = 0x12000, scoped, tag = 'internal scratch']
  #allocation2 [shape = 'bf16[8,128]{1,0:T(8,128)(2,1)}', space=vmem, size = 0x800, scoped, tag = 'scratch operand']
  %s0 = inlined_call_operand.vmem [shape: f32[16,128], index: 0, kind: input, shape index: {}, may-alias: {0,17}]
  %s1 = inlined_call_operand.vmem [shape: f32[2,1,128], index: 1, kind: input, shape index: {}]
  %s2 = inlined_call_operand.vmem [shape: f32[2,1,128], index: 2, kind: input, shape index: {}]
  %s3 = inlined_call_operand.vmem [shape: bf16[2,4,128,32], index: 3, kind: input, shape index: {}]
  %s4 = inlined_call_operand.vmem [shape: bf16[2,4,128,32], index: 4, kind: input, shape index: {}]
  %s5 = inlined_call_operand.vmem [shape: bf16[2,4,128,32], index: 5, kind: input, shape index: {}]
  %s6 = inlined_call_operand.vmem [shape: f32[2,4,1,32], index: 6, kind: input, shape index: {}]
  %s7 = inlined_call_operand.vmem [shape: f32[2,4,1,32], index: 7, kind: input, shape index: {}]
  %s8 = inlined_call_operand.vmem [shape: f32[2,4,1,32], index: 8, kind: input, shape index: {}]
  %s9 = inlined_call_operand.vmem [shape: bf16[2,128,128], index: 9, kind: input, shape index: {}]
  %s10 = inlined_call_operand.vmem [shape: f32[2,1,128], index: 10, kind: input, shape index: {}]
  %s11 = inlined_call_operand.vmem [shape: f32[2,1,128], index: 11, kind: input, shape index: {}]
  %s12 = inlined_call_operand.vmem [shape: f32[2,1,128], index: 12, kind: input, shape index: {}]
  %s13 = inlined_call_operand.vmem [shape: bf16[2,128,512], index: 13, kind: input, shape index: {}]
  %s14 = inlined_call_operand.vmem [shape: f32[2,1,512], index: 14, kind: input, shape index: {}]
  %s15 = inlined_call_operand.vmem [shape: bf16[2,512,128], index: 15, kind: input, shape index: {}]
  %s16 = inlined_call_operand.vmem [shape: f32[2,1,128], index: 16, kind: input, shape index: {}]
  %s17 = inlined_call_operand.vmem [shape: f32[16,128], index: 17, kind: output, shape index: {}, may-alias: {0,17}]
  %s18 = sld [smem:[#allocation0]]
  $region105: #{clip_text_forward.2} parent=0
    _
  %s20 = ssub.s32 1, %s18
  %s21 = scalar_select 0, %s20, %s18
  loop: start=0, step=1, limit=6
  $region2: #{clip_text_forward.2} parent=0 // loop_pre_header
    _
  $region3: #{clip_text_forward.2} parent=0 // loop_header
    %s23 = sphi 0, %s27
    %p24 = scmp.ge.s32.totalorder %s23, 6
    %s30 = sphi 0, %s42
    %s31 = sphi 0, %s38
    %s32 = sphi 0, %s30
    %s33 = sphi 0, %s31
    %s34 = sphi 0, %s32
    %s35 = sphi 0, %s33
    %s45 = sphi 0, %s47
    %s48 = sphi 0, %s45
    %s49 = sphi 0, %s48
    %s65 = sphi 0, %s49
    %s71 = sphi 0, %s73
    %s74 = sphi 0, %s71
    %s75 = sphi 0, %s74
    %s91 = sphi 0, %s75
    %s97 = sphi 0, %s99
    %s100 = sphi 0, %s97
    %s101 = sphi 0, %s100
    %s117 = sphi 0, %s101
    %s123 = sphi 0, %s125
    %s126 = sphi 0, %s123
    %s127 = sphi 0, %s126
    %s143 = sphi 0, %s127
    %s149 = sphi 0, %s151
    %s152 = sphi 0, %s149
    %s153 = sphi 0, %s152
    %s169 = sphi 0, %s153
    %s175 = sphi 0, %s177
    %s178 = sphi 0, %s175
    %s179 = sphi 0, %s178
    %s195 = sphi 0, %s179
    %s201 = sphi 0, %s203
    %s204 = sphi 0, %s201
    %s205 = sphi 0, %s204
    %s221 = sphi 0, %s205
    %s227 = sphi 0, %s229
    %s230 = sphi 0, %s227
    %s231 = sphi 0, %s230
    %s247 = sphi 0, %s231
    %s253 = sphi 0, %s255
    %s256 = sphi 0, %s253
    %s257 = sphi 0, %s256
    %s273 = sphi 0, %s257
    %s279 = sphi 0, %s281
    %s282 = sphi 0, %s279
    %s283 = sphi 0, %s282
    %s299 = sphi 0, %s283
    %s305 = sphi 0, %s307
    %s308 = sphi 0, %s305
    %s309 = sphi 0, %s308
    %s325 = sphi 0, %s309
    %s331 = sphi 0, %s333
    %s334 = sphi 0, %s331
    %s335 = sphi 0, %s334
    %s351 = sphi 0, %s335
    %s357 = sphi 0, %s359
    %s360 = sphi 0, %s357
    %s361 = sphi 0, %s360
    %s377 = sphi 0, %s361
    %s383 = sphi 0, %s385
    %s386 = sphi 0, %s383
    %s387 = sphi 0, %s386
    %s403 = sphi 0, %s387
    %s409 = sphi 0, %s411
    %s412 = sphi 0, %s409
    %s413 = sphi 0, %s412
    %s429 = sphi 0, %s413
    %s435 = sphi 0, %s437
    %s438 = sphi 0, %s435
    %s439 = sphi 0, %s438
    %s455 = sphi 0, %s439
    %s461 = sphi 0, %s463
    %s464 = sphi 0, %s461
    %s465 = sphi 0, %s464
    %s481 = sphi 0, %s465
    %s487 = sphi 0, %s489
    %s490 = sphi 0, %s487
    %s491 = sphi 0, %s490
    %s507 = sphi 0, %s491
  $region4: #{clip_text_forward.2} parent=0 // loop_header_branch
    %26 = sbr.rel (%p24) target = $region8
  $region5: #{clip_text_forward.2} parent=0 // loop_body
    %s28 = ssub.s32 %s23, 1
    %s29 = ssub.s32 %s23, 2
    %s36 = sadd.s32 1, %s31
    %p37 = scmp.ge.s32.totalorder %s36, 2
    %s38 = scalar_select %p37, 0, %s36
    %s39 = sadd.s32 1, %s30
    %s40 = scalar_select %p37, %s39, %s30
    %p41 = scmp.ge.s32.totalorder %s40, 2
    %s42 = scalar_select %p41, 0, %s40
    %s43 = ssub.s32 %s30, %s42
    %p44 = scmp.eq.s32.totalorder %s43, 0
    %s46 = sadd.s32 %s45, 1
    %s47 = scalar_select %p44, %s45, %s46
    %p50 = pneg %p44
    %p51 = scmp.eq.s32.totalorder %s23, 3
    %p52 = por %p50, %p51
    %p53 = scmp.ne.s32.totalorder %s45, %s48
    %p54 = scmp.eq.s32.totalorder %s23, 0
    %p55 = por %p53, %p54
    %p56 = scmp.ne.s32.totalorder %s45, %s48
    %p57 = scmp.eq.s32.totalorder %s28, 3
    %p58 = por %p56, %p57
    %p59 = scmp.ne.s32.totalorder %s48, %s49
    %p60 = scmp.eq.s32.totalorder %s28, 0
    %p61 = por %p59, %p60
    %p62 = scmp.ne.s32.totalorder %s48, %s49
    %p63 = scmp.eq.s32.totalorder %s29, 3
    %p64 = por %p62, %p63
    %p66 = scmp.ne.s32.totalorder %s49, %s65
    %p67 = scmp.eq.s32.totalorder %s29, 0
    %p68 = por %p66, %p67
    %s69 = ssub.s32 %s31, %s38
    %p70 = scmp.eq.s32.totalorder %s69, 0
    %s72 = sadd.s32 %s71, 1
    %s73 = scalar_select %p70, %s71, %s72
    %p76 = pneg %p70
    %p77 = scmp.eq.s32.totalorder %s23, 3
    %p78 = por %p76, %p77
    %p79 = scmp.ne.s32.totalorder %s71, %s74
    %p80 = scmp.eq.s32.totalorder %s23, 0
    %p81 = por %p79, %p80
    %p82 = scmp.ne.s32.totalorder %s71, %s74
    %p83 = scmp.eq.s32.totalorder %s28, 3
    %p84 = por %p82, %p83
    %p85 = scmp.ne.s32.totalorder %s74, %s75
    %p86 = scmp.eq.s32.totalorder %s28, 0
    %p87 = por %p85, %p86
    %p88 = scmp.ne.s32.totalorder %s74, %s75
    %p89 = scmp.eq.s32.totalorder %s29, 3
    %p90 = por %p88, %p89
    %p92 = scmp.ne.s32.totalorder %s75, %s91
    %p93 = scmp.eq.s32.totalorder %s29, 0
    %p94 = por %p92, %p93
    %s95 = ssub.s32 %s31, %s38
    %p96 = scmp.eq.s32.totalorder %s95, 0
    %s98 = sadd.s32 %s97, 1
    %s99 = scalar_select %p96, %s97, %s98
    %p102 = pneg %p96
    %p103 = scmp.eq.s32.totalorder %s23, 3
    %p104 = por %p102, %p103
    %p105 = scmp.ne.s32.totalorder %s97, %s100
    %p106 = scmp.eq.s32.totalorder %s23, 0
    %p107 = por %p105, %p106
    %p108 = scmp.ne.s32.totalorder %s97, %s100
    %p109 = scmp.eq.s32.totalorder %s28, 3
    %p110 = por %p108, %p109
    %p111 = scmp.ne.s32.totalorder %s100, %s101
    %p112 = scmp.eq.s32.totalorder %s28, 0
    %p113 = por %p111, %p112
    %p114 = scmp.ne.s32.totalorder %s100, %s101
    %p115 = scmp.eq.s32.totalorder %s29, 3
    %p116 = por %p114, %p115
    %p118 = scmp.ne.s32.totalorder %s101, %s117
    %p119 = scmp.eq.s32.totalorder %s29, 0
    %p120 = por %p118, %p119
    %s121 = ssub.s32 %s31, %s38
    %p122 = scmp.eq.s32.totalorder %s121, 0
    %s124 = sadd.s32 %s123, 1
    %s125 = scalar_select %p122, %s123, %s124
    %p128 = pneg %p122
    %p129 = scmp.eq.s32.totalorder %s23, 3
    %p130 = por %p128, %p129
    %p131 = scmp.ne.s32.totalorder %s123, %s126
    %p132 = scmp.eq.s32.totalorder %s23, 0
    %p133 = por %p131, %p132
    %p134 = scmp.ne.s32.totalorder %s123, %s126
    %p135 = scmp.eq.s32.totalorder %s28, 3
    %p136 = por %p134, %p135
    %p137 = scmp.ne.s32.totalorder %s126, %s127
    %p138 = scmp.eq.s32.totalorder %s28, 0
    %p139 = por %p137, %p138
    %p140 = scmp.ne.s32.totalorder %s126, %s127
    %p141 = scmp.eq.s32.totalorder %s29, 3
    %p142 = por %p140, %p141
    %p144 = scmp.ne.s32.totalorder %s127, %s143
    %p145 = scmp.eq.s32.totalorder %s29, 0
    %p146 = por %p144, %p145
    %s147 = ssub.s32 %s31, %s38
    %p148 = scmp.eq.s32.totalorder %s147, 0
    %s150 = sadd.s32 %s149, 1
    %s151 = scalar_select %p148, %s149, %s150
    %p154 = pneg %p148
    %p155 = scmp.eq.s32.totalorder %s23, 3
    %p156 = por %p154, %p155
    %p157 = scmp.ne.s32.totalorder %s149, %s152
    %p158 = scmp.eq.s32.totalorder %s23, 0
    %p159 = por %p157, %p158
    %p160 = scmp.ne.s32.totalorder %s149, %s152
    %p161 = scmp.eq.s32.totalorder %s28, 3
    %p162 = por %p160, %p161
    %p163 = scmp.ne.s32.totalorder %s152, %s153
    %p164 = scmp.eq.s32.totalorder %s28, 0
    %p165 = por %p163, %p164
    %p166 = scmp.ne.s32.totalorder %s152, %s153
    %p167 = scmp.eq.s32.totalorder %s29, 3
    %p168 = por %p166, %p167
    %p170 = scmp.ne.s32.totalorder %s153, %s169
    %p171 = scmp.eq.s32.totalorder %s29, 0
    %p172 = por %p170, %p171
    %s173 = ssub.s32 %s31, %s38
    %p174 = scmp.eq.s32.totalorder %s173, 0
    %s176 = sadd.s32 %s175, 1
    %s177 = scalar_select %p174, %s175, %s176
    %p180 = pneg %p174
    %p181 = scmp.eq.s32.totalorder %s23, 3
    %p182 = por %p180, %p181
    %p183 = scmp.ne.s32.totalorder %s175, %s178
    %p184 = scmp.eq.s32.totalorder %s23, 0
    %p185 = por %p183, %p184
    %p186 = scmp.ne.s32.totalorder %s175, %s178
    %p187 = scmp.eq.s32.totalorder %s28, 3
    %p188 = por %p186, %p187
    %p189 = scmp.ne.s32.totalorder %s178, %s179
    %p190 = scmp.eq.s32.totalorder %s28, 0
    %p191 = por %p189, %p190
    %p192 = scmp.ne.s32.totalorder %s178, %s179
    %p193 = scmp.eq.s32.totalorder %s29, 3
    %p194 = por %p192, %p193
    %p196 = scmp.ne.s32.totalorder %s179, %s195
    %p197 = scmp.eq.s32.totalorder %s29, 0
    %p198 = por %p196, %p197
    %s199 = ssub.s32 %s31, %s38
    %p200 = scmp.eq.s32.totalorder %s199, 0
    %s202 = sadd.s32 %s201, 1
    %s203 = scalar_select %p200, %s201, %s202
    %p206 = pneg %p200
    %p207 = scmp.eq.s32.totalorder %s23, 3
    %p208 = por %p206, %p207
    %p209 = scmp.ne.s32.totalorder %s201, %s204
    %p210 = scmp.eq.s32.totalorder %s23, 0
    %p211 = por %p209, %p210
    %p212 = scmp.ne.s32.totalorder %s201, %s204
    %p213 = scmp.eq.s32.totalorder %s28, 3
    %p214 = por %p212, %p213
    %p215 = scmp.ne.s32.totalorder %s204, %s205
    %p216 = scmp.eq.s32.totalorder %s28, 0
    %p217 = por %p215, %p216
    %p218 = scmp.ne.s32.totalorder %s204, %s205
    %p219 = scmp.eq.s32.totalorder %s29, 3
    %p220 = por %p218, %p219
    %p222 = scmp.ne.s32.totalorder %s205, %s221
    %p223 = scmp.eq.s32.totalorder %s29, 0
    %p224 = por %p222, %p223
    %s225 = ssub.s32 %s31, %s38
    %p226 = scmp.eq.s32.totalorder %s225, 0
    %s228 = sadd.s32 %s227, 1
    %s229 = scalar_select %p226, %s227, %s228
    %p232 = pneg %p226
    %p233 = scmp.eq.s32.totalorder %s23, 3
    %p234 = por %p232, %p233
    %p235 = scmp.ne.s32.totalorder %s227, %s230
    %p236 = scmp.eq.s32.totalorder %s23, 0
    %p237 = por %p235, %p236
    %p238 = scmp.ne.s32.totalorder %s227, %s230
    %p239 = scmp.eq.s32.totalorder %s28, 3
    %p240 = por %p238, %p239
    %p241 = scmp.ne.s32.totalorder %s230, %s231
    %p242 = scmp.eq.s32.totalorder %s28, 0
    %p243 = por %p241, %p242
    %p244 = scmp.ne.s32.totalorder %s230, %s231
    %p245 = scmp.eq.s32.totalorder %s29, 3
    %p246 = por %p244, %p245
    %p248 = scmp.ne.s32.totalorder %s231, %s247
    %p249 = scmp.eq.s32.totalorder %s29, 0
    %p250 = por %p248, %p249
    %s251 = ssub.s32 %s31, %s38
    %p252 = scmp.eq.s32.totalorder %s251, 0
    %s254 = sadd.s32 %s253, 1
    %s255 = scalar_select %p252, %s253, %s254
    %p258 = pneg %p252
    %p259 = scmp.eq.s32.totalorder %s23, 3
    %p260 = por %p258, %p259
    %p261 = scmp.ne.s32.totalorder %s253, %s256
    %p262 = scmp.eq.s32.totalorder %s23, 0
    %p263 = por %p261, %p262
    %p264 = scmp.ne.s32.totalorder %s253, %s256
    %p265 = scmp.eq.s32.totalorder %s28, 3
    %p266 = por %p264, %p265
    %p267 = scmp.ne.s32.totalorder %s256, %s257
    %p268 = scmp.eq.s32.totalorder %s28, 0
    %p269 = por %p267, %p268
    %p270 = scmp.ne.s32.totalorder %s256, %s257
    %p271 = scmp.eq.s32.totalorder %s29, 3
    %p272 = por %p270, %p271
    %p274 = scmp.ne.s32.totalorder %s257, %s273
    %p275 = scmp.eq.s32.totalorder %s29, 0
    %p276 = por %p274, %p275
    %s277 = ssub.s32 %s31, %s38
    %p278 = scmp.eq.s32.totalorder %s277, 0
    %s280 = sadd.s32 %s279, 1
    %s281 = scalar_select %p278, %s279, %s280
    %p284 = pneg %p278
    %p285 = scmp.eq.s32.totalorder %s23, 3
    %p286 = por %p284, %p285
    %p287 = scmp.ne.s32.totalorder %s279, %s282
    %p288 = scmp.eq.s32.totalorder %s23, 0
    %p289 = por %p287, %p288
    %p290 = scmp.ne.s32.totalorder %s279, %s282
    %p291 = scmp.eq.s32.totalorder %s28, 3
    %p292 = por %p290, %p291
    %p293 = scmp.ne.s32.totalorder %s282, %s283
    %p294 = scmp.eq.s32.totalorder %s28, 0
    %p295 = por %p293, %p294
    %p296 = scmp.ne.s32.totalorder %s282, %s283
    %p297 = scmp.eq.s32.totalorder %s29, 3
    %p298 = por %p296, %p297
    %p300 = scmp.ne.s32.totalorder %s283, %s299
    %p301 = scmp.eq.s32.totalorder %s29, 0
    %p302 = por %p300, %p301
    %s303 = ssub.s32 %s31, %s38
    %p304 = scmp.eq.s32.totalorder %s303, 0
    %s306 = sadd.s32 %s305, 1
    %s307 = scalar_select %p304, %s305, %s306
    %p310 = pneg %p304
    %p311 = scmp.eq.s32.totalorder %s23, 3
    %p312 = por %p310, %p311
    %p313 = scmp.ne.s32.totalorder %s305, %s308
    %p314 = scmp.eq.s32.totalorder %s23, 0
    %p315 = por %p313, %p314
    %p316 = scmp.ne.s32.totalorder %s305, %s308
    %p317 = scmp.eq.s32.totalorder %s28, 3
    %p318 = por %p316, %p317
    %p319 = scmp.ne.s32.totalorder %s308, %s309
    %p320 = scmp.eq.s32.totalorder %s28, 0
    %p321 = por %p319, %p320
    %p322 = scmp.ne.s32.totalorder %s308, %s309
    %p323 = scmp.eq.s32.totalorder %s29, 3
    %p324 = por %p322, %p323
    %p326 = scmp.ne.s32.totalorder %s309, %s325
    %p327 = scmp.eq.s32.totalorder %s29, 0
    %p328 = por %p326, %p327
    %s329 = ssub.s32 %s31, %s38
    %p330 = scmp.eq.s32.totalorder %s329, 0
    %s332 = sadd.s32 %s331, 1
    %s333 = scalar_select %p330, %s331, %s332
    %p336 = pneg %p330
    %p337 = scmp.eq.s32.totalorder %s23, 3
    %p338 = por %p336, %p337
    %p339 = scmp.ne.s32.totalorder %s331, %s334
    %p340 = scmp.eq.s32.totalorder %s23, 0
    %p341 = por %p339, %p340
    %p342 = scmp.ne.s32.totalorder %s331, %s334
    %p343 = scmp.eq.s32.totalorder %s28, 3
    %p344 = por %p342, %p343
    %p345 = scmp.ne.s32.totalorder %s334, %s335
    %p346 = scmp.eq.s32.totalorder %s28, 0
    %p347 = por %p345, %p346
    %p348 = scmp.ne.s32.totalorder %s334, %s335
    %p349 = scmp.eq.s32.totalorder %s29, 3
    %p350 = por %p348, %p349
    %p352 = scmp.ne.s32.totalorder %s335, %s351
    %p353 = scmp.eq.s32.totalorder %s29, 0
    %p354 = por %p352, %p353
    %s355 = ssub.s32 %s31, %s38
    %p356 = scmp.eq.s32.totalorder %s355, 0
    %s358 = sadd.s32 %s357, 1
    %s359 = scalar_select %p356, %s357, %s358
    %p362 = pneg %p356
    %p363 = scmp.eq.s32.totalorder %s23, 3
    %p364 = por %p362, %p363
    %p365 = scmp.ne.s32.totalorder %s357, %s360
    %p366 = scmp.eq.s32.totalorder %s23, 0
    %p367 = por %p365, %p366
    %p368 = scmp.ne.s32.totalorder %s357, %s360
    %p369 = scmp.eq.s32.totalorder %s28, 3
    %p370 = por %p368, %p369
    %p371 = scmp.ne.s32.totalorder %s360, %s361
    %p372 = scmp.eq.s32.totalorder %s28, 0
    %p373 = por %p371, %p372
    %p374 = scmp.ne.s32.totalorder %s360, %s361
    %p375 = scmp.eq.s32.totalorder %s29, 3
    %p376 = por %p374, %p375
    %p378 = scmp.ne.s32.totalorder %s361, %s377
    %p379 = scmp.eq.s32.totalorder %s29, 0
    %p380 = por %p378, %p379
    %s381 = ssub.s32 %s31, %s38
    %p382 = scmp.eq.s32.totalorder %s381, 0
    %s384 = sadd.s32 %s383, 1
    %s385 = scalar_select %p382, %s383, %s384
    %p388 = pneg %p382
    %p389 = scmp.eq.s32.totalorder %s23, 3
    %p390 = por %p388, %p389
    %p391 = scmp.ne.s32.totalorder %s383, %s386
    %p392 = scmp.eq.s32.totalorder %s23, 0
    %p393 = por %p391, %p392
    %p394 = scmp.ne.s32.totalorder %s383, %s386
    %p395 = scmp.eq.s32.totalorder %s28, 3
    %p396 = por %p394, %p395
    %p397 = scmp.ne.s32.totalorder %s386, %s387
    %p398 = scmp.eq.s32.totalorder %s28, 0
    %p399 = por %p397, %p398
    %p400 = scmp.ne.s32.totalorder %s386, %s387
    %p401 = scmp.eq.s32.totalorder %s29, 3
    %p402 = por %p400, %p401
    %p404 = scmp.ne.s32.totalorder %s387, %s403
    %p405 = scmp.eq.s32.totalorder %s29, 0
    %p406 = por %p404, %p405
    %s407 = ssub.s32 %s31, %s38
    %p408 = scmp.eq.s32.totalorder %s407, 0
    %s410 = sadd.s32 %s409, 1
    %s411 = scalar_select %p408, %s409, %s410
    %p414 = pneg %p408
    %p415 = scmp.eq.s32.totalorder %s23, 3
    %p416 = por %p414, %p415
    %p417 = scmp.ne.s32.totalorder %s409, %s412
    %p418 = scmp.eq.s32.totalorder %s23, 0
    %p419 = por %p417, %p418
    %p420 = scmp.ne.s32.totalorder %s409, %s412
    %p421 = scmp.eq.s32.totalorder %s28, 3
    %p422 = por %p420, %p421
    %p423 = scmp.ne.s32.totalorder %s412, %s413
    %p424 = scmp.eq.s32.totalorder %s28, 0
    %p425 = por %p423, %p424
    %p426 = scmp.ne.s32.totalorder %s412, %s413
    %p427 = scmp.eq.s32.totalorder %s29, 3
    %p428 = por %p426, %p427
    %p430 = scmp.ne.s32.totalorder %s413, %s429
    %p431 = scmp.eq.s32.totalorder %s29, 0
    %p432 = por %p430, %p431
    %s433 = ssub.s32 %s31, %s38
    %p434 = scmp.eq.s32.totalorder %s433, 0
    %s436 = sadd.s32 %s435, 1
    %s437 = scalar_select %p434, %s435, %s436
    %p440 = pneg %p434
    %p441 = scmp.eq.s32.totalorder %s23, 3
    %p442 = por %p440, %p441
    %p443 = scmp.ne.s32.totalorder %s435, %s438
    %p444 = scmp.eq.s32.totalorder %s23, 0
    %p445 = por %p443, %p444
    %p446 = scmp.ne.s32.totalorder %s435, %s438
    %p447 = scmp.eq.s32.totalorder %s28, 3
    %p448 = por %p446, %p447
    %p449 = scmp.ne.s32.totalorder %s438, %s439
    %p450 = scmp.eq.s32.totalorder %s28, 0
    %p451 = por %p449, %p450
    %p452 = scmp.ne.s32.totalorder %s438, %s439
    %p453 = scmp.eq.s32.totalorder %s29, 3
    %p454 = por %p452, %p453
    %p456 = scmp.ne.s32.totalorder %s439, %s455
    %p457 = scmp.eq.s32.totalorder %s29, 0
    %p458 = por %p456, %p457
    %s459 = ssub.s32 %s31, %s38
    %p460 = scmp.eq.s32.totalorder %s459, 0
    %s462 = sadd.s32 %s461, 1
    %s463 = scalar_select %p460, %s461, %s462
    %p466 = pneg %p460
    %p467 = scmp.eq.s32.totalorder %s23, 3
    %p468 = por %p466, %p467
    %p469 = scmp.ne.s32.totalorder %s461, %s464
    %p470 = scmp.eq.s32.totalorder %s23, 0
    %p471 = por %p469, %p470
    %p472 = scmp.ne.s32.totalorder %s461, %s464
    %p473 = scmp.eq.s32.totalorder %s28, 3
    %p474 = por %p472, %p473
    %p475 = scmp.ne.s32.totalorder %s464, %s465
    %p476 = scmp.eq.s32.totalorder %s28, 0
    %p477 = por %p475, %p476
    %p478 = scmp.ne.s32.totalorder %s464, %s465
    %p479 = scmp.eq.s32.totalorder %s29, 3
    %p480 = por %p478, %p479
    %p482 = scmp.ne.s32.totalorder %s465, %s481
    %p483 = scmp.eq.s32.totalorder %s29, 0
    %p484 = por %p482, %p483
    %s485 = ssub.s32 %s30, %s42
    %p486 = scmp.eq.s32.totalorder %s485, 0
    %s488 = sadd.s32 %s487, 1
    %s489 = scalar_select %p486, %s487, %s488
    %p492 = pneg %p486
    %p493 = scmp.eq.s32.totalorder %s23, 3
    %p494 = por %p492, %p493
    %p495 = scmp.ne.s32.totalorder %s487, %s490
    %p496 = scmp.eq.s32.totalorder %s23, 0
    %p497 = por %p495, %p496
    %p498 = scmp.ne.s32.totalorder %s487, %s490
    %p499 = scmp.eq.s32.totalorder %s28, 3
    %p500 = por %p498, %p499
    %p501 = scmp.ne.s32.totalorder %s490, %s491
    %p502 = scmp.eq.s32.totalorder %s28, 0
    %p503 = por %p501, %p502
    %p504 = scmp.ne.s32.totalorder %s490, %s491
    %p505 = scmp.eq.s32.totalorder %s29, 3
    %p506 = por %p504, %p505
    %p508 = scmp.ne.s32.totalorder %s491, %s507
    %p509 = scmp.eq.s32.totalorder %s29, 0
    %p510 = por %p508, %p509
    %p511 = scmp.le.s32.totalorder 1, %s23
    %p512 = scmp.lt.s32.totalorder %s23, 5
    %p513 = pnand %p511, %p512
    %p514 = pneg %p513
    // Predicated region
    $region9: #{clip_text_forward.2} parent=5 // pred_check
      _
    $region10: #{clip_text_forward.2} parent=5 // pred_check_branch
      %516 = sbr.rel (%p513) target = $region12
    $region11: #{clip_text_forward.2} parent=5 // pred_region
      %s517 = ssub.s32 %s23, 1
    $region12: #{clip_text_forward.2} parent=5 // pred_fallthru
      _
    %p518 = scmp.lt.s32.totalorder %s23, 4
    // Predicated region
    $region13: #{clip_text_forward.2} parent=5 // pred_check
      %p519 = pneg %p518
    $region14: #{clip_text_forward.2} parent=5 // pred_check_branch
      %521 = sbr.rel (%p519) target = $region16
    $region15: #{clip_text_forward.2} parent=5 // pred_region
      // Predicated region
      $region17: #{clip_text_forward.2} parent=15 // pred_check
        %p522 = pneg %p55
      $region18: #{clip_text_forward.2} parent=15 // pred_check_branch
        %524 = sbr.rel (%p522) target = $region20
      $region19: #{clip_text_forward.2} parent=15 // pred_region
        %p525 = scmp.lt.s32.totalorder %s30, 1
        %s526 = scalar_select %p525, %s30, 1
        %s527 = smul.addr %s526, 8
        %s528 = scalar_lea.vmem %s0, %s527
      $region20: #{clip_text_forward.2} parent=15 // pred_fallthru
        _
      // Predicated region
      $region21: #{clip_text_forward.2} parent=15 // pred_check
        %p529 = pneg %p81
      $region22: #{clip_text_forward.2} parent=15 // pred_check_branch
        %531 = sbr.rel (%p529) target = $region24
      $region23: #{clip_text_forward.2} parent=15 // pred_region
        %p532 = scmp.lt.s32.totalorder %s31, 1
        %s533 = scalar_select %p532, %s31, 1
        %s534 = scalar_lea.vmem %s1, %s533
      $region24: #{clip_text_forward.2} parent=15 // pred_fallthru
        _
      // Predicated region
      $region25: #{clip_text_forward.2} parent=15 // pred_check
        %p535 = pneg %p107
      $region26: #{clip_text_forward.2} parent=15 // pred_check_branch
        %537 = sbr.rel (%p535) target = $region28
      $region27: #{clip_text_forward.2} parent=15 // pred_region
        %p538 = scmp.lt.s32.totalorder %s31, 1
        %s539 = scalar_select %p538, %s31, 1
        %s540 = scalar_lea.vmem %s2, %s539
      $region28: #{clip_text_forward.2} parent=15 // pred_fallthru
        _
      // Predicated region
      $region29: #{clip_text_forward.2} parent=15 // pred_check
        %p541 = pneg %p133
      $region30: #{clip_text_forward.2} parent=15 // pred_check_branch
        %543 = sbr.rel (%p541) target = $region32
      $region31: #{clip_text_forward.2} parent=15 // pred_region
        %p544 = scmp.lt.s32.totalorder %s31, 1
        %s545 = scalar_select %p544, %s31, 1
        %s546 = smul.addr %s545, 64
        %s547 = smul.addr %s546, 4
        %s548 = scalar_lea.vmem %s3, %s547
      $region32: #{clip_text_forward.2} parent=15 // pred_fallthru
        _
      // Predicated region
      $region33: #{clip_text_forward.2} parent=15 // pred_check
        %p549 = pneg %p159
      $region34: #{clip_text_forward.2} parent=15 // pred_check_branch
        %551 = sbr.rel (%p549) target = $region36
      $region35: #{clip_text_forward.2} parent=15 // pred_region
        %p552 = scmp.lt.s32.totalorder %s31, 1
        %s553 = scalar_select %p552, %s31, 1
        %s554 = smul.addr %s553, 64
        %s555 = smul.addr %s554, 4
        %s556 = scalar_lea.vmem %s4, %s555
      $region36: #{clip_text_forward.2} parent=15 // pred_fallthru
        _
      // Predicated region
      $region37: #{clip_text_forward.2} parent=15 // pred_check
        %p557 = pneg %p185
      $region38: #{clip_text_forward.2} parent=15 // pred_check_branch
        %559 = sbr.rel (%p557) target = $region40
      $region39: #{clip_text_forward.2} parent=15 // pred_region
        %p560 = scmp.lt.s32.totalorder %s31, 1
        %s561 = scalar_select %p560, %s31, 1
        %s562 = smul.addr %s561, 64
        %s563 = smul.addr %s562, 4
        %s564 = scalar_lea.vmem %s5, %s563
      $region40: #{clip_text_forward.2} parent=15 // pred_fallthru
        _
      // Predicated region
      $region41: #{clip_text_forward.2} parent=15 // pred_check
        %p565 = pneg %p211
      $region42: #{clip_text_forward.2} parent=15 // pred_check_branch
        %567 = sbr.rel (%p565) target = $region44
      $region43: #{clip_text_forward.2} parent=15 // pred_region
        %p568 = scmp.lt.s32.totalorder %s31, 1
        %s569 = scalar_select %p568, %s31, 1
        %s570 = smul.addr %s569, 4
        %s571 = scalar_lea.vmem %s6, %s570
      $region44: #{clip_text_forward.2} parent=15 // pred_fallthru
        _
      // Predicated region
      $region45: #{clip_text_forward.2} parent=15 // pred_check
        %p572 = pneg %p237
      $region46: #{clip_text_forward.2} parent=15 // pred_check_branch
        %574 = sbr.rel (%p572) target = $region48
      $region47: #{clip_text_forward.2} parent=15 // pred_region
        %p575 = scmp.lt.s32.totalorder %s31, 1
        %s576 = scalar_select %p575, %s31, 1
        %s577 = smul.addr %s576, 4
        %s578 = scalar_lea.vmem %s7, %s577
      $region48: #{clip_text_forward.2} parent=15 // pred_fallthru
        _
      // Predicated region
      $region49: #{clip_text_forward.2} parent=15 // pred_check
        %p579 = pneg %p263
      $region50: #{clip_text_forward.2} parent=15 // pred_check_branch
        %581 = sbr.rel (%p579) target = $region52
      $region51: #{clip_text_forward.2} parent=15 // pred_region
        %p582 = scmp.lt.s32.totalorder %s31, 1
        %s583 = scalar_select %p582, %s31, 1
        %s584 = smul.addr %s583, 4
        %s585 = scalar_lea.vmem %s8, %s584
      $region52: #{clip_text_forward.2} parent=15 // pred_fallthru
        _
      // Predicated region
      $region53: #{clip_text_forward.2} parent=15 // pred_check
        %p586 = pneg %p289
      $region54: #{clip_text_forward.2} parent=15 // pred_check_branch
        %588 = sbr.rel (%p586) target = $region56
      $region55: #{clip_text_forward.2} parent=15 // pred_region
        %p589 = scmp.lt.s32.totalorder %s31, 1
        %s590 = scalar_select %p589, %s31, 1
        %s591 = smul.addr %s590, 16
        %s592 = smul.addr %s591, 4
        %s593 = scalar_lea.vmem %s9, %s592
      $region56: #{clip_text_forward.2} parent=15 // pred_fallthru
        _
      // Predicated region
      $region57: #{clip_text_forward.2} parent=15 // pred_check
        %p594 = pneg %p315
      $region58: #{clip_text_forward.2} parent=15 // pred_check_branch
        %596 = sbr.rel (%p594) target = $region60
      $region59: #{clip_text_forward.2} parent=15 // pred_region
        %p597 = scmp.lt.s32.totalorder %s31, 1
        %s598 = scalar_select %p597, %s31, 1
        %s599 = scalar_lea.vmem %s10, %s598
      $region60: #{clip_text_forward.2} parent=15 // pred_fallthru
        _
      // Predicated region
      $region61: #{clip_text_forward.2} parent=15 // pred_check
        %p600 = pneg %p341
      $region62: #{clip_text_forward.2} parent=15 // pred_check_branch
        %602 = sbr.rel (%p600) target = $region64
      $region63: #{clip_text_forward.2} parent=15 // pred_region
        %p603 = scmp.lt.s32.totalorder %s31, 1
        %s604 = scalar_select %p603, %s31, 1
        %s605 = scalar_lea.vmem %s11, %s604
      $region64: #{clip_text_forward.2} parent=15 // pred_fallthru
        _
      // Predicated region
      $region65: #{clip_text_forward.2} parent=15 // pred_check
        %p606 = pneg %p367
      $region66: #{clip_text_forward.2} parent=15 // pred_check_branch
        %608 = sbr.rel (%p606) target = $region68
      $region67: #{clip_text_forward.2} parent=15 // pred_region
        %p609 = scmp.lt.s32.totalorder %s31, 1
        %s610 = scalar_select %p609, %s31, 1
        %s611 = scalar_lea.vmem %s12, %s610
      $region68: #{clip_text_forward.2} parent=15 // pred_fallthru
        _
      // Predicated region
      $region69: #{clip_text_forward.2} parent=15 // pred_check
        %p612 = pneg %p393
      $region70: #{clip_text_forward.2} parent=15 // pred_check_branch
        %614 = sbr.rel (%p612) target = $region72
      $region71: #{clip_text_forward.2} parent=15 // pred_region
        %p615 = scmp.lt.s32.totalorder %s31, 1
        %s616 = scalar_select %p615, %s31, 1
        %s617 = smul.addr %s616, 64
        %s618 = smul.addr %s617, 4
        %s619 = scalar_lea.vmem %s13, %s618
      $region72: #{clip_text_forward.2} parent=15 // pred_fallthru
        _
      // Predicated region
      $region73: #{clip_text_forward.2} parent=15 // pred_check
        %p620 = pneg %p419
      $region74: #{clip_text_forward.2} parent=15 // pred_check_branch
        %622 = sbr.rel (%p620) target = $region76
      $region75: #{clip_text_forward.2} parent=15 // pred_region
        %p623 = scmp.lt.s32.totalorder %s31, 1
        %s624 = scalar_select %p623, %s31, 1
        %s625 = smul.addr %s624, 4
        %s626 = scalar_lea.vmem %s14, %s625
      $region76: #{clip_text_forward.2} parent=15 // pred_fallthru
        _
      // Predicated region
      $region77: #{clip_text_forward.2} parent=15 // pred_check
        %p627 = pneg %p445
      $region78: #{clip_text_forward.2} parent=15 // pred_check_branch
        %629 = sbr.rel (%p627) target = $region80
      $region79: #{clip_text_forward.2} parent=15 // pred_region
        %p630 = scmp.lt.s32.totalorder %s31, 1
        %s631 = scalar_select %p630, %s31, 1
        %s632 = smul.addr %s631, 64
        %s633 = smul.addr %s632, 4
        %s634 = scalar_lea.vmem %s15, %s633
      $region80: #{clip_text_forward.2} parent=15 // pred_fallthru
        _
      // Predicated region
      $region81: #{clip_text_forward.2} parent=15 // pred_check
        %p635 = pneg %p471
      $region82: #{clip_text_forward.2} parent=15 // pred_check_branch
        %637 = sbr.rel (%p635) target = $region84
      $region83: #{clip_text_forward.2} parent=15 // pred_region
        %p638 = scmp.lt.s32.totalorder %s31, 1
        %s639 = scalar_select %p638, %s31, 1
        %s640 = scalar_lea.vmem %s16, %s639
      $region84: #{clip_text_forward.2} parent=15 // pred_fallthru
        _
    $region16: #{clip_text_forward.2} parent=5 // pred_fallthru
      _
    %p641 = scmp.le.s32.totalorder 1, %s23
    %p642 = scmp.lt.s32.totalorder %s23, 5
    %p643 = pnand %p641, %p642
    %p644 = pneg %p643
    // Predicated region
    $region85: #{clip_text_forward.2} parent=5 // pred_check
      _
    $region86: #{clip_text_forward.2} parent=5 // pred_check_branch
      %646 = sbr.rel (%p643) target = $region88
    $region87: #{clip_text_forward.2} parent=5 // pred_region
      %s647 = ssub.s32 %s23, 1
      %p648 = scmp.lt.s32.totalorder %s32, 1
      %s649 = scalar_select %p648, %s32, 1
      %s650 = smul.addr %s649, 8
      %s651 = scalar_lea.vmem %s0, %s650
      %p652 = pneg %p61
      %p653 = pneg %p58
      %p654 = scmp.lt.s32.totalorder %s33, 1
      %s655 = scalar_select %p654, %s33, 1
      %s656 = scalar_lea.vmem %s1, %s655
      %p657 = pneg %p87
      %p658 = pneg %p84
      %p659 = scmp.lt.s32.totalorder %s33, 1
      %s660 = scalar_select %p659, %s33, 1
      %s661 = scalar_lea.vmem %s2, %s660
      %p662 = pneg %p113
      %p663 = pneg %p110
      %p664 = scmp.lt.s32.totalorder %s33, 1
      %s665 = scalar_select %p664, %s33, 1
      %s666 = smul.addr %s665, 64
      %s667 = smul.addr %s666, 4
      %s668 = scalar_lea.vmem %s3, %s667
      %p669 = pneg %p139
      %p670 = pneg %p136
      %p671 = scmp.lt.s32.totalorder %s33, 1
      %s672 = scalar_select %p671, %s33, 1
      %s673 = smul.addr %s672, 64
      %s674 = smul.addr %s673, 4
      %s675 = scalar_lea.vmem %s4, %s674
      %p676 = pneg %p165
      %p677 = pneg %p162
      %p678 = scmp.lt.s32.totalorder %s33, 1
      %s679 = scalar_select %p678, %s33, 1
      %s680 = smul.addr %s679, 64
      %s681 = smul.addr %s680, 4
      %s682 = scalar_lea.vmem %s5, %s681
      %p683 = pneg %p191
      %p684 = pneg %p188
      %p685 = scmp.lt.s32.totalorder %s33, 1
      %s686 = scalar_select %p685, %s33, 1
      %s687 = smul.addr %s686, 4
      %s688 = scalar_lea.vmem %s6, %s687
      %p689 = pneg %p217
      %p690 = pneg %p214
      %p691 = scmp.lt.s32.totalorder %s33, 1
      %s692 = scalar_select %p691, %s33, 1
      %s693 = smul.addr %s692, 4
      %s694 = scalar_lea.vmem %s7, %s693
      %p695 = pneg %p243
      %p696 = pneg %p240
      %p697 = scmp.lt.s32.totalorder %s33, 1
      %s698 = scalar_select %p697, %s33, 1
      %s699 = smul.addr %s698, 4
      %s700 = scalar_lea.vmem %s8, %s699
      %p701 = pneg %p269
      %p702 = pneg %p266
      %p703 = scmp.lt.s32.totalorder %s33, 1
      %s704 = scalar_select %p703, %s33, 1
      %s705 = smul.addr %s704, 16
      %s706 = smul.addr %s705, 4
      %s707 = scalar_lea.vmem %s9, %s706
      %p708 = pneg %p295
      %p709 = pneg %p292
      %p710 = scmp.lt.s32.totalorder %s33, 1
      %s711 = scalar_select %p710, %s33, 1
      %s712 = scalar_lea.vmem %s10, %s711
      %p713 = pneg %p321
      %p714 = pneg %p318
      %p715 = scmp.lt.s32.totalorder %s33, 1
      %s716 = scalar_select %p715, %s33, 1
      %s717 = scalar_lea.vmem %s11, %s716
      %p718 = pneg %p347
      %p719 = pneg %p344
      %p720 = scmp.lt.s32.totalorder %s33, 1
      %s721 = scalar_select %p720, %s33, 1
      %s722 = scalar_lea.vmem %s12, %s721
      %p723 = pneg %p373
      %p724 = pneg %p370
      %p725 = scmp.lt.s32.totalorder %s33, 1
      %s726 = scalar_select %p725, %s33, 1
      %s727 = smul.addr %s726, 64
      %s728 = smul.addr %s727, 4
      %s729 = scalar_lea.vmem %s13, %s728
      %p730 = pneg %p399
      %p731 = pneg %p396
      %p732 = scmp.lt.s32.totalorder %s33, 1
      %s733 = scalar_select %p732, %s33, 1
      %s734 = smul.addr %s733, 4
      %s735 = scalar_lea.vmem %s14, %s734
      %p736 = pneg %p425
      %p737 = pneg %p422
      %p738 = scmp.lt.s32.totalorder %s33, 1
      %s739 = scalar_select %p738, %s33, 1
      %s740 = smul.addr %s739, 64
      %s741 = smul.addr %s740, 4
      %s742 = scalar_lea.vmem %s15, %s741
      %p743 = pneg %p451
      %p744 = pneg %p448
      %p745 = scmp.lt.s32.totalorder %s33, 1
      %s746 = scalar_select %p745, %s33, 1
      %s747 = scalar_lea.vmem %s16, %s746
      %p748 = pneg %p477
      %p749 = pneg %p474
      %p750 = pneg %p503
      %p751 = pneg %p500
      %p752 = scmp.lt.s32.totalorder %s32, 1
      %s753 = scalar_select %p752, %s32, 1
      %s754 = smul.addr %s753, 8
      %s755 = scalar_lea.vmem %s17, %s754
      %p756 = scmp.lt.s32.totalorder %s32, 1
      %s757 = scalar_select %p756, %s32, 1
      %s758 = smul.addr %s757, 8
      %s759 = scalar_lea.vmem %s0, %s758
      %p760 = scmp.lt.s32.totalorder %s33, 1
      %s761 = scalar_select %p760, %s33, 1
      %s762 = scalar_lea.vmem %s1, %s761
      %p763 = scmp.lt.s32.totalorder %s33, 1
      %s764 = scalar_select %p763, %s33, 1
      %s765 = scalar_lea.vmem %s2, %s764
      %p766 = scmp.lt.s32.totalorder %s33, 1
      %s767 = scalar_select %p766, %s33, 1
      %s768 = smul.addr %s767, 64
      %s769 = smul.addr %s768, 4
      %s770 = scalar_lea.vmem %s3, %s769
      %p771 = scmp.lt.s32.totalorder %s33, 1
      %s772 = scalar_select %p771, %s33, 1
      %s773 = smul.addr %s772, 64
      %s774 = smul.addr %s773, 4
      %s775 = scalar_lea.vmem %s4, %s774
      %p776 = scmp.lt.s32.totalorder %s33, 1
      %s777 = scalar_select %p776, %s33, 1
      %s778 = smul.addr %s777, 64
      %s779 = smul.addr %s778, 4
      %s780 = scalar_lea.vmem %s5, %s779
      %p781 = scmp.lt.s32.totalorder %s33, 1
      %s782 = scalar_select %p781, %s33, 1
      %s783 = smul.addr %s782, 4
      %s784 = scalar_lea.vmem %s6, %s783
      %p785 = scmp.lt.s32.totalorder %s33, 1
      %s786 = scalar_select %p785, %s33, 1
      %s787 = smul.addr %s786, 4
      %s788 = scalar_lea.vmem %s7, %s787
      %p789 = scmp.lt.s32.totalorder %s33, 1
      %s790 = scalar_select %p789, %s33, 1
      %s791 = smul.addr %s790, 4
      %s792 = scalar_lea.vmem %s8, %s791
      %p793 = scmp.lt.s32.totalorder %s33, 1
      %s794 = scalar_select %p793, %s33, 1
      %s795 = smul.addr %s794, 16
      %s796 = smul.addr %s795, 4
      %s797 = scalar_lea.vmem %s9, %s796
      %p798 = scmp.lt.s32.totalorder %s33, 1
      %s799 = scalar_select %p798, %s33, 1
      %s800 = scalar_lea.vmem %s10, %s799
      %p801 = scmp.lt.s32.totalorder %s33, 1
      %s802 = scalar_select %p801, %s33, 1
      %s803 = scalar_lea.vmem %s11, %s802
      %p804 = scmp.lt.s32.totalorder %s33, 1
      %s805 = scalar_select %p804, %s33, 1
      %s806 = scalar_lea.vmem %s12, %s805
      %p807 = scmp.lt.s32.totalorder %s33, 1
      %s808 = scalar_select %p807, %s33, 1
      %s809 = smul.addr %s808, 64
      %s810 = smul.addr %s809, 4
      %s811 = scalar_lea.vmem %s13, %s810
      %p812 = scmp.lt.s32.totalorder %s33, 1
      %s813 = scalar_select %p812, %s33, 1
      %s814 = smul.addr %s813, 4
      %s815 = scalar_lea.vmem %s14, %s814
      %p816 = scmp.lt.s32.totalorder %s33, 1
      %s817 = scalar_select %p816, %s33, 1
      %s818 = smul.addr %s817, 64
      %s819 = smul.addr %s818, 4
      %s820 = scalar_lea.vmem %s15, %s819
      %p821 = scmp.lt.s32.totalorder %s33, 1
      %s822 = scalar_select %p821, %s33, 1
      %s823 = scalar_lea.vmem %s16, %s822
      %p824 = scmp.lt.s32.totalorder %s32, 1
      %s825 = scalar_select %p824, %s32, 1
      %s826 = smul.addr %s825, 8
      %s827 = scalar_lea.vmem %s17, %s826
      %p829 = scmp.eq.s32.totalorder %s33, 0
      // Predicated region
      $region89: #{clip_text_forward.2} parent=87 // pred_check
        %p830 = pneg %p829
      $region90: #{clip_text_forward.2} parent=87 // pred_check_branch
        %832 = sbr.rel (%p830) target = $region92
      $region91: #{clip_text_forward.2} parent=87 // pred_region
        %v833 = vld [vmem:[%s759] sm:$0xff]
        %834 = vst [vmem:[%s827] sm:$0xff] %v833
      $region92: #{clip_text_forward.2} parent=87 // pred_fallthru
        _
      %v835 = vld [vmem:[%s827] sm:$0xff]
      %v836 = vlaneseq
      %v837 = vshrl.u32 %v836, 7
      %v838 = vlaneseq
      %v839 = vand.u32 %v838, 127
      %vm840 = vcmp.gt.s32.totalorder %v839, %v837
      %v841 = vsel %vm840, -1e+30, 0.0
      %v842 = vld [vmem:[%s762] sm:$0x1]
      %v843 = vld [vmem:[%s765] sm:$0x1]
      %844 = vadd.xlane.f32.xlu0 %v835
      %v845 = vpop.xlane.xlu0 %844
      %v846 = vrcp.pop 128.0
      %v847 = vmul.f32 %v845, %v846
      %v848 = vsub.f32 %v835, %v847
      %v849 = vmul.f32 %v848, %v848
      %850 = vadd.xlane.f32.xlu0 %v849
      %v851 = vpop.xlane.xlu0 %850
      %v852 = vmul.f32 %v851, %v846
      %v853 = vadd.f32 %v852, 1e-05
      %v854 = vrsqrt.pop %v853
      %v855 = vmul.f32 %v848, %v854
      %v857 = vlaneseq
      %v858 = vshrl.u32 %v857, 7
      %v859 = vsub.s32 0, %v858
      %v860 = vrot.slane %v842, %v859
      %v862 = vmul.f32 %v855, %v860
      %v864 = vlaneseq
      %v865 = vshrl.u32 %v864, 7
      %v866 = vsub.s32 0, %v865
      %v867 = vrot.slane %v843, %v866
      %v869 = vadd.f32 %v862, %v867
      %v870 = vpack.c.bf16 %v869, %v869
      %v871 = vld [vmem:[%s770] sm:$0xf]
      %v872 = vld [vmem:[%s770 + $0x4] sm:$0xf]
      %v873 = vld [vmem:[%s770 + $0x8] sm:$0xf]
      %v874 = vld [vmem:[%s770 + $0xc] sm:$0xf]
      %v875 = vld [vmem:[%s770 + $0x10] sm:$0xf]
      %v876 = vld [vmem:[%s770 + $0x14] sm:$0xf]
      %v877 = vld [vmem:[%s770 + $0x18] sm:$0xf]
      %v878 = vld [vmem:[%s770 + $0x1c] sm:$0xf]
      %v879 = vld [vmem:[%s770 + $0x20] sm:$0xf]
      %v880 = vld [vmem:[%s770 + $0x24] sm:$0xf]
      %v881 = vld [vmem:[%s770 + $0x28] sm:$0xf]
      %v882 = vld [vmem:[%s770 + $0x2c] sm:$0xf]
      %v883 = vld [vmem:[%s770 + $0x30] sm:$0xf]
      %v884 = vld [vmem:[%s770 + $0x34] sm:$0xf]
      %v885 = vld [vmem:[%s770 + $0x38] sm:$0xf]
      %v886 = vld [vmem:[%s770 + $0x3c] sm:$0xf]
      %v887 = vld [vmem:[%s784] sm:$0x1]
      %v889 = vlaneseq
      %v890 = vshrl.u32 %v889, 7
      %v891 = vsub.s32 0, %v890
      %v892 = vrot.slane %v887, %v891
      %v910 = vunpack.c.l.b16 %v871
      %v911 = vunpack.c.l.b16 %v872
      %v912 = vunpack.c.l.b16 %v873
      %v913 = vunpack.c.l.b16 %v874
      %v914 = vunpack.c.l.b16 %v875
      %v915 = vunpack.c.l.b16 %v876
      %v916 = vunpack.c.l.b16 %v877
      %v917 = vunpack.c.l.b16 %v878
      %v918 = vunpack.c.l.b16 %v879
      %v919 = vunpack.c.l.b16 %v880
      %v920 = vunpack.c.l.b16 %v881
      %v921 = vunpack.c.l.b16 %v882
      %v922 = vunpack.c.l.b16 %v883
      %v923 = vunpack.c.l.b16 %v884
      %v924 = vunpack.c.l.b16 %v885
      %v925 = vunpack.c.l.b16 %v886
      %v926 = vpack.c.b16 %v911, %v910
      %v927 = vpack.c.b16 %v913, %v912
      %v928 = vpack.c.b16 %v915, %v914
      %v929 = vpack.c.b16 %v917, %v916
      %v930 = vpack.c.b16 %v919, %v918
      %v931 = vpack.c.b16 %v921, %v920
      %v932 = vpack.c.b16 %v923, %v922
      %v933 = vpack.c.b16 %v925, %v924
      %942 = vmatprep.subr.bf16.mxu0 0
      %943 = vmatpush1.bf16.msra.mxu0 %v933
      %944 = vmatprep.subr.bf16.mxu0 0
      %945 = vmatpush1.bf16.msra.mxu0 %v932
      %946 = vmatprep.subr.bf16.mxu0 0
      %947 = vmatpush1.bf16.msra.mxu0 %v931
      %948 = vmatprep.subr.bf16.mxu0 0
      %949 = vmatpush1.bf16.msra.mxu0 %v930
      %950 = vmatprep.subr.bf16.mxu0 0
      %951 = vmatpush1.bf16.msra.mxu0 %v929
      %952 = vmatprep.subr.bf16.mxu0 0
      %953 = vmatpush1.bf16.msra.mxu0 %v928
      %954 = vmatprep.subr.bf16.mxu0 0
      %955 = vmatpush1.bf16.msra.mxu0 %v927
      %956 = vmatprep.subr.bf16.mxu0 0
      %957 = vmatpush1.bf16.msra.mxu0 %v926
      %958 = vmatprep.subr.bf16.mxu0 0
      %959 = vmatpush2.bf16.msra.mxu0 0
      %960 = vmatprep.subr.bf16.mxu0 0
      %961 = vmatpush2.bf16.msra.mxu0 0
      %962 = vmatprep.subr.bf16.mxu0 0
      %963 = vmatpush2.bf16.msra.mxu0 0
      %964 = vmatprep.subr.bf16.mxu0 0
      %965 = vmatpush2.bf16.msra.mxu0 0
      %966 = vmatprep.subr.bf16.mxu0 0
      %967 = vmatpush2.bf16.msra.mxu0 0
      %968 = vmatprep.subr.bf16.mxu0 0
      %969 = vmatpush2.bf16.msra.mxu0 0
      %970 = vmatprep.subr.bf16.mxu0 0
      %971 = vmatpush2.bf16.msra.mxu0 0
      %972 = vmatprep.subr.bf16.mxu0 0
      %973 = vmatpush2.bf16.msra.mxu0 0
      %974 = vmatprep.mubr.bf16.mxu0 0
      %975 = vmatmul.mubr.bf16.gmra.mxu0 %v870
      %v976 = vpop.f32.mrf.mxu0
      %v977 = vadd.f32 %v892, %v976
      %v978 = vpop.f32.mrf.mxu0
      %v979 = vpop.f32.mrf.mxu0
      %v980 = vpop.f32.mrf.mxu0
      %981 = vdwg.mxu0
      %v982 = vpack.c.bf16 %v977, %v977
      %v983 = vld [vmem:[%s775] sm:$0xf]
      %v984 = vld [vmem:[%s775 + $0x4] sm:$0xf]
      %v985 = vld [vmem:[%s775 + $0x8] sm:$0xf]
      %v986 = vld [vmem:[%s775 + $0xc] sm:$0xf]
      %v987 = vld [vmem:[%s775 + $0x10] sm:$0xf]
      %v988 = vld [vmem:[%s775 + $0x14] sm:$0xf]
      %v989 = vld [vmem:[%s775 + $0x18] sm:$0xf]
      %v990 = vld [vmem:[%s775 + $0x1c] sm:$0xf]
      %v991 = vld [vmem:[%s775 + $0x20] sm:$0xf]
      %v992 = vld [vmem:[%s775 + $0x24] sm:$0xf]
      %v993 = vld [vmem:[%s775 + $0x28] sm:$0xf]
      %v994 = vld [vmem:[%s775 + $0x2c] sm:$0xf]
      %v995 = vld [vmem:[%s775 + $0x30] sm:$0xf]
      %v996 = vld [vmem:[%s775 + $0x34] sm:$0xf]
      %v997 = vld [vmem:[%s775 + $0x38] sm:$0xf]
      %v998 = vld [vmem:[%s775 + $0x3c] sm:$0xf]
      %v999 = vld [vmem:[%s788] sm:$0x1]
      %v1001 = vlaneseq
      %v1002 = vshrl.u32 %v1001, 7
      %v1003 = vsub.s32 0, %v1002
      %v1004 = vrot.slane %v999, %v1003
      %v1022 = vunpack.c.l.b16 %v983
      %v1023 = vunpack.c.l.b16 %v984
      %v1024 = vunpack.c.l.b16 %v985
      %v1025 = vunpack.c.l.b16 %v986
      %v1026 = vunpack.c.l.b16 %v987
      %v1027 = vunpack.c.l.b16 %v988
      %v1028 = vunpack.c.l.b16 %v989
      %v1029 = vunpack.c.l.b16 %v990
      %v1030 = vunpack.c.l.b16 %v991
      %v1031 = vunpack.c.l.b16 %v992
      %v1032 = vunpack.c.l.b16 %v993
      %v1033 = vunpack.c.l.b16 %v994
      %v1034 = vunpack.c.l.b16 %v995
      %v1035 = vunpack.c.l.b16 %v996
      %v1036 = vunpack.c.l.b16 %v997
      %v1037 = vunpack.c.l.b16 %v998
      %v1038 = vpack.c.b16 %v1023, %v1022
      %v1039 = vpack.c.b16 %v1025, %v1024
      %v1040 = vpack.c.b16 %v1027, %v1026
      %v1041 = vpack.c.b16 %v1029, %v1028
      %v1042 = vpack.c.b16 %v1031, %v1030
      %v1043 = vpack.c.b16 %v1033, %v1032
      %v1044 = vpack.c.b16 %v1035, %v1034
      %v1045 = vpack.c.b16 %v1037, %v1036
      %1054 = vmatprep.subr.bf16.mxu0 0
      %1055 = vmatpush1.bf16.msra.mxu0 %v1045
      %1056 = vmatprep.subr.bf16.mxu0 0
      %1057 = vmatpush1.bf16.msra.mxu0 %v1044
      %1058 = vmatprep.subr.bf16.mxu0 0
      %1059 = vmatpush1.bf16.msra.mxu0 %v1043
      %1060 = vmatprep.subr.bf16.mxu0 0
      %1061 = vmatpush1.bf16.msra.mxu0 %v1042
      %1062 = vmatprep.subr.bf16.mxu0 0
      %1063 = vmatpush1.bf16.msra.mxu0 %v1041
      %1064 = vmatprep.subr.bf16.mxu0 0
      %1065 = vmatpush1.bf16.msra.mxu0 %v1040
      %1066 = vmatprep.subr.bf16.mxu0 0
      %1067 = vmatpush1.bf16.msra.mxu0 %v1039
      %1068 = vmatprep.subr.bf16.mxu0 0
      %1069 = vmatpush1.bf16.msra.mxu0 %v1038
      %1070 = vmatprep.subr.bf16.mxu0 0
      %1071 = vmatpush2.bf16.msra.mxu0 0
      %1072 = vmatprep.subr.bf16.mxu0 0
      %1073 = vmatpush2.bf16.msra.mxu0 0
      %1074 = vmatprep.subr.bf16.mxu0 0
      %1075 = vmatpush2.bf16.msra.mxu0 0
      %1076 = vmatprep.subr.bf16.mxu0 0
      %1077 = vmatpush2.bf16.msra.mxu0 0
      %1078 = vmatprep.subr.bf16.mxu0 0
      %1079 = vmatpush2.bf16.msra.mxu0 0
      %1080 = vmatprep.subr.bf16.mxu0 0
      %1081 = vmatpush2.bf16.msra.mxu0 0
      %1082 = vmatprep.subr.bf16.mxu0 0
      %1083 = vmatpush2.bf16.msra.mxu0 0
      %1084 = vmatprep.subr.bf16.mxu0 0
      %1085 = vmatpush2.bf16.msra.mxu0 0
      %1086 = vmatprep.mubr.bf16.mxu0 0
      %1087 = vmatmul.mubr.bf16.gmra.mxu0 %v870
      %v1088 = vpop.f32.mrf.mxu0
      %v1089 = vadd.f32 %v1004, %v1088
      %v1090 = vpop.f32.mrf.mxu0
      %v1091 = vpop.f32.mrf.mxu0
      %v1092 = vpop.f32.mrf.mxu0
      %1093 = vdwg.mxu0
      %v1094 = vpack.c.bf16 %v1089, %v1089
      %v1095 = vld [vmem:[%s780] sm:$0xf]
      %v1096 = vld [vmem:[%s780 + $0x4] sm:$0xf]
      %v1097 = vld [vmem:[%s780 + $0x8] sm:$0xf]
      %v1098 = vld [vmem:[%s780 + $0xc] sm:$0xf]
      %v1099 = vld [vmem:[%s780 + $0x10] sm:$0xf]
      %v1100 = vld [vmem:[%s780 + $0x14] sm:$0xf]
      %v1101 = vld [vmem:[%s780 + $0x18] sm:$0xf]
      %v1102 = vld [vmem:[%s780 + $0x1c] sm:$0xf]
      %v1103 = vld [vmem:[%s780 + $0x20] sm:$0xf]
      %v1104 = vld [vmem:[%s780 + $0x24] sm:$0xf]
      %v1105 = vld [vmem:[%s780 + $0x28] sm:$0xf]
      %v1106 = vld [vmem:[%s780 + $0x2c] sm:$0xf]
      %v1107 = vld [vmem:[%s780 + $0x30] sm:$0xf]
      %v1108 = vld [vmem:[%s780 + $0x34] sm:$0xf]
      %v1109 = vld [vmem:[%s780 + $0x38] sm:$0xf]
      %v1110 = vld [vmem:[%s780 + $0x3c] sm:$0xf]
      %v1111 = vld [vmem:[%s792] sm:$0x1]
      %v1113 = vlaneseq
      %v1114 = vshrl.u32 %v1113, 7
      %v1115 = vsub.s32 0, %v1114
      %v1116 = vrot.slane %v1111, %v1115
      %v1134 = vunpack.c.l.b16 %v1095
      %v1135 = vunpack.c.l.b16 %v1096
      %v1136 = vunpack.c.l.b16 %v1097
      %v1137 = vunpack.c.l.b16 %v1098
      %v1138 = vunpack.c.l.b16 %v1099
      %v1139 = vunpack.c.l.b16 %v1100
      %v1140 = vunpack.c.l.b16 %v1101
      %v1141 = vunpack.c.l.b16 %v1102
      %v1142 = vunpack.c.l.b16 %v1103
      %v1143 = vunpack.c.l.b16 %v1104
      %v1144 = vunpack.c.l.b16 %v1105
      %v1145 = vunpack.c.l.b16 %v1106
      %v1146 = vunpack.c.l.b16 %v1107
      %v1147 = vunpack.c.l.b16 %v1108
      %v1148 = vunpack.c.l.b16 %v1109
      %v1149 = vunpack.c.l.b16 %v1110
      %v1150 = vpack.c.b16 %v1135, %v1134
      %v1151 = vpack.c.b16 %v1137, %v1136
      %v1152 = vpack.c.b16 %v1139, %v1138
      %v1153 = vpack.c.b16 %v1141, %v1140
      %v1154 = vpack.c.b16 %v1143, %v1142
      %v1155 = vpack.c.b16 %v1145, %v1144
      %v1156 = vpack.c.b16 %v1147, %v1146
      %v1157 = vpack.c.b16 %v1149, %v1148
      %1166 = vmatprep.subr.bf16.mxu0 0
      %1167 = vmatpush1.bf16.msra.mxu0 %v1157
      %1168 = vmatprep.subr.bf16.mxu0 0
      %1169 = vmatpush1.bf16.msra.mxu0 %v1156
      %1170 = vmatprep.subr.bf16.mxu0 0
      %1171 = vmatpush1.bf16.msra.mxu0 %v1155
      %1172 = vmatprep.subr.bf16.mxu0 0
      %1173 = vmatpush1.bf16.msra.mxu0 %v1154
      %1174 = vmatprep.subr.bf16.mxu0 0
      %1175 = vmatpush1.bf16.msra.mxu0 %v1153
      %1176 = vmatprep.subr.bf16.mxu0 0
      %1177 = vmatpush1.bf16.msra.mxu0 %v1152
      %1178 = vmatprep.subr.bf16.mxu0 0
      %1179 = vmatpush1.bf16.msra.mxu0 %v1151
      %1180 = vmatprep.subr.bf16.mxu0 0
      %1181 = vmatpush1.bf16.msra.mxu0 %v1150
      %1182 = vmatprep.subr.bf16.mxu0 0
      %1183 = vmatpush2.bf16.msra.mxu0 0
      %1184 = vmatprep.subr.bf16.mxu0 0
      %1185 = vmatpush2.bf16.msra.mxu0 0
      %1186 = vmatprep.subr.bf16.mxu0 0
      %1187 = vmatpush2.bf16.msra.mxu0 0
      %1188 = vmatprep.subr.bf16.mxu0 0
      %1189 = vmatpush2.bf16.msra.mxu0 0
      %1190 = vmatprep.subr.bf16.mxu0 0
      %1191 = vmatpush2.bf16.msra.mxu0 0
      %1192 = vmatprep.subr.bf16.mxu0 0
      %1193 = vmatpush2.bf16.msra.mxu0 0
      %1194 = vmatprep.subr.bf16.mxu0 0
      %1195 = vmatpush2.bf16.msra.mxu0 0
      %1196 = vmatprep.subr.bf16.mxu0 0
      %1197 = vmatpush2.bf16.msra.mxu0 0
      %1198 = vmatprep.mubr.bf16.mxu0 0
      %1199 = vmatmul.mubr.bf16.gmra.mxu0 %v870
      %v1200 = vpop.f32.mrf.mxu0
      %v1201 = vadd.f32 %v1116, %v1200
      %v1202 = vpop.f32.mrf.mxu0
      %v1203 = vpop.f32.mrf.mxu0
      %v1204 = vpop.f32.mrf.mxu0
      %1205 = vdwg.mxu0
      %v1206 = vpack.c.bf16 %v1201, %v1201
      %vm1207 = vcmask 261120
      %v1209 = vsel %vm1207, %v982, 0
      %v1212 = vsel %vm1207, %v1094, 0
      %1214 = vmatprep.subr.bf16.mxu0 0
      %1215 = vmatpush1.bf16.xpose.msra.mxu0 0
      %1216 = vmatprep.subr.bf16.mxu0 0
      %1217 = vmatpush1.bf16.xpose.msra.mxu0 0
      %1218 = vmatprep.subr.bf16.mxu0 0
      %1219 = vmatpush1.bf16.xpose.msra.mxu0 0
      %1220 = vmatprep.subr.bf16.mxu0 0
      %1221 = vmatpush1.bf16.xpose.msra.mxu0 0
      %1222 = vmatprep.subr.bf16.mxu0 0
      %1223 = vmatpush1.bf16.xpose.msra.mxu0 0
      %1224 = vmatprep.subr.bf16.mxu0 0
      %1225 = vmatpush1.bf16.xpose.msra.mxu0 0
      %1226 = vmatprep.subr.bf16.mxu0 0
      %1227 = vmatpush1.bf16.xpose.msra.mxu0 0
      %1228 = vmatprep.subr.bf16.mxu0 0
      %1229 = vmatpush1.bf16.xpose.msra.mxu0 %v1212
      %1230 = vmatprep.subr.bf16.mxu0 0
      %1231 = vmatpush2.bf16.xpose.msra.mxu0 0
      %1232 = vmatprep.subr.bf16.mxu0 0
      %1233 = vmatpush2.bf16.xpose.msra.mxu0 0
      %1234 = vmatprep.subr.bf16.mxu0 0
      %1235 = vmatpush2.bf16.xpose.msra.mxu0 0
      %1236 = vmatprep.subr.bf16.mxu0 0
      %1237 = vmatpush2.bf16.xpose.msra.mxu0 0
      %1238 = vmatprep.subr.bf16.mxu0 0
      %1239 = vmatpush2.bf16.xpose.msra.mxu0 0
      %1240 = vmatprep.subr.bf16.mxu0 0
      %1241 = vmatpush2.bf16.xpose.msra.mxu0 0
      %1242 = vmatprep.subr.bf16.mxu0 0
      %1243 = vmatpush2.bf16.xpose.msra.mxu0 0
      %1244 = vmatprep.subr.bf16.mxu0 0
      %1245 = vmatpush2.bf16.xpose.msra.mxu0 0
      %1246 = vmatprep.mubr.bf16.mxu0 0
      %1247 = vmatmul.mubr.bf16.gmra.mxu0 %v1209
      %v1248 = vpop.f32.mrf.mxu0
      %v1249 = vadd.f32 %v841, %v1248
      %v1250 = vpop.f32.mrf.mxu0
      %v1251 = vpop.f32.mrf.mxu0
      %v1252 = vpop.f32.mrf.mxu0
      %1253 = vdwg.mxu0
      %vm1254 = vcmask 64512
      %v1255 = vsel %vm1254, %v1249, -inf
      %1256 = vmax.xlane.f32.xlu0 %v1255
      %v1257 = vpop.xlane.xlu0 %1256
      %v1258 = vsub.f32 %v1249, %v1257
      %v1259 = vmul.f32 %v1258, 1.442695
      %v1260 = vpow.pop %v1259
      %v1261 = vsel %vm1254, %v1260, 0.0
      %1262 = vadd.xlane.f32.xlu0 %v1261
      %v1263 = vpop.xlane.xlu0 %1262
      %v1264 = vrcp.pop %v1263
      %v1265 = vmul.f32 %v1260, %v1264
      %v1266 = vpack.c.bf16 %v1265, %v1265
      %v1268 = vsel %vm1254, %v1266, 0
      %vm1270 = vcmask 1043456
      %v1272 = vsel %vm1270, %v1206, 0
      %1274 = vmatprep.subr.bf16.mxu0 0
      %1275 = vmatpush1.bf16.msra.mxu0 0
      %1276 = vmatprep.subr.bf16.mxu0 0
      %1277 = vmatpush1.bf16.msra.mxu0 0
      %1278 = vmatprep.subr.bf16.mxu0 0
      %1279 = vmatpush1.bf16.msra.mxu0 0
      %1280 = vmatprep.subr.bf16.mxu0 0
      %1281 = vmatpush1.bf16.msra.mxu0 0
      %1282 = vmatprep.subr.bf16.mxu0 0
      %1283 = vmatpush1.bf16.msra.mxu0 0
      %1284 = vmatprep.subr.bf16.mxu0 0
      %1285 = vmatpush1.bf16.msra.mxu0 0
      %1286 = vmatprep.subr.bf16.mxu0 0
      %1287 = vmatpush1.bf16.msra.mxu0 0
      %1288 = vmatprep.subr.bf16.mxu0 0
      %1289 = vmatpush1.bf16.msra.mxu0 %v1272
      %1290 = vmatprep.subr.bf16.mxu0 0
      %1291 = vmatpush2.bf16.msra.mxu0 0
      %1292 = vmatprep.subr.bf16.mxu0 0
      %1293 = vmatpush2.bf16.msra.mxu0 0
      %1294 = vmatprep.subr.bf16.mxu0 0
      %1295 = vmatpush2.bf16.msra.mxu0 0
      %1296 = vmatprep.subr.bf16.mxu0 0
      %1297 = vmatpush2.bf16.msra.mxu0 0
      %1298 = vmatprep.subr.bf16.mxu0 0
      %1299 = vmatpush2.bf16.msra.mxu0 0
      %1300 = vmatprep.subr.bf16.mxu0 0
      %1301 = vmatpush2.bf16.msra.mxu0 0
      %1302 = vmatprep.subr.bf16.mxu0 0
      %1303 = vmatpush2.bf16.msra.mxu0 0
      %1304 = vmatprep.subr.bf16.mxu0 0
      %1305 = vmatpush2.bf16.msra.mxu0 0
      %1306 = vmatprep.mubr.bf16.mxu0 0
      %1307 = vmatmul.mubr.bf16.gmra.mxu0 %v1268
      %v1308 = vpop.f32.mrf.mxu0
      %v1309 = vadd.f32 0.0, %v1308
      %v1310 = vpop.f32.mrf.mxu0
      %v1311 = vpop.f32.mrf.mxu0
      %v1312 = vpop.f32.mrf.mxu0
      %1313 = vdwg.mxu0
      %v1314 = vpack.c.bf16 %v1309, %v1309
      %vm1315 = vcmask 257024
      %1316 = vst.msk [vmem:[#allocation2] sm:$0xf] %vm1315, %v1314
      %s1317 = scalar_lea.vmem %s770, 64
      %v1318 = vld [vmem:[%s1317] sm:$0xf]
      %v1319 = vld [vmem:[%s1317 + $0x4] sm:$0xf]
      %v1320 = vld [vmem:[%s1317 + $0x8] sm:$0xf]
      %v1321 = vld [vmem:[%s1317 + $0xc] sm:$0xf]
      %v1322 = vld [vmem:[%s1317 + $0x10] sm:$0xf]
      %v1323 = vld [vmem:[%s1317 + $0x14] sm:$0xf]
      %v1324 = vld [vmem:[%s1317 + $0x18] sm:$0xf]
      %v1325 = vld [vmem:[%s1317 + $0x1c] sm:$0xf]
      %v1326 = vld [vmem:[%s1317 + $0x20] sm:$0xf]
      %v1327 = vld [vmem:[%s1317 + $0x24] sm:$0xf]
      %v1328 = vld [vmem:[%s1317 + $0x28] sm:$0xf]
      %v1329 = vld [vmem:[%s1317 + $0x2c] sm:$0xf]
      %v1330 = vld [vmem:[%s1317 + $0x30] sm:$0xf]
      %v1331 = vld [vmem:[%s1317 + $0x34] sm:$0xf]
      %v1332 = vld [vmem:[%s1317 + $0x38] sm:$0xf]
      %v1333 = vld [vmem:[%s1317 + $0x3c] sm:$0xf]
      %s1334 = scalar_lea.vmem %s784, 1
      %v1335 = vld [vmem:[%s1334] sm:$0x1]
      %v1337 = vlaneseq
      %v1338 = vshrl.u32 %v1337, 7
      %v1339 = vsub.s32 0, %v1338
      %v1340 = vrot.slane %v1335, %v1339
      %v1358 = vunpack.c.l.b16 %v1318
      %v1359 = vunpack.c.l.b16 %v1319
      %v1360 = vunpack.c.l.b16 %v1320
      %v1361 = vunpack.c.l.b16 %v1321
      %v1362 = vunpack.c.l.b16 %v1322
      %v1363 = vunpack.c.l.b16 %v1323
      %v1364 = vunpack.c.l.b16 %v1324
      %v1365 = vunpack.c.l.b16 %v1325
      %v1366 = vunpack.c.l.b16 %v1326
      %v1367 = vunpack.c.l.b16 %v1327
      %v1368 = vunpack.c.l.b16 %v1328
      %v1369 = vunpack.c.l.b16 %v1329
      %v1370 = vunpack.c.l.b16 %v1330
      %v1371 = vunpack.c.l.b16 %v1331
      %v1372 = vunpack.c.l.b16 %v1332
      %v1373 = vunpack.c.l.b16 %v1333
      %v1374 = vpack.c.b16 %v1359, %v1358
      %v1375 = vpack.c.b16 %v1361, %v1360
      %v1376 = vpack.c.b16 %v1363, %v1362
      %v1377 = vpack.c.b16 %v1365, %v1364
      %v1378 = vpack.c.b16 %v1367, %v1366
      %v1379 = vpack.c.b16 %v1369, %v1368
      %v1380 = vpack.c.b16 %v1371, %v1370
      %v1381 = vpack.c.b16 %v1373, %v1372
      %1390 = vmatprep.subr.bf16.mxu0 0
      %1391 = vmatpush1.bf16.msra.mxu0 %v1381
      %1392 = vmatprep.subr.bf16.mxu0 0
      %1393 = vmatpush1.bf16.msra.mxu0 %v1380
      %1394 = vmatprep.subr.bf16.mxu0 0
      %1395 = vmatpush1.bf16.msra.mxu0 %v1379
      %1396 = vmatprep.subr.bf16.mxu0 0
      %1397 = vmatpush1.bf16.msra.mxu0 %v1378
      %1398 = vmatprep.subr.bf16.mxu0 0
      %1399 = vmatpush1.bf16.msra.mxu0 %v1377
      %1400 = vmatprep.subr.bf16.mxu0 0
      %1401 = vmatpush1.bf16.msra.mxu0 %v1376
      %1402 = vmatprep.subr.bf16.mxu0 0
      %1403 = vmatpush1.bf16.msra.mxu0 %v1375
      %1404 = vmatprep.subr.bf16.mxu0 0
      %1405 = vmatpush1.bf16.msra.mxu0 %v1374
      %1406 = vmatprep.subr.bf16.mxu0 0
      %1407 = vmatpush2.bf16.msra.mxu0 0
      %1408 = vmatprep.subr.bf16.mxu0 0
      %1409 = vmatpush2.bf16.msra.mxu0 0
      %1410 = vmatprep.subr.bf16.mxu0 0
      %1411 = vmatpush2.bf16.msra.mxu0 0
      %1412 = vmatprep.subr.bf16.mxu0 0
      %1413 = vmatpush2.bf16.msra.mxu0 0
      %1414 = vmatprep.subr.bf16.mxu0 0
      %1415 = vmatpush2.bf16.msra.mxu0 0
      %1416 = vmatprep.subr.bf16.mxu0 0
      %1417 = vmatpush2.bf16.msra.mxu0 0
      %1418 = vmatprep.subr.bf16.mxu0 0
      %1419 = vmatpush2.bf16.msra.mxu0 0
      %1420 = vmatprep.subr.bf16.mxu0 0
      %1421 = vmatpush2.bf16.msra.mxu0 0
      %1422 = vmatprep.mubr.bf16.mxu0 0
      %1423 = vmatmul.mubr.bf16.gmra.mxu0 %v870
      %v1424 = vpop.f32.mrf.mxu0
      %v1425 = vadd.f32 %v1340, %v1424
      %v1426 = vpop.f32.mrf.mxu0
      %v1427 = vpop.f32.mrf.mxu0
      %v1428 = vpop.f32.mrf.mxu0
      %1429 = vdwg.mxu0
      %v1430 = vpack.c.bf16 %v1425, %v1425
      %s1431 = scalar_lea.vmem %s775, 64
      %v1432 = vld [vmem:[%s1431] sm:$0xf]
      %v1433 = vld [vmem:[%s1431 + $0x4] sm:$0xf]
      %v1434 = vld [vmem:[%s1431 + $0x8] sm:$0xf]
      %v1435 = vld [vmem:[%s1431 + $0xc] sm:$0xf]
      %v1436 = vld [vmem:[%s1431 + $0x10] sm:$0xf]
      %v1437 = vld [vmem:[%s1431 + $0x14] sm:$0xf]
      %v1438 = vld [vmem:[%s1431 + $0x18] sm:$0xf]
      %v1439 = vld [vmem:[%s1431 + $0x1c] sm:$0xf]
      %v1440 = vld [vmem:[%s1431 + $0x20] sm:$0xf]
      %v1441 = vld [vmem:[%s1431 + $0x24] sm:$0xf]
      %v1442 = vld [vmem:[%s1431 + $0x28] sm:$0xf]
      %v1443 = vld [vmem:[%s1431 + $0x2c] sm:$0xf]
      %v1444 = vld [vmem:[%s1431 + $0x30] sm:$0xf]
      %v1445 = vld [vmem:[%s1431 + $0x34] sm:$0xf]
      %v1446 = vld [vmem:[%s1431 + $0x38] sm:$0xf]
      %v1447 = vld [vmem:[%s1431 + $0x3c] sm:$0xf]
      %s1448 = scalar_lea.vmem %s788, 1
      %v1449 = vld [vmem:[%s1448] sm:$0x1]
      %v1451 = vlaneseq
      %v1452 = vshrl.u32 %v1451, 7
      %v1453 = vsub.s32 0, %v1452
      %v1454 = vrot.slane %v1449, %v1453
      %v1472 = vunpack.c.l.b16 %v1432
      %v1473 = vunpack.c.l.b16 %v1433
      %v1474 = vunpack.c.l.b16 %v1434
      %v1475 = vunpack.c.l.b16 %v1435
      %v1476 = vunpack.c.l.b16 %v1436
      %v1477 = vunpack.c.l.b16 %v1437
      %v1478 = vunpack.c.l.b16 %v1438
      %v1479 = vunpack.c.l.b16 %v1439
      %v1480 = vunpack.c.l.b16 %v1440
      %v1481 = vunpack.c.l.b16 %v1441
      %v1482 = vunpack.c.l.b16 %v1442
      %v1483 = vunpack.c.l.b16 %v1443
      %v1484 = vunpack.c.l.b16 %v1444
      %v1485 = vunpack.c.l.b16 %v1445
      %v1486 = vunpack.c.l.b16 %v1446
      %v1487 = vunpack.c.l.b16 %v1447
      %v1488 = vpack.c.b16 %v1473, %v1472
      %v1489 = vpack.c.b16 %v1475, %v1474
      %v1490 = vpack.c.b16 %v1477, %v1476
      %v1491 = vpack.c.b16 %v1479, %v1478
      %v1492 = vpack.c.b16 %v1481, %v1480
      %v1493 = vpack.c.b16 %v1483, %v1482
      %v1494 = vpack.c.b16 %v1485, %v1484
      %v1495 = vpack.c.b16 %v1487, %v1486
      %1504 = vmatprep.subr.bf16.mxu0 0
      %1505 = vmatpush1.bf16.msra.mxu0 %v1495
      %1506 = vmatprep.subr.bf16.mxu0 0
      %1507 = vmatpush1.bf16.msra.mxu0 %v1494
      %1508 = vmatprep.subr.bf16.mxu0 0
      %1509 = vmatpush1.bf16.msra.mxu0 %v1493
      %1510 = vmatprep.subr.bf16.mxu0 0
      %1511 = vmatpush1.bf16.msra.mxu0 %v1492
      %1512 = vmatprep.subr.bf16.mxu0 0
      %1513 = vmatpush1.bf16.msra.mxu0 %v1491
      %1514 = vmatprep.subr.bf16.mxu0 0
      %1515 = vmatpush1.bf16.msra.mxu0 %v1490
      %1516 = vmatprep.subr.bf16.mxu0 0
      %1517 = vmatpush1.bf16.msra.mxu0 %v1489
      %1518 = vmatprep.subr.bf16.mxu0 0
      %1519 = vmatpush1.bf16.msra.mxu0 %v1488
      %1520 = vmatprep.subr.bf16.mxu0 0
      %1521 = vmatpush2.bf16.msra.mxu0 0
      %1522 = vmatprep.subr.bf16.mxu0 0
      %1523 = vmatpush2.bf16.msra.mxu0 0
      %1524 = vmatprep.subr.bf16.mxu0 0
      %1525 = vmatpush2.bf16.msra.mxu0 0
      %1526 = vmatprep.subr.bf16.mxu0 0
      %1527 = vmatpush2.bf16.msra.mxu0 0
      %1528 = vmatprep.subr.bf16.mxu0 0
      %1529 = vmatpush2.bf16.msra.mxu0 0
      %1530 = vmatprep.subr.bf16.mxu0 0
      %1531 = vmatpush2.bf16.msra.mxu0 0
      %1532 = vmatprep.subr.bf16.mxu0 0
      %1533 = vmatpush2.bf16.msra.mxu0 0
      %1534 = vmatprep.subr.bf16.mxu0 0
      %1535 = vmatpush2.bf16.msra.mxu0 0
      %1536 = vmatprep.mubr.bf16.mxu0 0
      %1537 = vmatmul.mubr.bf16.gmra.mxu0 %v870
      %v1538 = vpop.f32.mrf.mxu0
      %v1539 = vadd.f32 %v1454, %v1538
      %v1540 = vpop.f32.mrf.mxu0
      %v1541 = vpop.f32.mrf.mxu0
      %v1542 = vpop.f32.mrf.mxu0
      %1543 = vdwg.mxu0
      %v1544 = vpack.c.bf16 %v1539, %v1539
      %s1545 = scalar_lea.vmem %s780, 64
      %v1546 = vld [vmem:[%s1545] sm:$0xf]
      %v1547 = vld [vmem:[%s1545 + $0x4] sm:$0xf]
      %v1548 = vld [vmem:[%s1545 + $0x8] sm:$0xf]
      %v1549 = vld [vmem:[%s1545 + $0xc] sm:$0xf]
      %v1550 = vld [vmem:[%s1545 + $0x10] sm:$0xf]
      %v1551 = vld [vmem:[%s1545 + $0x14] sm:$0xf]
      %v1552 = vld [vmem:[%s1545 + $0x18] sm:$0xf]
      %v1553 = vld [vmem:[%s1545 + $0x1c] sm:$0xf]
      %v1554 = vld [vmem:[%s1545 + $0x20] sm:$0xf]
      %v1555 = vld [vmem:[%s1545 + $0x24] sm:$0xf]
      %v1556 = vld [vmem:[%s1545 + $0x28] sm:$0xf]
      %v1557 = vld [vmem:[%s1545 + $0x2c] sm:$0xf]
      %v1558 = vld [vmem:[%s1545 + $0x30] sm:$0xf]
      %v1559 = vld [vmem:[%s1545 + $0x34] sm:$0xf]
      %v1560 = vld [vmem:[%s1545 + $0x38] sm:$0xf]
      %v1561 = vld [vmem:[%s1545 + $0x3c] sm:$0xf]
      %s1562 = scalar_lea.vmem %s792, 1
      %v1563 = vld [vmem:[%s1562] sm:$0x1]
      %v1565 = vlaneseq
      %v1566 = vshrl.u32 %v1565, 7
      %v1567 = vsub.s32 0, %v1566
      %v1568 = vrot.slane %v1563, %v1567
      %v1586 = vunpack.c.l.b16 %v1546
      %v1587 = vunpack.c.l.b16 %v1547
      %v1588 = vunpack.c.l.b16 %v1548
      %v1589 = vunpack.c.l.b16 %v1549
      %v1590 = vunpack.c.l.b16 %v1550
      %v1591 = vunpack.c.l.b16 %v1551
      %v1592 = vunpack.c.l.b16 %v1552
      %v1593 = vunpack.c.l.b16 %v1553
      %v1594 = vunpack.c.l.b16 %v1554
      %v1595 = vunpack.c.l.b16 %v1555
      %v1596 = vunpack.c.l.b16 %v1556
      %v1597 = vunpack.c.l.b16 %v1557
      %v1598 = vunpack.c.l.b16 %v1558
      %v1599 = vunpack.c.l.b16 %v1559
      %v1600 = vunpack.c.l.b16 %v1560
      %v1601 = vunpack.c.l.b16 %v1561
      %v1602 = vpack.c.b16 %v1587, %v1586
      %v1603 = vpack.c.b16 %v1589, %v1588
      %v1604 = vpack.c.b16 %v1591, %v1590
      %v1605 = vpack.c.b16 %v1593, %v1592
      %v1606 = vpack.c.b16 %v1595, %v1594
      %v1607 = vpack.c.b16 %v1597, %v1596
      %v1608 = vpack.c.b16 %v1599, %v1598
      %v1609 = vpack.c.b16 %v1601, %v1600
      %1618 = vmatprep.subr.bf16.mxu0 0
      %1619 = vmatpush1.bf16.msra.mxu0 %v1609
      %1620 = vmatprep.subr.bf16.mxu0 0
      %1621 = vmatpush1.bf16.msra.mxu0 %v1608
      %1622 = vmatprep.subr.bf16.mxu0 0
      %1623 = vmatpush1.bf16.msra.mxu0 %v1607
      %1624 = vmatprep.subr.bf16.mxu0 0
      %1625 = vmatpush1.bf16.msra.mxu0 %v1606
      %1626 = vmatprep.subr.bf16.mxu0 0
      %1627 = vmatpush1.bf16.msra.mxu0 %v1605
      %1628 = vmatprep.subr.bf16.mxu0 0
      %1629 = vmatpush1.bf16.msra.mxu0 %v1604
      %1630 = vmatprep.subr.bf16.mxu0 0
      %1631 = vmatpush1.bf16.msra.mxu0 %v1603
      %1632 = vmatprep.subr.bf16.mxu0 0
      %1633 = vmatpush1.bf16.msra.mxu0 %v1602
      %1634 = vmatprep.subr.bf16.mxu0 0
      %1635 = vmatpush2.bf16.msra.mxu0 0
      %1636 = vmatprep.subr.bf16.mxu0 0
      %1637 = vmatpush2.bf16.msra.mxu0 0
      %1638 = vmatprep.subr.bf16.mxu0 0
      %1639 = vmatpush2.bf16.msra.mxu0 0
      %1640 = vmatprep.subr.bf16.mxu0 0
      %1641 = vmatpush2.bf16.msra.mxu0 0
      %1642 = vmatprep.subr.bf16.mxu0 0
      %1643 = vmatpush2.bf16.msra.mxu0 0
      %1644 = vmatprep.subr.bf16.mxu0 0
      %1645 = vmatpush2.bf16.msra.mxu0 0
      %1646 = vmatprep.subr.bf16.mxu0 0
      %1647 = vmatpush2.bf16.msra.mxu0 0
      %1648 = vmatprep.subr.bf16.mxu0 0
      %1649 = vmatpush2.bf16.msra.mxu0 0
      %1650 = vmatprep.mubr.bf16.mxu0 0
      %1651 = vmatmul.mubr.bf16.gmra.mxu0 %v870
      %v1652 = vpop.f32.mrf.mxu0
      %v1653 = vadd.f32 %v1568, %v1652
      %v1654 = vpop.f32.mrf.mxu0
      %v1655 = vpop.f32.mrf.mxu0
      %v1656 = vpop.f32.mrf.mxu0
      %1657 = vdwg.mxu0
      %v1658 = vpack.c.bf16 %v1653, %v1653
      %v1660 = vsel %vm1207, %v1430, 0
      %v1663 = vsel %vm1207, %v1544, 0
      %1665 = vmatprep.subr.bf16.mxu0 0
      %1666 = vmatpush1.bf16.xpose.msra.mxu0 0
      %1667 = vmatprep.subr.bf16.mxu0 0
      %1668 = vmatpush1.bf16.xpose.msra.mxu0 0
      %1669 = vmatprep.subr.bf16.mxu0 0
      %1670 = vmatpush1.bf16.xpose.msra.mxu0 0
      %1671 = vmatprep.subr.bf16.mxu0 0
      %1672 = vmatpush1.bf16.xpose.msra.mxu0 0
      %1673 = vmatprep.subr.bf16.mxu0 0
      %1674 = vmatpush1.bf16.xpose.msra.mxu0 0
      %1675 = vmatprep.subr.bf16.mxu0 0
      %1676 = vmatpush1.bf16.xpose.msra.mxu0 0
      %1677 = vmatprep.subr.bf16.mxu0 0
      %1678 = vmatpush1.bf16.xpose.msra.mxu0 0
      %1679 = vmatprep.subr.bf16.mxu0 0
      %1680 = vmatpush1.bf16.xpose.msra.mxu0 %v1663
      %1681 = vmatprep.subr.bf16.mxu0 0
      %1682 = vmatpush2.bf16.xpose.msra.mxu0 0
      %1683 = vmatprep.subr.bf16.mxu0 0
      %1684 = vmatpush2.bf16.xpose.msra.mxu0 0
      %1685 = vmatprep.subr.bf16.mxu0 0
      %1686 = vmatpush2.bf16.xpose.msra.mxu0 0
      %1687 = vmatprep.subr.bf16.mxu0 0
      %1688 = vmatpush2.bf16.xpose.msra.mxu0 0
      %1689 = vmatprep.subr.bf16.mxu0 0
      %1690 = vmatpush2.bf16.xpose.msra.mxu0 0
      %1691 = vmatprep.subr.bf16.mxu0 0
      %1692 = vmatpush2.bf16.xpose.msra.mxu0 0
      %1693 = vmatprep.subr.bf16.mxu0 0
      %1694 = vmatpush2.bf16.xpose.msra.mxu0 0
      %1695 = vmatprep.subr.bf16.mxu0 0
      %1696 = vmatpush2.bf16.xpose.msra.mxu0 0
      %1697 = vmatprep.mubr.bf16.mxu0 0
      %1698 = vmatmul.mubr.bf16.gmra.mxu0 %v1660
      %v1699 = vpop.f32.mrf.mxu0
      %v1700 = vadd.f32 %v841, %v1699
      %v1701 = vpop.f32.mrf.mxu0
      %v1702 = vpop.f32.mrf.mxu0
      %v1703 = vpop.f32.mrf.mxu0
      %1704 = vdwg.mxu0
      %v1705 = vsel %vm1254, %v1700, -inf
      %1706 = vmax.xlane.f32.xlu0 %v1705
      %v1707 = vpop.xlane.xlu0 %1706
      %v1708 = vsub.f32 %v1700, %v1707
      %v1709 = vmul.f32 %v1708, 1.442695
      %v1710 = vpow.pop %v1709
      %v1711 = vsel %vm1254, %v1710, 0.0
      %1712 = vadd.xlane.f32.xlu0 %v1711
      %v1713 = vpop.xlane.xlu0 %1712
      %v1714 = vrcp.pop %v1713
      %v1715 = vmul.f32 %v1710, %v1714
      %v1716 = vpack.c.bf16 %v1715, %v1715
      %v1718 = vsel %vm1254, %v1716, 0
      %v1721 = vsel %vm1270, %v1658, 0
      %1723 = vmatprep.subr.bf16.mxu0 0
      %1724 = vmatpush1.bf16.msra.mxu0 0
      %1725 = vmatprep.subr.bf16.mxu0 0
      %1726 = vmatpush1.bf16.msra.mxu0 0
      %1727 = vmatprep.subr.bf16.mxu0 0
      %1728 = vmatpush1.bf16.msra.mxu0 0
      %1729 = vmatprep.subr.bf16.mxu0 0
      %1730 = vmatpush1.bf16.msra.mxu0 0
      %1731 = vmatprep.subr.bf16.mxu0 0
      %1732 = vmatpush1.bf16.msra.mxu0 0
      %1733 = vmatprep.subr.bf16.mxu0 0
      %1734 = vmatpush1.bf16.msra.mxu0 0
      %1735 = vmatprep.subr.bf16.mxu0 0
      %1736 = vmatpush1.bf16.msra.mxu0 0
      %1737 = vmatprep.subr.bf16.mxu0 0
      %1738 = vmatpush1.bf16.msra.mxu0 %v1721
      %1739 = vmatprep.subr.bf16.mxu0 0
      %1740 = vmatpush2.bf16.msra.mxu0 0
      %1741 = vmatprep.subr.bf16.mxu0 0
      %1742 = vmatpush2.bf16.msra.mxu0 0
      %1743 = vmatprep.subr.bf16.mxu0 0
      %1744 = vmatpush2.bf16.msra.mxu0 0
      %1745 = vmatprep.subr.bf16.mxu0 0
      %1746 = vmatpush2.bf16.msra.mxu0 0
      %1747 = vmatprep.subr.bf16.mxu0 0
      %1748 = vmatpush2.bf16.msra.mxu0 0
      %1749 = vmatprep.subr.bf16.mxu0 0
      %1750 = vmatpush2.bf16.msra.mxu0 0
      %1751 = vmatprep.subr.bf16.mxu0 0
      %1752 = vmatpush2.bf16.msra.mxu0 0
      %1753 = vmatprep.subr.bf16.mxu0 0
      %1754 = vmatpush2.bf16.msra.mxu0 0
      %1755 = vmatprep.mubr.bf16.mxu0 0
      %1756 = vmatmul.mubr.bf16.gmra.mxu0 %v1718
      %v1757 = vpop.f32.mrf.mxu0
      %v1758 = vadd.f32 0.0, %v1757
      %v1759 = vpop.f32.mrf.mxu0
      %v1760 = vpop.f32.mrf.mxu0
      %v1761 = vpop.f32.mrf.mxu0
      %1762 = vdwg.mxu0
      %v1763 = vpack.c.bf16 %v1758, %v1758
      %v1765 = vunpack.c.l.b16 %v1763
      %v1766 = vpack.c.b16 %v1765, %v1765
      %1767 = vrot.lane.b32.xlu0 %v1766, 32
      %v1768 = vpop.permute.xlu0 %1767
      %vm1770 = vcmask 519424
      %1771 = vst.msk [vmem:[#allocation2] sm:$0xf] %vm1770, %v1768
      %s1772 = scalar_lea.vmem %s770, 128
      %v1773 = vld [vmem:[%s1772] sm:$0xf]
      %v1774 = vld [vmem:[%s1772 + $0x4] sm:$0xf]
      %v1775 = vld [vmem:[%s1772 + $0x8] sm:$0xf]
      %v1776 = vld [vmem:[%s1772 + $0xc] sm:$0xf]
      %v1777 = vld [vmem:[%s1772 + $0x10] sm:$0xf]
      %v1778 = vld [vmem:[%s1772 + $0x14] sm:$0xf]
      %v1779 = vld [vmem:[%s1772 + $0x18] sm:$0xf]
      %v1780 = vld [vmem:[%s1772 + $0x1c] sm:$0xf]
      %v1781 = vld [vmem:[%s1772 + $0x20] sm:$0xf]
      %v1782 = vld [vmem:[%s1772 + $0x24] sm:$0xf]
      %v1783 = vld [vmem:[%s1772 + $0x28] sm:$0xf]
      %v1784 = vld [vmem:[%s1772 + $0x2c] sm:$0xf]
      %v1785 = vld [vmem:[%s1772 + $0x30] sm:$0xf]
      %v1786 = vld [vmem:[%s1772 + $0x34] sm:$0xf]
      %v1787 = vld [vmem:[%s1772 + $0x38] sm:$0xf]
      %v1788 = vld [vmem:[%s1772 + $0x3c] sm:$0xf]
      %s1789 = scalar_lea.vmem %s784, 2
      %v1790 = vld [vmem:[%s1789] sm:$0x1]
      %v1792 = vlaneseq
      %v1793 = vshrl.u32 %v1792, 7
      %v1794 = vsub.s32 0, %v1793
      %v1795 = vrot.slane %v1790, %v1794
      %v1813 = vunpack.c.l.b16 %v1773
      %v1814 = vunpack.c.l.b16 %v1774
      %v1815 = vunpack.c.l.b16 %v1775
      %v1816 = vunpack.c.l.b16 %v1776
      %v1817 = vunpack.c.l.b16 %v1777
      %v1818 = vunpack.c.l.b16 %v1778
      %v1819 = vunpack.c.l.b16 %v1779
      %v1820 = vunpack.c.l.b16 %v1780
      %v1821 = vunpack.c.l.b16 %v1781
      %v1822 = vunpack.c.l.b16 %v1782
      %v1823 = vunpack.c.l.b16 %v1783
      %v1824 = vunpack.c.l.b16 %v1784
      %v1825 = vunpack.c.l.b16 %v1785
      %v1826 = vunpack.c.l.b16 %v1786
      %v1827 = vunpack.c.l.b16 %v1787
      %v1828 = vunpack.c.l.b16 %v1788
      %v1829 = vpack.c.b16 %v1814, %v1813
      %v1830 = vpack.c.b16 %v1816, %v1815
      %v1831 = vpack.c.b16 %v1818, %v1817
      %v1832 = vpack.c.b16 %v1820, %v1819
      %v1833 = vpack.c.b16 %v1822, %v1821
      %v1834 = vpack.c.b16 %v1824, %v1823
      %v1835 = vpack.c.b16 %v1826, %v1825
      %v1836 = vpack.c.b16 %v1828, %v1827
      %1845 = vmatprep.subr.bf16.mxu0 0
      %1846 = vmatpush1.bf16.msra.mxu0 %v1836
      %1847 = vmatprep.subr.bf16.mxu0 0
      %1848 = vmatpush1.bf16.msra.mxu0 %v1835
      %1849 = vmatprep.subr.bf16.mxu0 0
      %1850 = vmatpush1.bf16.msra.mxu0 %v1834
      %1851 = vmatprep.subr.bf16.mxu0 0
      %1852 = vmatpush1.bf16.msra.mxu0 %v1833
      %1853 = vmatprep.subr.bf16.mxu0 0
      %1854 = vmatpush1.bf16.msra.mxu0 %v1832
      %1855 = vmatprep.subr.bf16.mxu0 0
      %1856 = vmatpush1.bf16.msra.mxu0 %v1831
      %1857 = vmatprep.subr.bf16.mxu0 0
      %1858 = vmatpush1.bf16.msra.mxu0 %v1830
      %1859 = vmatprep.subr.bf16.mxu0 0
      %1860 = vmatpush1.bf16.msra.mxu0 %v1829
      %1861 = vmatprep.subr.bf16.mxu0 0
      %1862 = vmatpush2.bf16.msra.mxu0 0
      %1863 = vmatprep.subr.bf16.mxu0 0
      %1864 = vmatpush2.bf16.msra.mxu0 0
      %1865 = vmatprep.subr.bf16.mxu0 0
      %1866 = vmatpush2.bf16.msra.mxu0 0
      %1867 = vmatprep.subr.bf16.mxu0 0
      %1868 = vmatpush2.bf16.msra.mxu0 0
      %1869 = vmatprep.subr.bf16.mxu0 0
      %1870 = vmatpush2.bf16.msra.mxu0 0
      %1871 = vmatprep.subr.bf16.mxu0 0
      %1872 = vmatpush2.bf16.msra.mxu0 0
      %1873 = vmatprep.subr.bf16.mxu0 0
      %1874 = vmatpush2.bf16.msra.mxu0 0
      %1875 = vmatprep.subr.bf16.mxu0 0
      %1876 = vmatpush2.bf16.msra.mxu0 0
      %1877 = vmatprep.mubr.bf16.mxu0 0
      %1878 = vmatmul.mubr.bf16.gmra.mxu0 %v870
      %v1879 = vpop.f32.mrf.mxu0
      %v1880 = vadd.f32 %v1795, %v1879
      %v1881 = vpop.f32.mrf.mxu0
      %v1882 = vpop.f32.mrf.mxu0
      %v1883 = vpop.f32.mrf.mxu0
      %1884 = vdwg.mxu0
      %v1885 = vpack.c.bf16 %v1880, %v1880
      %s1886 = scalar_lea.vmem %s775, 128
      %v1887 = vld [vmem:[%s1886] sm:$0xf]
      %v1888 = vld [vmem:[%s1886 + $0x4] sm:$0xf]
      %v1889 = vld [vmem:[%s1886 + $0x8] sm:$0xf]
      %v1890 = vld [vmem:[%s1886 + $0xc] sm:$0xf]
      %v1891 = vld [vmem:[%s1886 + $0x10] sm:$0xf]
      %v1892 = vld [vmem:[%s1886 + $0x14] sm:$0xf]
      %v1893 = vld [vmem:[%s1886 + $0x18] sm:$0xf]
      %v1894 = vld [vmem:[%s1886 + $0x1c] sm:$0xf]
      %v1895 = vld [vmem:[%s1886 + $0x20] sm:$0xf]
      %v1896 = vld [vmem:[%s1886 + $0x24] sm:$0xf]
      %v1897 = vld [vmem:[%s1886 + $0x28] sm:$0xf]
      %v1898 = vld [vmem:[%s1886 + $0x2c] sm:$0xf]
      %v1899 = vld [vmem:[%s1886 + $0x30] sm:$0xf]
      %v1900 = vld [vmem:[%s1886 + $0x34] sm:$0xf]
      %v1901 = vld [vmem:[%s1886 + $0x38] sm:$0xf]
      %v1902 = vld [vmem:[%s1886 + $0x3c] sm:$0xf]
      %s1903 = scalar_lea.vmem %s788, 2
      %v1904 = vld [vmem:[%s1903] sm:$0x1]
      %v1906 = vlaneseq
      %v1907 = vshrl.u32 %v1906, 7
      %v1908 = vsub.s32 0, %v1907
      %v1909 = vrot.slane %v1904, %v1908
      %v1927 = vunpack.c.l.b16 %v1887
      %v1928 = vunpack.c.l.b16 %v1888
      %v1929 = vunpack.c.l.b16 %v1889
      %v1930 = vunpack.c.l.b16 %v1890
      %v1931 = vunpack.c.l.b16 %v1891
      %v1932 = vunpack.c.l.b16 %v1892
      %v1933 = vunpack.c.l.b16 %v1893
      %v1934 = vunpack.c.l.b16 %v1894
      %v1935 = vunpack.c.l.b16 %v1895
      %v1936 = vunpack.c.l.b16 %v1896
      %v1937 = vunpack.c.l.b16 %v1897
      %v1938 = vunpack.c.l.b16 %v1898
      %v1939 = vunpack.c.l.b16 %v1899
      %v1940 = vunpack.c.l.b16 %v1900
      %v1941 = vunpack.c.l.b16 %v1901
      %v1942 = vunpack.c.l.b16 %v1902
      %v1943 = vpack.c.b16 %v1928, %v1927
      %v1944 = vpack.c.b16 %v1930, %v1929
      %v1945 = vpack.c.b16 %v1932, %v1931
      %v1946 = vpack.c.b16 %v1934, %v1933
      %v1947 = vpack.c.b16 %v1936, %v1935
      %v1948 = vpack.c.b16 %v1938, %v1937
      %v1949 = vpack.c.b16 %v1940, %v1939
      %v1950 = vpack.c.b16 %v1942, %v1941
      %1959 = vmatprep.subr.bf16.mxu0 0
      %1960 = vmatpush1.bf16.msra.mxu0 %v1950
      %1961 = vmatprep.subr.bf16.mxu0 0
      %1962 = vmatpush1.bf16.msra.mxu0 %v1949
      %1963 = vmatprep.subr.bf16.mxu0 0
      %1964 = vmatpush1.bf16.msra.mxu0 %v1948
      %1965 = vmatprep.subr.bf16.mxu0 0
      %1966 = vmatpush1.bf16.msra.mxu0 %v1947
      %1967 = vmatprep.subr.bf16.mxu0 0
      %1968 = vmatpush1.bf16.msra.mxu0 %v1946
      %1969 = vmatprep.subr.bf16.mxu0 0
      %1970 = vmatpush1.bf16.msra.mxu0 %v1945
      %1971 = vmatprep.subr.bf16.mxu0 0
      %1972 = vmatpush1.bf16.msra.mxu0 %v1944
      %1973 = vmatprep.subr.bf16.mxu0 0
      %1974 = vmatpush1.bf16.msra.mxu0 %v1943
      %1975 = vmatprep.subr.bf16.mxu0 0
      %1976 = vmatpush2.bf16.msra.mxu0 0
      %1977 = vmatprep.subr.bf16.mxu0 0
      %1978 = vmatpush2.bf16.msra.mxu0 0
      %1979 = vmatprep.subr.bf16.mxu0 0
      %1980 = vmatpush2.bf16.msra.mxu0 0
      %1981 = vmatprep.subr.bf16.mxu0 0
      %1982 = vmatpush2.bf16.msra.mxu0 0
      %1983 = vmatprep.subr.bf16.mxu0 0
      %1984 = vmatpush2.bf16.msra.mxu0 0
      %1985 = vmatprep.subr.bf16.mxu0 0
      %1986 = vmatpush2.bf16.msra.mxu0 0
      %1987 = vmatprep.subr.bf16.mxu0 0
      %1988 = vmatpush2.bf16.msra.mxu0 0
      %1989 = vmatprep.subr.bf16.mxu0 0
      %1990 = vmatpush2.bf16.msra.mxu0 0
      %1991 = vmatprep.mubr.bf16.mxu0 0
      %1992 = vmatmul.mubr.bf16.gmra.mxu0 %v870
      %v1993 = vpop.f32.mrf.mxu0
      %v1994 = vadd.f32 %v1909, %v1993
      %v1995 = vpop.f32.mrf.mxu0
      %v1996 = vpop.f32.mrf.mxu0
      %v1997 = vpop.f32.mrf.mxu0
      %1998 = vdwg.mxu0
      %v1999 = vpack.c.bf16 %v1994, %v1994
      %s2000 = scalar_lea.vmem %s780, 128
      %v2001 = vld [vmem:[%s2000] sm:$0xf]
      %v2002 = vld [vmem:[%s2000 + $0x4] sm:$0xf]
      %v2003 = vld [vmem:[%s2000 + $0x8] sm:$0xf]
      %v2004 = vld [vmem:[%s2000 + $0xc] sm:$0xf]
      %v2005 = vld [vmem:[%s2000 + $0x10] sm:$0xf]
      %v2006 = vld [vmem:[%s2000 + $0x14] sm:$0xf]
      %v2007 = vld [vmem:[%s2000 + $0x18] sm:$0xf]
      %v2008 = vld [vmem:[%s2000 + $0x1c] sm:$0xf]
      %v2009 = vld [vmem:[%s2000 + $0x20] sm:$0xf]
      %v2010 = vld [vmem:[%s2000 + $0x24] sm:$0xf]
      %v2011 = vld [vmem:[%s2000 + $0x28] sm:$0xf]
      %v2012 = vld [vmem:[%s2000 + $0x2c] sm:$0xf]
      %v2013 = vld [vmem:[%s2000 + $0x30] sm:$0xf]
      %v2014 = vld [vmem:[%s2000 + $0x34] sm:$0xf]
      %v2015 = vld [vmem:[%s2000 + $0x38] sm:$0xf]
      %v2016 = vld [vmem:[%s2000 + $0x3c] sm:$0xf]
      %s2017 = scalar_lea.vmem %s792, 2
      %v2018 = vld [vmem:[%s2017] sm:$0x1]
      %v2020 = vlaneseq
      %v2021 = vshrl.u32 %v2020, 7
      %v2022 = vsub.s32 0, %v2021
      %v2023 = vrot.slane %v2018, %v2022
      %v2041 = vunpack.c.l.b16 %v2001
      %v2042 = vunpack.c.l.b16 %v2002
      %v2043 = vunpack.c.l.b16 %v2003
      %v2044 = vunpack.c.l.b16 %v2004
      %v2045 = vunpack.c.l.b16 %v2005
      %v2046 = vunpack.c.l.b16 %v2006
      %v2047 = vunpack.c.l.b16 %v2007
      %v2048 = vunpack.c.l.b16 %v2008
      %v2049 = vunpack.c.l.b16 %v2009
      %v2050 = vunpack.c.l.b16 %v2010
      %v2051 = vunpack.c.l.b16 %v2011
      %v2052 = vunpack.c.l.b16 %v2012
      %v2053 = vunpack.c.l.b16 %v2013
      %v2054 = vunpack.c.l.b16 %v2014
      %v2055 = vunpack.c.l.b16 %v2015
      %v2056 = vunpack.c.l.b16 %v2016
      %v2057 = vpack.c.b16 %v2042, %v2041
      %v2058 = vpack.c.b16 %v2044, %v2043
      %v2059 = vpack.c.b16 %v2046, %v2045
      %v2060 = vpack.c.b16 %v2048, %v2047
      %v2061 = vpack.c.b16 %v2050, %v2049
      %v2062 = vpack.c.b16 %v2052, %v2051
      %v2063 = vpack.c.b16 %v2054, %v2053
      %v2064 = vpack.c.b16 %v2056, %v2055
      %2073 = vmatprep.subr.bf16.mxu0 0
      %2074 = vmatpush1.bf16.msra.mxu0 %v2064
      %2075 = vmatprep.subr.bf16.mxu0 0
      %2076 = vmatpush1.bf16.msra.mxu0 %v2063
      %2077 = vmatprep.subr.bf16.mxu0 0
      %2078 = vmatpush1.bf16.msra.mxu0 %v2062
      %2079 = vmatprep.subr.bf16.mxu0 0
      %2080 = vmatpush1.bf16.msra.mxu0 %v2061
      %2081 = vmatprep.subr.bf16.mxu0 0
      %2082 = vmatpush1.bf16.msra.mxu0 %v2060
      %2083 = vmatprep.subr.bf16.mxu0 0
      %2084 = vmatpush1.bf16.msra.mxu0 %v2059
      %2085 = vmatprep.subr.bf16.mxu0 0
      %2086 = vmatpush1.bf16.msra.mxu0 %v2058
      %2087 = vmatprep.subr.bf16.mxu0 0
      %2088 = vmatpush1.bf16.msra.mxu0 %v2057
      %2089 = vmatprep.subr.bf16.mxu0 0
      %2090 = vmatpush2.bf16.msra.mxu0 0
      %2091 = vmatprep.subr.bf16.mxu0 0
      %2092 = vmatpush2.bf16.msra.mxu0 0
      %2093 = vmatprep.subr.bf16.mxu0 0
      %2094 = vmatpush2.bf16.msra.mxu0 0
      %2095 = vmatprep.subr.bf16.mxu0 0
      %2096 = vmatpush2.bf16.msra.mxu0 0
      %2097 = vmatprep.subr.bf16.mxu0 0
      %2098 = vmatpush2.bf16.msra.mxu0 0
      %2099 = vmatprep.subr.bf16.mxu0 0
      %2100 = vmatpush2.bf16.msra.mxu0 0
      %2101 = vmatprep.subr.bf16.mxu0 0
      %2102 = vmatpush2.bf16.msra.mxu0 0
      %2103 = vmatprep.subr.bf16.mxu0 0
      %2104 = vmatpush2.bf16.msra.mxu0 0
      %2105 = vmatprep.mubr.bf16.mxu0 0
      %2106 = vmatmul.mubr.bf16.gmra.mxu0 %v870
      %v2107 = vpop.f32.mrf.mxu0
      %v2108 = vadd.f32 %v2023, %v2107
      %v2109 = vpop.f32.mrf.mxu0
      %v2110 = vpop.f32.mrf.mxu0
      %v2111 = vpop.f32.mrf.mxu0
      %2112 = vdwg.mxu0
      %v2113 = vpack.c.bf16 %v2108, %v2108
      %v2115 = vsel %vm1207, %v1885, 0
      %v2118 = vsel %vm1207, %v1999, 0
      %2120 = vmatprep.subr.bf16.mxu0 0
      %2121 = vmatpush1.bf16.xpose.msra.mxu0 0
      %2122 = vmatprep.subr.bf16.mxu0 0
      %2123 = vmatpush1.bf16.xpose.msra.mxu0 0
      %2124 = vmatprep.subr.bf16.mxu0 0
      %2125 = vmatpush1.bf16.xpose.msra.mxu0 0
      %2126 = vmatprep.subr.bf16.mxu0 0
      %2127 = vmatpush1.bf16.xpose.msra.mxu0 0
      %2128 = vmatprep.subr.bf16.mxu0 0
      %2129 = vmatpush1.bf16.xpose.msra.mxu0 0
      %2130 = vmatprep.subr.bf16.mxu0 0
      %2131 = vmatpush1.bf16.xpose.msra.mxu0 0
      %2132 = vmatprep.subr.bf16.mxu0 0
      %2133 = vmatpush1.bf16.xpose.msra.mxu0 0
      %2134 = vmatprep.subr.bf16.mxu0 0
      %2135 = vmatpush1.bf16.xpose.msra.mxu0 %v2118
      %2136 = vmatprep.subr.bf16.mxu0 0
      %2137 = vmatpush2.bf16.xpose.msra.mxu0 0
      %2138 = vmatprep.subr.bf16.mxu0 0
      %2139 = vmatpush2.bf16.xpose.msra.mxu0 0
      %2140 = vmatprep.subr.bf16.mxu0 0
      %2141 = vmatpush2.bf16.xpose.msra.mxu0 0
      %2142 = vmatprep.subr.bf16.mxu0 0
      %2143 = vmatpush2.bf16.xpose.msra.mxu0 0
      %2144 = vmatprep.subr.bf16.mxu0 0
      %2145 = vmatpush2.bf16.xpose.msra.mxu0 0
      %2146 = vmatprep.subr.bf16.mxu0 0
      %2147 = vmatpush2.bf16.xpose.msra.mxu0 0
      %2148 = vmatprep.subr.bf16.mxu0 0
      %2149 = vmatpush2.bf16.xpose.msra.mxu0 0
      %2150 = vmatprep.subr.bf16.mxu0 0
      %2151 = vmatpush2.bf16.xpose.msra.mxu0 0
      %2152 = vmatprep.mubr.bf16.mxu0 0
      %2153 = vmatmul.mubr.bf16.gmra.mxu0 %v2115
      %v2154 = vpop.f32.mrf.mxu0
      %v2155 = vadd.f32 %v841, %v2154
      %v2156 = vpop.f32.mrf.mxu0
      %v2157 = vpop.f32.mrf.mxu0
      %v2158 = vpop.f32.mrf.mxu0
      %2159 = vdwg.mxu0
      %v2160 = vsel %vm1254, %v2155, -inf
      %2161 = vmax.xlane.f32.xlu0 %v2160
      %v2162 = vpop.xlane.xlu0 %2161
      %v2163 = vsub.f32 %v2155, %v2162
      %v2164 = vmul.f32 %v2163, 1.442695
      %v2165 = vpow.pop %v2164
      %v2166 = vsel %vm1254, %v2165, 0.0
      %2167 = vadd.xlane.f32.xlu0 %v2166
      %v2168 = vpop.xlane.xlu0 %2167
      %v2169 = vrcp.pop %v2168
      %v2170 = vmul.f32 %v2165, %v2169
      %v2171 = vpack.c.bf16 %v2170, %v2170
      %v2173 = vsel %vm1254, %v2171, 0
      %v2176 = vsel %vm1270, %v2113, 0
      %2178 = vmatprep.subr.bf16.mxu0 0
      %2179 = vmatpush1.bf16.msra.mxu0 0
      %2180 = vmatprep.subr.bf16.mxu0 0
      %2181 = vmatpush1.bf16.msra.mxu0 0
      %2182 = vmatprep.subr.bf16.mxu0 0
      %2183 = vmatpush1.bf16.msra.mxu0 0
      %2184 = vmatprep.subr.bf16.mxu0 0
      %2185 = vmatpush1.bf16.msra.mxu0 0
      %2186 = vmatprep.subr.bf16.mxu0 0
      %2187 = vmatpush1.bf16.msra.mxu0 0
      %2188 = vmatprep.subr.bf16.mxu0 0
      %2189 = vmatpush1.bf16.msra.mxu0 0
      %2190 = vmatprep.subr.bf16.mxu0 0
      %2191 = vmatpush1.bf16.msra.mxu0 0
      %2192 = vmatprep.subr.bf16.mxu0 0
      %2193 = vmatpush1.bf16.msra.mxu0 %v2176
      %2194 = vmatprep.subr.bf16.mxu0 0
      %2195 = vmatpush2.bf16.msra.mxu0 0
      %2196 = vmatprep.subr.bf16.mxu0 0
      %2197 = vmatpush2.bf16.msra.mxu0 0
      %2198 = vmatprep.subr.bf16.mxu0 0
      %2199 = vmatpush2.bf16.msra.mxu0 0
      %2200 = vmatprep.subr.bf16.mxu0 0
      %2201 = vmatpush2.bf16.msra.mxu0 0
      %2202 = vmatprep.subr.bf16.mxu0 0
      %2203 = vmatpush2.bf16.msra.mxu0 0
      %2204 = vmatprep.subr.bf16.mxu0 0
      %2205 = vmatpush2.bf16.msra.mxu0 0
      %2206 = vmatprep.subr.bf16.mxu0 0
      %2207 = vmatpush2.bf16.msra.mxu0 0
      %2208 = vmatprep.subr.bf16.mxu0 0
      %2209 = vmatpush2.bf16.msra.mxu0 0
      %2210 = vmatprep.mubr.bf16.mxu0 0
      %2211 = vmatmul.mubr.bf16.gmra.mxu0 %v2173
      %v2212 = vpop.f32.mrf.mxu0
      %v2213 = vadd.f32 0.0, %v2212
      %v2214 = vpop.f32.mrf.mxu0
      %v2215 = vpop.f32.mrf.mxu0
      %v2216 = vpop.f32.mrf.mxu0
      %2217 = vdwg.mxu0
      %v2218 = vpack.c.bf16 %v2213, %v2213
      %v2220 = vunpack.c.l.b16 %v2218
      %v2221 = vpack.c.b16 %v2220, %v2220
      %2222 = vrot.lane.b32.xlu0 %v2221, 64
      %v2223 = vpop.permute.xlu0 %2222
      %vm2225 = vcmask 781824
      %2226 = vst.msk [vmem:[#allocation2] sm:$0xf] %vm2225, %v2223
      %s2227 = scalar_lea.vmem %s770, 192
      %v2228 = vld [vmem:[%s2227] sm:$0xf]
      %v2229 = vld [vmem:[%s2227 + $0x4] sm:$0xf]
      %v2230 = vld [vmem:[%s2227 + $0x8] sm:$0xf]
      %v2231 = vld [vmem:[%s2227 + $0xc] sm:$0xf]
      %v2232 = vld [vmem:[%s2227 + $0x10] sm:$0xf]
      %v2233 = vld [vmem:[%s2227 + $0x14] sm:$0xf]
      %v2234 = vld [vmem:[%s2227 + $0x18] sm:$0xf]
      %v2235 = vld [vmem:[%s2227 + $0x1c] sm:$0xf]
      %v2236 = vld [vmem:[%s2227 + $0x20] sm:$0xf]
      %v2237 = vld [vmem:[%s2227 + $0x24] sm:$0xf]
      %v2238 = vld [vmem:[%s2227 + $0x28] sm:$0xf]
      %v2239 = vld [vmem:[%s2227 + $0x2c] sm:$0xf]
      %v2240 = vld [vmem:[%s2227 + $0x30] sm:$0xf]
      %v2241 = vld [vmem:[%s2227 + $0x34] sm:$0xf]
      %v2242 = vld [vmem:[%s2227 + $0x38] sm:$0xf]
      %v2243 = vld [vmem:[%s2227 + $0x3c] sm:$0xf]
      %s2244 = scalar_lea.vmem %s784, 3
      %v2245 = vld [vmem:[%s2244] sm:$0x1]
      %v2247 = vlaneseq
      %v2248 = vshrl.u32 %v2247, 7
      %v2249 = vsub.s32 0, %v2248
      %v2250 = vrot.slane %v2245, %v2249
      %v2268 = vunpack.c.l.b16 %v2228
      %v2269 = vunpack.c.l.b16 %v2229
      %v2270 = vunpack.c.l.b16 %v2230
      %v2271 = vunpack.c.l.b16 %v2231
      %v2272 = vunpack.c.l.b16 %v2232
      %v2273 = vunpack.c.l.b16 %v2233
      %v2274 = vunpack.c.l.b16 %v2234
      %v2275 = vunpack.c.l.b16 %v2235
      %v2276 = vunpack.c.l.b16 %v2236
      %v2277 = vunpack.c.l.b16 %v2237
      %v2278 = vunpack.c.l.b16 %v2238
      %v2279 = vunpack.c.l.b16 %v2239
      %v2280 = vunpack.c.l.b16 %v2240
      %v2281 = vunpack.c.l.b16 %v2241
      %v2282 = vunpack.c.l.b16 %v2242
      %v2283 = vunpack.c.l.b16 %v2243
      %v2284 = vpack.c.b16 %v2269, %v2268
      %v2285 = vpack.c.b16 %v2271, %v2270
      %v2286 = vpack.c.b16 %v2273, %v2272
      %v2287 = vpack.c.b16 %v2275, %v2274
      %v2288 = vpack.c.b16 %v2277, %v2276
      %v2289 = vpack.c.b16 %v2279, %v2278
      %v2290 = vpack.c.b16 %v2281, %v2280
      %v2291 = vpack.c.b16 %v2283, %v2282
      %2300 = vmatprep.subr.bf16.mxu0 0
      %2301 = vmatpush1.bf16.msra.mxu0 %v2291
      %2302 = vmatprep.subr.bf16.mxu0 0
      %2303 = vmatpush1.bf16.msra.mxu0 %v2290
      %2304 = vmatprep.subr.bf16.mxu0 0
      %2305 = vmatpush1.bf16.msra.mxu0 %v2289
      %2306 = vmatprep.subr.bf16.mxu0 0
      %2307 = vmatpush1.bf16.msra.mxu0 %v2288
      %2308 = vmatprep.subr.bf16.mxu0 0
      %2309 = vmatpush1.bf16.msra.mxu0 %v2287
      %2310 = vmatprep.subr.bf16.mxu0 0
      %2311 = vmatpush1.bf16.msra.mxu0 %v2286
      %2312 = vmatprep.subr.bf16.mxu0 0
      %2313 = vmatpush1.bf16.msra.mxu0 %v2285
      %2314 = vmatprep.subr.bf16.mxu0 0
      %2315 = vmatpush1.bf16.msra.mxu0 %v2284
      %2316 = vmatprep.subr.bf16.mxu0 0
      %2317 = vmatpush2.bf16.msra.mxu0 0
      %2318 = vmatprep.subr.bf16.mxu0 0
      %2319 = vmatpush2.bf16.msra.mxu0 0
      %2320 = vmatprep.subr.bf16.mxu0 0
      %2321 = vmatpush2.bf16.msra.mxu0 0
      %2322 = vmatprep.subr.bf16.mxu0 0
      %2323 = vmatpush2.bf16.msra.mxu0 0
      %2324 = vmatprep.subr.bf16.mxu0 0
      %2325 = vmatpush2.bf16.msra.mxu0 0
      %2326 = vmatprep.subr.bf16.mxu0 0
      %2327 = vmatpush2.bf16.msra.mxu0 0
      %2328 = vmatprep.subr.bf16.mxu0 0
      %2329 = vmatpush2.bf16.msra.mxu0 0
      %2330 = vmatprep.subr.bf16.mxu0 0
      %2331 = vmatpush2.bf16.msra.mxu0 0
      %2332 = vmatprep.mubr.bf16.mxu0 0
      %2333 = vmatmul.mubr.bf16.gmra.mxu0 %v870
      %v2334 = vpop.f32.mrf.mxu0
      %v2335 = vadd.f32 %v2250, %v2334
      %v2336 = vpop.f32.mrf.mxu0
      %v2337 = vpop.f32.mrf.mxu0
      %v2338 = vpop.f32.mrf.mxu0
      %2339 = vdwg.mxu0
      %v2340 = vpack.c.bf16 %v2335, %v2335
      %s2341 = scalar_lea.vmem %s775, 192
      %v2342 = vld [vmem:[%s2341] sm:$0xf]
      %v2343 = vld [vmem:[%s2341 + $0x4] sm:$0xf]
      %v2344 = vld [vmem:[%s2341 + $0x8] sm:$0xf]
      %v2345 = vld [vmem:[%s2341 + $0xc] sm:$0xf]
      %v2346 = vld [vmem:[%s2341 + $0x10] sm:$0xf]
      %v2347 = vld [vmem:[%s2341 + $0x14] sm:$0xf]
      %v2348 = vld [vmem:[%s2341 + $0x18] sm:$0xf]
      %v2349 = vld [vmem:[%s2341 + $0x1c] sm:$0xf]
      %v2350 = vld [vmem:[%s2341 + $0x20] sm:$0xf]
      %v2351 = vld [vmem:[%s2341 + $0x24] sm:$0xf]
      %v2352 = vld [vmem:[%s2341 + $0x28] sm:$0xf]
      %v2353 = vld [vmem:[%s2341 + $0x2c] sm:$0xf]
      %v2354 = vld [vmem:[%s2341 + $0x30] sm:$0xf]
      %v2355 = vld [vmem:[%s2341 + $0x34] sm:$0xf]
      %v2356 = vld [vmem:[%s2341 + $0x38] sm:$0xf]
      %v2357 = vld [vmem:[%s2341 + $0x3c] sm:$0xf]
      %s2358 = scalar_lea.vmem %s788, 3
      %v2359 = vld [vmem:[%s2358] sm:$0x1]
      %v2361 = vlaneseq
      %v2362 = vshrl.u32 %v2361, 7
      %v2363 = vsub.s32 0, %v2362
      %v2364 = vrot.slane %v2359, %v2363
      %v2382 = vunpack.c.l.b16 %v2342
      %v2383 = vunpack.c.l.b16 %v2343
      %v2384 = vunpack.c.l.b16 %v2344
      %v2385 = vunpack.c.l.b16 %v2345
      %v2386 = vunpack.c.l.b16 %v2346
      %v2387 = vunpack.c.l.b16 %v2347
      %v2388 = vunpack.c.l.b16 %v2348
      %v2389 = vunpack.c.l.b16 %v2349
      %v2390 = vunpack.c.l.b16 %v2350
      %v2391 = vunpack.c.l.b16 %v2351
      %v2392 = vunpack.c.l.b16 %v2352
      %v2393 = vunpack.c.l.b16 %v2353
      %v2394 = vunpack.c.l.b16 %v2354
      %v2395 = vunpack.c.l.b16 %v2355
      %v2396 = vunpack.c.l.b16 %v2356
      %v2397 = vunpack.c.l.b16 %v2357
      %v2398 = vpack.c.b16 %v2383, %v2382
      %v2399 = vpack.c.b16 %v2385, %v2384
      %v2400 = vpack.c.b16 %v2387, %v2386
      %v2401 = vpack.c.b16 %v2389, %v2388
      %v2402 = vpack.c.b16 %v2391, %v2390
      %v2403 = vpack.c.b16 %v2393, %v2392
      %v2404 = vpack.c.b16 %v2395, %v2394
      %v2405 = vpack.c.b16 %v2397, %v2396
      %2414 = vmatprep.subr.bf16.mxu0 0
      %2415 = vmatpush1.bf16.msra.mxu0 %v2405
      %2416 = vmatprep.subr.bf16.mxu0 0
      %2417 = vmatpush1.bf16.msra.mxu0 %v2404
      %2418 = vmatprep.subr.bf16.mxu0 0
      %2419 = vmatpush1.bf16.msra.mxu0 %v2403
      %2420 = vmatprep.subr.bf16.mxu0 0
      %2421 = vmatpush1.bf16.msra.mxu0 %v2402
      %2422 = vmatprep.subr.bf16.mxu0 0
      %2423 = vmatpush1.bf16.msra.mxu0 %v2401
      %2424 = vmatprep.subr.bf16.mxu0 0
      %2425 = vmatpush1.bf16.msra.mxu0 %v2400
      %2426 = vmatprep.subr.bf16.mxu0 0
      %2427 = vmatpush1.bf16.msra.mxu0 %v2399
      %2428 = vmatprep.subr.bf16.mxu0 0
      %2429 = vmatpush1.bf16.msra.mxu0 %v2398
      %2430 = vmatprep.subr.bf16.mxu0 0
      %2431 = vmatpush2.bf16.msra.mxu0 0
      %2432 = vmatprep.subr.bf16.mxu0 0
      %2433 = vmatpush2.bf16.msra.mxu0 0
      %2434 = vmatprep.subr.bf16.mxu0 0
      %2435 = vmatpush2.bf16.msra.mxu0 0
      %2436 = vmatprep.subr.bf16.mxu0 0
      %2437 = vmatpush2.bf16.msra.mxu0 0
      %2438 = vmatprep.subr.bf16.mxu0 0
      %2439 = vmatpush2.bf16.msra.mxu0 0
      %2440 = vmatprep.subr.bf16.mxu0 0
      %2441 = vmatpush2.bf16.msra.mxu0 0
      %2442 = vmatprep.subr.bf16.mxu0 0
      %2443 = vmatpush2.bf16.msra.mxu0 0
      %2444 = vmatprep.subr.bf16.mxu0 0
      %2445 = vmatpush2.bf16.msra.mxu0 0
      %2446 = vmatprep.mubr.bf16.mxu0 0
      %2447 = vmatmul.mubr.bf16.gmra.mxu0 %v870
      %v2448 = vpop.f32.mrf.mxu0
      %v2449 = vadd.f32 %v2364, %v2448
      %v2450 = vpop.f32.mrf.mxu0
      %v2451 = vpop.f32.mrf.mxu0
      %v2452 = vpop.f32.mrf.mxu0
      %2453 = vdwg.mxu0
      %v2454 = vpack.c.bf16 %v2449, %v2449
      %s2455 = scalar_lea.vmem %s780, 192
      %v2456 = vld [vmem:[%s2455] sm:$0xf]
      %v2457 = vld [vmem:[%s2455 + $0x4] sm:$0xf]
      %v2458 = vld [vmem:[%s2455 + $0x8] sm:$0xf]
      %v2459 = vld [vmem:[%s2455 + $0xc] sm:$0xf]
      %v2460 = vld [vmem:[%s2455 + $0x10] sm:$0xf]
      %v2461 = vld [vmem:[%s2455 + $0x14] sm:$0xf]
      %v2462 = vld [vmem:[%s2455 + $0x18] sm:$0xf]
      %v2463 = vld [vmem:[%s2455 + $0x1c] sm:$0xf]
      %v2464 = vld [vmem:[%s2455 + $0x20] sm:$0xf]
      %v2465 = vld [vmem:[%s2455 + $0x24] sm:$0xf]
      %v2466 = vld [vmem:[%s2455 + $0x28] sm:$0xf]
      %v2467 = vld [vmem:[%s2455 + $0x2c] sm:$0xf]
      %v2468 = vld [vmem:[%s2455 + $0x30] sm:$0xf]
      %v2469 = vld [vmem:[%s2455 + $0x34] sm:$0xf]
      %v2470 = vld [vmem:[%s2455 + $0x38] sm:$0xf]
      %v2471 = vld [vmem:[%s2455 + $0x3c] sm:$0xf]
      %s2472 = scalar_lea.vmem %s792, 3
      %v2473 = vld [vmem:[%s2472] sm:$0x1]
      %v2475 = vlaneseq
      %v2476 = vshrl.u32 %v2475, 7
      %v2477 = vsub.s32 0, %v2476
      %v2478 = vrot.slane %v2473, %v2477
      %v2496 = vunpack.c.l.b16 %v2456
      %v2497 = vunpack.c.l.b16 %v2457
      %v2498 = vunpack.c.l.b16 %v2458
      %v2499 = vunpack.c.l.b16 %v2459
      %v2500 = vunpack.c.l.b16 %v2460
      %v2501 = vunpack.c.l.b16 %v2461
      %v2502 = vunpack.c.l.b16 %v2462
      %v2503 = vunpack.c.l.b16 %v2463
      %v2504 = vunpack.c.l.b16 %v2464
      %v2505 = vunpack.c.l.b16 %v2465
      %v2506 = vunpack.c.l.b16 %v2466
      %v2507 = vunpack.c.l.b16 %v2467
      %v2508 = vunpack.c.l.b16 %v2468
      %v2509 = vunpack.c.l.b16 %v2469
      %v2510 = vunpack.c.l.b16 %v2470
      %v2511 = vunpack.c.l.b16 %v2471
      %v2512 = vpack.c.b16 %v2497, %v2496
      %v2513 = vpack.c.b16 %v2499, %v2498
      %v2514 = vpack.c.b16 %v2501, %v2500
      %v2515 = vpack.c.b16 %v2503, %v2502
      %v2516 = vpack.c.b16 %v2505, %v2504
      %v2517 = vpack.c.b16 %v2507, %v2506
      %v2518 = vpack.c.b16 %v2509, %v2508
      %v2519 = vpack.c.b16 %v2511, %v2510
      %2528 = vmatprep.subr.bf16.mxu0 0
      %2529 = vmatpush1.bf16.msra.mxu0 %v2519
      %2530 = vmatprep.subr.bf16.mxu0 0
      %2531 = vmatpush1.bf16.msra.mxu0 %v2518
      %2532 = vmatprep.subr.bf16.mxu0 0
      %2533 = vmatpush1.bf16.msra.mxu0 %v2517
      %2534 = vmatprep.subr.bf16.mxu0 0
      %2535 = vmatpush1.bf16.msra.mxu0 %v2516
      %2536 = vmatprep.subr.bf16.mxu0 0
      %2537 = vmatpush1.bf16.msra.mxu0 %v2515
      %2538 = vmatprep.subr.bf16.mxu0 0
      %2539 = vmatpush1.bf16.msra.mxu0 %v2514
      %2540 = vmatprep.subr.bf16.mxu0 0
      %2541 = vmatpush1.bf16.msra.mxu0 %v2513
      %2542 = vmatprep.subr.bf16.mxu0 0
      %2543 = vmatpush1.bf16.msra.mxu0 %v2512
      %2544 = vmatprep.subr.bf16.mxu0 0
      %2545 = vmatpush2.bf16.msra.mxu0 0
      %2546 = vmatprep.subr.bf16.mxu0 0
      %2547 = vmatpush2.bf16.msra.mxu0 0
      %2548 = vmatprep.subr.bf16.mxu0 0
      %2549 = vmatpush2.bf16.msra.mxu0 0
      %2550 = vmatprep.subr.bf16.mxu0 0
      %2551 = vmatpush2.bf16.msra.mxu0 0
      %2552 = vmatprep.subr.bf16.mxu0 0
      %2553 = vmatpush2.bf16.msra.mxu0 0
      %2554 = vmatprep.subr.bf16.mxu0 0
      %2555 = vmatpush2.bf16.msra.mxu0 0
      %2556 = vmatprep.subr.bf16.mxu0 0
      %2557 = vmatpush2.bf16.msra.mxu0 0
      %2558 = vmatprep.subr.bf16.mxu0 0
      %2559 = vmatpush2.bf16.msra.mxu0 0
      %2560 = vmatprep.mubr.bf16.mxu0 0
      %2561 = vmatmul.mubr.bf16.gmra.mxu0 %v870
      %v2562 = vpop.f32.mrf.mxu0
      %v2563 = vadd.f32 %v2478, %v2562
      %v2564 = vpop.f32.mrf.mxu0
      %v2565 = vpop.f32.mrf.mxu0
      %v2566 = vpop.f32.mrf.mxu0
      %2567 = vdwg.mxu0
      %v2568 = vpack.c.bf16 %v2563, %v2563
      %v2570 = vsel %vm1207, %v2340, 0
      %v2573 = vsel %vm1207, %v2454, 0
      %2575 = vmatprep.subr.bf16.mxu0 0
      %2576 = vmatpush1.bf16.xpose.msra.mxu0 0
      %2577 = vmatprep.subr.bf16.mxu0 0
      %2578 = vmatpush1.bf16.xpose.msra.mxu0 0
      %2579 = vmatprep.subr.bf16.mxu0 0
      %2580 = vmatpush1.bf16.xpose.msra.mxu0 0
      %2581 = vmatprep.subr.bf16.mxu0 0
      %2582 = vmatpush1.bf16.xpose.msra.mxu0 0
      %2583 = vmatprep.subr.bf16.mxu0 0
      %2584 = vmatpush1.bf16.xpose.msra.mxu0 0
      %2585 = vmatprep.subr.bf16.mxu0 0
      %2586 = vmatpush1.bf16.xpose.msra.mxu0 0
      %2587 = vmatprep.subr.bf16.mxu0 0
      %2588 = vmatpush1.bf16.xpose.msra.mxu0 0
      %2589 = vmatprep.subr.bf16.mxu0 0
      %2590 = vmatpush1.bf16.xpose.msra.mxu0 %v2573
      %2591 = vmatprep.subr.bf16.mxu0 0
      %2592 = vmatpush2.bf16.xpose.msra.mxu0 0
      %2593 = vmatprep.subr.bf16.mxu0 0
      %2594 = vmatpush2.bf16.xpose.msra.mxu0 0
      %2595 = vmatprep.subr.bf16.mxu0 0
      %2596 = vmatpush2.bf16.xpose.msra.mxu0 0
      %2597 = vmatprep.subr.bf16.mxu0 0
      %2598 = vmatpush2.bf16.xpose.msra.mxu0 0
      %2599 = vmatprep.subr.bf16.mxu0 0
      %2600 = vmatpush2.bf16.xpose.msra.mxu0 0
      %2601 = vmatprep.subr.bf16.mxu0 0
      %2602 = vmatpush2.bf16.xpose.msra.mxu0 0
      %2603 = vmatprep.subr.bf16.mxu0 0
      %2604 = vmatpush2.bf16.xpose.msra.mxu0 0
      %2605 = vmatprep.subr.bf16.mxu0 0
      %2606 = vmatpush2.bf16.xpose.msra.mxu0 0
      %2607 = vmatprep.mubr.bf16.mxu0 0
      %2608 = vmatmul.mubr.bf16.gmra.mxu0 %v2570
      %v2609 = vpop.f32.mrf.mxu0
      %v2610 = vadd.f32 %v841, %v2609
      %v2611 = vpop.f32.mrf.mxu0
      %v2612 = vpop.f32.mrf.mxu0
      %v2613 = vpop.f32.mrf.mxu0
      %2614 = vdwg.mxu0
      %v2615 = vsel %vm1254, %v2610, -inf
      %2616 = vmax.xlane.f32.xlu0 %v2615
      %v2617 = vpop.xlane.xlu0 %2616
      %v2618 = vsub.f32 %v2610, %v2617
      %v2619 = vmul.f32 %v2618, 1.442695
      %v2620 = vpow.pop %v2619
      %v2621 = vsel %vm1254, %v2620, 0.0
      %2622 = vadd.xlane.f32.xlu0 %v2621
      %v2623 = vpop.xlane.xlu0 %2622
      %v2624 = vrcp.pop %v2623
      %v2625 = vmul.f32 %v2620, %v2624
      %v2626 = vpack.c.bf16 %v2625, %v2625
      %v2628 = vsel %vm1254, %v2626, 0
      %v2631 = vsel %vm1270, %v2568, 0
      %2633 = vmatprep.subr.bf16.mxu0 0
      %2634 = vmatpush1.bf16.msra.mxu0 0
      %2635 = vmatprep.subr.bf16.mxu0 0
      %2636 = vmatpush1.bf16.msra.mxu0 0
      %2637 = vmatprep.subr.bf16.mxu0 0
      %2638 = vmatpush1.bf16.msra.mxu0 0
      %2639 = vmatprep.subr.bf16.mxu0 0
      %2640 = vmatpush1.bf16.msra.mxu0 0
      %2641 = vmatprep.subr.bf16.mxu0 0
      %2642 = vmatpush1.bf16.msra.mxu0 0
      %2643 = vmatprep.subr.bf16.mxu0 0
      %2644 = vmatpush1.bf16.msra.mxu0 0
      %2645 = vmatprep.subr.bf16.mxu0 0
      %2646 = vmatpush1.bf16.msra.mxu0 0
      %2647 = vmatprep.subr.bf16.mxu0 0
      %2648 = vmatpush1.bf16.msra.mxu0 %v2631
      %2649 = vmatprep.subr.bf16.mxu0 0
      %2650 = vmatpush2.bf16.msra.mxu0 0
      %2651 = vmatprep.subr.bf16.mxu0 0
      %2652 = vmatpush2.bf16.msra.mxu0 0
      %2653 = vmatprep.subr.bf16.mxu0 0
      %2654 = vmatpush2.bf16.msra.mxu0 0
      %2655 = vmatprep.subr.bf16.mxu0 0
      %2656 = vmatpush2.bf16.msra.mxu0 0
      %2657 = vmatprep.subr.bf16.mxu0 0
      %2658 = vmatpush2.bf16.msra.mxu0 0
      %2659 = vmatprep.subr.bf16.mxu0 0
      %2660 = vmatpush2.bf16.msra.mxu0 0
      %2661 = vmatprep.subr.bf16.mxu0 0
      %2662 = vmatpush2.bf16.msra.mxu0 0
      %2663 = vmatprep.subr.bf16.mxu0 0
      %2664 = vmatpush2.bf16.msra.mxu0 0
      %2665 = vmatprep.mubr.bf16.mxu0 0
      %2666 = vmatmul.mubr.bf16.gmra.mxu0 %v2628
      %v2667 = vpop.f32.mrf.mxu0
      %v2668 = vadd.f32 0.0, %v2667
      %v2669 = vpop.f32.mrf.mxu0
      %v2670 = vpop.f32.mrf.mxu0
      %v2671 = vpop.f32.mrf.mxu0
      %2672 = vdwg.mxu0
      %v2673 = vpack.c.bf16 %v2668, %v2668
      %v2675 = vunpack.c.l.b16 %v2673
      %v2676 = vpack.c.b16 %v2675, %v2675
      %2677 = vrot.lane.b32.xlu0 %v2676, 96
      %v2678 = vpop.permute.xlu0 %2677
      %vm2680 = vcmask 1044224
      %2681 = vst.msk [vmem:[#allocation2] sm:$0xf] %vm2680, %v2678
      %v2682 = vld [vmem:[#allocation2] sm:$0xf]
      %v2683 = vld [vmem:[%s797] sm:$0xf]
      %v2684 = vld [vmem:[%s797 + $0x4] sm:$0xf]
      %v2685 = vld [vmem:[%s797 + $0x8] sm:$0xf]
      %v2686 = vld [vmem:[%s797 + $0xc] sm:$0xf]
      %v2687 = vld [vmem:[%s797 + $0x10] sm:$0xf]
      %v2688 = vld [vmem:[%s797 + $0x14] sm:$0xf]
      %v2689 = vld [vmem:[%s797 + $0x18] sm:$0xf]
      %v2690 = vld [vmem:[%s797 + $0x1c] sm:$0xf]
      %v2691 = vld [vmem:[%s797 + $0x20] sm:$0xf]
      %v2692 = vld [vmem:[%s797 + $0x24] sm:$0xf]
      %v2693 = vld [vmem:[%s797 + $0x28] sm:$0xf]
      %v2694 = vld [vmem:[%s797 + $0x2c] sm:$0xf]
      %v2695 = vld [vmem:[%s797 + $0x30] sm:$0xf]
      %v2696 = vld [vmem:[%s797 + $0x34] sm:$0xf]
      %v2697 = vld [vmem:[%s797 + $0x38] sm:$0xf]
      %v2698 = vld [vmem:[%s797 + $0x3c] sm:$0xf]
      %v2699 = vld [vmem:[%s800] sm:$0x1]
      %v2701 = vlaneseq
      %v2702 = vshrl.u32 %v2701, 7
      %v2703 = vsub.s32 0, %v2702
      %v2704 = vrot.slane %v2699, %v2703
      %v2722 = vunpack.c.l.b16 %v2683
      %v2723 = vunpack.c.l.b16 %v2684
      %v2724 = vunpack.c.l.b16 %v2685
      %v2725 = vunpack.c.l.b16 %v2686
      %v2726 = vunpack.c.l.b16 %v2687
      %v2727 = vunpack.c.l.b16 %v2688
      %v2728 = vunpack.c.l.b16 %v2689
      %v2729 = vunpack.c.l.b16 %v2690
      %v2730 = vunpack.c.l.b16 %v2691
      %v2731 = vunpack.c.l.b16 %v2692
      %v2732 = vunpack.c.l.b16 %v2693
      %v2733 = vunpack.c.l.b16 %v2694
      %v2734 = vunpack.c.l.b16 %v2695
      %v2735 = vunpack.c.l.b16 %v2696
      %v2736 = vunpack.c.l.b16 %v2697
      %v2737 = vunpack.c.l.b16 %v2698
      %v2738 = vpack.c.b16 %v2723, %v2722
      %v2739 = vpack.c.b16 %v2725, %v2724
      %v2740 = vpack.c.b16 %v2727, %v2726
      %v2741 = vpack.c.b16 %v2729, %v2728
      %v2742 = vpack.c.b16 %v2731, %v2730
      %v2743 = vpack.c.b16 %v2733, %v2732
      %v2744 = vpack.c.b16 %v2735, %v2734
      %v2745 = vpack.c.b16 %v2737, %v2736
      %2754 = vmatprep.subr.bf16.mxu0 0
      %2755 = vmatpush1.bf16.msra.mxu0 %v2745
      %2756 = vmatprep.subr.bf16.mxu0 0
      %2757 = vmatpush1.bf16.msra.mxu0 %v2744
      %2758 = vmatprep.subr.bf16.mxu0 0
      %2759 = vmatpush1.bf16.msra.mxu0 %v2743
      %2760 = vmatprep.subr.bf16.mxu0 0
      %2761 = vmatpush1.bf16.msra.mxu0 %v2742
      %2762 = vmatprep.subr.bf16.mxu0 0
      %2763 = vmatpush1.bf16.msra.mxu0 %v2741
      %2764 = vmatprep.subr.bf16.mxu0 0
      %2765 = vmatpush1.bf16.msra.mxu0 %v2740
      %2766 = vmatprep.subr.bf16.mxu0 0
      %2767 = vmatpush1.bf16.msra.mxu0 %v2739
      %2768 = vmatprep.subr.bf16.mxu0 0
      %2769 = vmatpush1.bf16.msra.mxu0 %v2738
      %2770 = vmatprep.subr.bf16.mxu0 0
      %2771 = vmatpush2.bf16.msra.mxu0 0
      %2772 = vmatprep.subr.bf16.mxu0 0
      %2773 = vmatpush2.bf16.msra.mxu0 0
      %2774 = vmatprep.subr.bf16.mxu0 0
      %2775 = vmatpush2.bf16.msra.mxu0 0
      %2776 = vmatprep.subr.bf16.mxu0 0
      %2777 = vmatpush2.bf16.msra.mxu0 0
      %2778 = vmatprep.subr.bf16.mxu0 0
      %2779 = vmatpush2.bf16.msra.mxu0 0
      %2780 = vmatprep.subr.bf16.mxu0 0
      %2781 = vmatpush2.bf16.msra.mxu0 0
      %2782 = vmatprep.subr.bf16.mxu0 0
      %2783 = vmatpush2.bf16.msra.mxu0 0
      %2784 = vmatprep.subr.bf16.mxu0 0
      %2785 = vmatpush2.bf16.msra.mxu0 0
      %2786 = vmatprep.mubr.bf16.mxu0 0
      %2787 = vmatmul.mubr.bf16.gmra.mxu0 %v2682
      %v2788 = vpop.f32.mrf.mxu0
      %v2789 = vadd.f32 %v2704, %v2788
      %v2790 = vpop.f32.mrf.mxu0
      %v2791 = vpop.f32.mrf.mxu0
      %v2792 = vpop.f32.mrf.mxu0
      %2793 = vdwg.mxu0
      %v2794 = vadd.f32 %v835, %v2789
      %v2795 = vld [vmem:[%s803] sm:$0x1]
      %v2796 = vld [vmem:[%s806] sm:$0x1]
      %2797 = vadd.xlane.f32.xlu0 %v2794
      %v2798 = vpop.xlane.xlu0 %2797
      %v2799 = vmul.f32 %v2798, %v846
      %v2800 = vsub.f32 %v2794, %v2799
      %v2801 = vmul.f32 %v2800, %v2800
      %2802 = vadd.xlane.f32.xlu0 %v2801
      %v2803 = vpop.xlane.xlu0 %2802
      %v2804 = vmul.f32 %v2803, %v846
      %v2805 = vadd.f32 %v2804, 1e-05
      %v2806 = vrsqrt.pop %v2805
      %v2807 = vmul.f32 %v2800, %v2806
      %v2809 = vlaneseq
      %v2810 = vshrl.u32 %v2809, 7
      %v2811 = vsub.s32 0, %v2810
      %v2812 = vrot.slane %v2795, %v2811
      %v2814 = vmul.f32 %v2807, %v2812
      %v2816 = vlaneseq
      %v2817 = vshrl.u32 %v2816, 7
      %v2818 = vsub.s32 0, %v2817
      %v2819 = vrot.slane %v2796, %v2818
      %v2821 = vadd.f32 %v2814, %v2819
      %v2822 = vpack.c.bf16 %v2821, %v2821
      %v2823 = vld [vmem:[%s811] sm:$0xff]
      %v2824 = vld [vmem:[%s811 + $0x8] sm:$0xff]
      %v2825 = vld [vmem:[%s811 + $0x10] sm:$0xff]
      %v2826 = vld [vmem:[%s811 + $0x18] sm:$0xff]
      %v2827 = vld [vmem:[%s811 + $0x20] sm:$0xff]
      %v2828 = vld [vmem:[%s811 + $0x28] sm:$0xff]
      %v2829 = vld [vmem:[%s811 + $0x30] sm:$0xff]
      %v2830 = vld [vmem:[%s811 + $0x38] sm:$0xff]
      %v2831 = vld [vmem:[%s811 + $0x40] sm:$0xff]
      %v2832 = vld [vmem:[%s811 + $0x48] sm:$0xff]
      %v2833 = vld [vmem:[%s811 + $0x50] sm:$0xff]
      %v2834 = vld [vmem:[%s811 + $0x58] sm:$0xff]
      %v2835 = vld [vmem:[%s811 + $0x60] sm:$0xff]
      %v2836 = vld [vmem:[%s811 + $0x68] sm:$0xff]
      %v2837 = vld [vmem:[%s811 + $0x70] sm:$0xff]
      %v2838 = vld [vmem:[%s811 + $0x78] sm:$0xff]
      %v2839 = vld [vmem:[%s811 + $0x80] sm:$0xff]
      %v2840 = vld [vmem:[%s811 + $0x88] sm:$0xff]
      %v2841 = vld [vmem:[%s811 + $0x90] sm:$0xff]
      %v2842 = vld [vmem:[%s811 + $0x98] sm:$0xff]
      %v2843 = vld [vmem:[%s811 + $0xa0] sm:$0xff]
      %v2844 = vld [vmem:[%s811 + $0xa8] sm:$0xff]
      %v2845 = vld [vmem:[%s811 + $0xb0] sm:$0xff]
      %v2846 = vld [vmem:[%s811 + $0xb8] sm:$0xff]
      %v2847 = vld [vmem:[%s811 + $0xc0] sm:$0xff]
      %v2848 = vld [vmem:[%s811 + $0xc8] sm:$0xff]
      %v2849 = vld [vmem:[%s811 + $0xd0] sm:$0xff]
      %v2850 = vld [vmem:[%s811 + $0xd8] sm:$0xff]
      %v2851 = vld [vmem:[%s811 + $0xe0] sm:$0xff]
      %v2852 = vld [vmem:[%s811 + $0xe8] sm:$0xff]
      %v2853 = vld [vmem:[%s811 + $0xf0] sm:$0xff]
      %v2854 = vld [vmem:[%s811 + $0xf8] sm:$0xff]
      %v2855 = vld [vmem:[%s815] sm:$0xf]
      %v2857 = vlaneseq
      %v2858 = vshrl.u32 %v2857, 7
      %v2859 = vsub.s32 0, %v2858
      %v2860 = vrot.slane %v2855, %v2859
      %v2861 = vlaneseq
      %v2862 = vshrl.u32 %v2861, 7
      %v2863 = vsub.s32 1, %v2862
      %v2864 = vrot.slane %v2855, %v2863
      %v2865 = vlaneseq
      %v2866 = vshrl.u32 %v2865, 7
      %v2867 = vsub.s32 2, %v2866
      %v2868 = vrot.slane %v2855, %v2867
      %v2869 = vlaneseq
      %v2870 = vshrl.u32 %v2869, 7
      %v2871 = vsub.s32 3, %v2870
      %v2872 = vrot.slane %v2855, %v2871
      %v2909 = vunpack.c.l.b16 %v2823
      %v2910 = vunpack.c.h.b16 %v2823
      %v2911 = vunpack.c.l.b16 %v2824
      %v2912 = vunpack.c.h.b16 %v2824
      %v2913 = vunpack.c.l.b16 %v2825
      %v2914 = vunpack.c.h.b16 %v2825
      %v2915 = vunpack.c.l.b16 %v2826
      %v2916 = vunpack.c.h.b16 %v2826
      %v2917 = vunpack.c.l.b16 %v2827
      %v2918 = vunpack.c.h.b16 %v2827
      %v2919 = vunpack.c.l.b16 %v2828
      %v2920 = vunpack.c.h.b16 %v2828
      %v2921 = vunpack.c.l.b16 %v2829
      %v2922 = vunpack.c.h.b16 %v2829
      %v2923 = vunpack.c.l.b16 %v2830
      %v2924 = vunpack.c.h.b16 %v2830
      %v2925 = vunpack.c.l.b16 %v2831
      %v2926 = vunpack.c.h.b16 %v2831
      %v2927 = vunpack.c.l.b16 %v2832
      %v2928 = vunpack.c.h.b16 %v2832
      %v2929 = vunpack.c.l.b16 %v2833
      %v2930 = vunpack.c.h.b16 %v2833
      %v2931 = vunpack.c.l.b16 %v2834
      %v2932 = vunpack.c.h.b16 %v2834
      %v2933 = vunpack.c.l.b16 %v2835
      %v2934 = vunpack.c.h.b16 %v2835
      %v2935 = vunpack.c.l.b16 %v2836
      %v2936 = vunpack.c.h.b16 %v2836
      %v2937 = vunpack.c.l.b16 %v2837
      %v2938 = vunpack.c.h.b16 %v2837
      %v2939 = vunpack.c.l.b16 %v2838
      %v2940 = vunpack.c.h.b16 %v2838
      %v2941 = vunpack.c.l.b16 %v2839
      %v2942 = vunpack.c.h.b16 %v2839
      %v2943 = vunpack.c.l.b16 %v2840
      %v2944 = vunpack.c.h.b16 %v2840
      %v2945 = vunpack.c.l.b16 %v2841
      %v2946 = vunpack.c.h.b16 %v2841
      %v2947 = vunpack.c.l.b16 %v2842
      %v2948 = vunpack.c.h.b16 %v2842
      %v2949 = vunpack.c.l.b16 %v2843
      %v2950 = vunpack.c.h.b16 %v2843
      %v2951 = vunpack.c.l.b16 %v2844
      %v2952 = vunpack.c.h.b16 %v2844
      %v2953 = vunpack.c.l.b16 %v2845
      %v2954 = vunpack.c.h.b16 %v2845
      %v2955 = vunpack.c.l.b16 %v2846
      %v2956 = vunpack.c.h.b16 %v2846
      %v2957 = vunpack.c.l.b16 %v2847
      %v2958 = vunpack.c.h.b16 %v2847
      %v2959 = vunpack.c.l.b16 %v2848
      %v2960 = vunpack.c.h.b16 %v2848
      %v2961 = vunpack.c.l.b16 %v2849
      %v2962 = vunpack.c.h.b16 %v2849
      %v2963 = vunpack.c.l.b16 %v2850
      %v2964 = vunpack.c.h.b16 %v2850
      %v2965 = vunpack.c.l.b16 %v2851
      %v2966 = vunpack.c.h.b16 %v2851
      %v2967 = vunpack.c.l.b16 %v2852
      %v2968 = vunpack.c.h.b16 %v2852
      %v2969 = vunpack.c.l.b16 %v2853
      %v2970 = vunpack.c.h.b16 %v2853
      %v2971 = vunpack.c.l.b16 %v2854
      %v2972 = vunpack.c.h.b16 %v2854
      %v2973 = vpack.c.b16 %v2913, %v2909
      %v2974 = vpack.c.b16 %v2914, %v2910
      %v2975 = vpack.c.b16 %v2915, %v2911
      %v2976 = vpack.c.b16 %v2916, %v2912
      %v2977 = vpack.c.b16 %v2921, %v2917
      %v2978 = vpack.c.b16 %v2922, %v2918
      %v2979 = vpack.c.b16 %v2923, %v2919
      %v2980 = vpack.c.b16 %v2924, %v2920
      %v2981 = vpack.c.b16 %v2929, %v2925
      %v2982 = vpack.c.b16 %v2930, %v2926
      %v2983 = vpack.c.b16 %v2931, %v2927
      %v2984 = vpack.c.b16 %v2932, %v2928
      %v2985 = vpack.c.b16 %v2937, %v2933
      %v2986 = vpack.c.b16 %v2938, %v2934
      %v2987 = vpack.c.b16 %v2939, %v2935
      %v2988 = vpack.c.b16 %v2940, %v2936
      %v2989 = vpack.c.b16 %v2945, %v2941
      %v2990 = vpack.c.b16 %v2946, %v2942
      %v2991 = vpack.c.b16 %v2947, %v2943
      %v2992 = vpack.c.b16 %v2948, %v2944
      %v2993 = vpack.c.b16 %v2953, %v2949
      %v2994 = vpack.c.b16 %v2954, %v2950
      %v2995 = vpack.c.b16 %v2955, %v2951
      %v2996 = vpack.c.b16 %v2956, %v2952
      %v2997 = vpack.c.b16 %v2961, %v2957
      %v2998 = vpack.c.b16 %v2962, %v2958
      %v2999 = vpack.c.b16 %v2963, %v2959
      %v3000 = vpack.c.b16 %v2964, %v2960
      %v3001 = vpack.c.b16 %v2969, %v2965
      %v3002 = vpack.c.b16 %v2970, %v2966
      %v3003 = vpack.c.b16 %v2971, %v2967
      %v3004 = vpack.c.b16 %v2972, %v2968
      %3037 = vmatprep.subr.bf16.mxu0 %v3002
      %3038 = vmatpush1.bf16.msra.mxu0 %v3001
      %3039 = vmatprep.subr.bf16.mxu0 %v2998
      %3040 = vmatpush1.bf16.msra.mxu0 %v2997
      %3041 = vmatprep.subr.bf16.mxu0 %v2994
      %3042 = vmatpush1.bf16.msra.mxu0 %v2993
      %3043 = vmatprep.subr.bf16.mxu0 %v2990
      %3044 = vmatpush1.bf16.msra.mxu0 %v2989
      %3045 = vmatprep.subr.bf16.mxu0 %v2986
      %3046 = vmatpush1.bf16.msra.mxu0 %v2985
      %3047 = vmatprep.subr.bf16.mxu0 %v2982
      %3048 = vmatpush1.bf16.msra.mxu0 %v2981
      %3049 = vmatprep.subr.bf16.mxu0 %v2978
      %3050 = vmatpush1.bf16.msra.mxu0 %v2977
      %3051 = vmatprep.subr.bf16.mxu0 %v2974
      %3052 = vmatpush1.bf16.msra.mxu0 %v2973
      %3053 = vmatprep.subr.bf16.mxu0 0
      %3054 = vmatpush2.bf16.msra.mxu0 0
      %3055 = vmatprep.subr.bf16.mxu0 0
      %3056 = vmatpush2.bf16.msra.mxu0 0
      %3057 = vmatprep.subr.bf16.mxu0 0
      %3058 = vmatpush2.bf16.msra.mxu0 0
      %3059 = vmatprep.subr.bf16.mxu0 0
      %3060 = vmatpush2.bf16.msra.mxu0 0
      %3061 = vmatprep.subr.bf16.mxu0 0
      %3062 = vmatpush2.bf16.msra.mxu0 0
      %3063 = vmatprep.subr.bf16.mxu0 0
      %3064 = vmatpush2.bf16.msra.mxu0 0
      %3065 = vmatprep.subr.bf16.mxu0 0
      %3066 = vmatpush2.bf16.msra.mxu0 0
      %3067 = vmatprep.subr.bf16.mxu0 0
      %3068 = vmatpush2.bf16.msra.mxu0 0
      %3069 = vmatprep.mubr.bf16.mxu0 0
      %3070 = vmatmul.mubr.bf16.gmra.mxu0 %v2822
      %v3071 = vpop.f32.mrf.mxu0
      %v3072 = vadd.f32 %v2860, %v3071
      %v3073 = vpop.f32.mrf.mxu0
      %v3074 = vadd.f32 %v2864, %v3073
      %v3075 = vpop.f32.mrf.mxu0
      %v3076 = vpop.f32.mrf.mxu0
      %3077 = vdwg.mxu0
      %3078 = vmatprep.subr.bf16.mxu0 %v3004
      %3079 = vmatpush1.bf16.msra.mxu0 %v3003
      %3080 = vmatprep.subr.bf16.mxu0 %v3000
      %3081 = vmatpush1.bf16.msra.mxu0 %v2999
      %3082 = vmatprep.subr.bf16.mxu0 %v2996
      %3083 = vmatpush1.bf16.msra.mxu0 %v2995
      %3084 = vmatprep.subr.bf16.mxu0 %v2992
      %3085 = vmatpush1.bf16.msra.mxu0 %v2991
      %3086 = vmatprep.subr.bf16.mxu0 %v2988
      %3087 = vmatpush1.bf16.msra.mxu0 %v2987
      %3088 = vmatprep.subr.bf16.mxu0 %v2984
      %3089 = vmatpush1.bf16.msra.mxu0 %v2983
      %3090 = vmatprep.subr.bf16.mxu0 %v2980
      %3091 = vmatpush1.bf16.msra.mxu0 %v2979
      %3092 = vmatprep.subr.bf16.mxu0 %v2976
      %3093 = vmatpush1.bf16.msra.mxu0 %v2975
      %3094 = vmatprep.subr.bf16.mxu0 0
      %3095 = vmatpush2.bf16.msra.mxu0 0
      %3096 = vmatprep.subr.bf16.mxu0 0
      %3097 = vmatpush2.bf16.msra.mxu0 0
      %3098 = vmatprep.subr.bf16.mxu0 0
      %3099 = vmatpush2.bf16.msra.mxu0 0
      %3100 = vmatprep.subr.bf16.mxu0 0
      %3101 = vmatpush2.bf16.msra.mxu0 0
      %3102 = vmatprep.subr.bf16.mxu0 0
      %3103 = vmatpush2.bf16.msra.mxu0 0
      %3104 = vmatprep.subr.bf16.mxu0 0
      %3105 = vmatpush2.bf16.msra.mxu0 0
      %3106 = vmatprep.subr.bf16.mxu0 0
      %3107 = vmatpush2.bf16.msra.mxu0 0
      %3108 = vmatprep.subr.bf16.mxu0 0
      %3109 = vmatpush2.bf16.msra.mxu0 0
      %3110 = vmatprep.mubr.bf16.mxu0 0
      %3111 = vmatmul.mubr.bf16.gmra.mxu0 %v2822
      %v3112 = vpop.f32.mrf.mxu0
      %v3113 = vadd.f32 %v2868, %v3112
      %v3114 = vpop.f32.mrf.mxu0
      %v3115 = vadd.f32 %v2872, %v3114
      %v3116 = vpop.f32.mrf.mxu0
      %v3117 = vpop.f32.mrf.mxu0
      %3118 = vdwg.mxu0
      %v3119 = vmul.f32 %v3072, 1.702
      %v3120 = vmul.f32 %v3074, 1.702
      %v3121 = vmul.f32 %v3113, 1.702
      %v3122 = vmul.f32 %v3115, 1.702
      %v3123 = vxor.u32 %v3119, 2147483648
      %v3124 = vxor.u32 %v3120, 2147483648
      %v3125 = vxor.u32 %v3121, 2147483648
      %v3126 = vxor.u32 %v3122, 2147483648
      %v3127 = vmul.f32 %v3123, 1.442695
      %v3128 = vpow.pop %v3127
      %v3129 = vmul.f32 %v3124, 1.442695
      %v3130 = vpow.pop %v3129
      %v3131 = vmul.f32 %v3125, 1.442695
      %v3132 = vpow.pop %v3131
      %v3133 = vmul.f32 %v3126, 1.442695
      %v3134 = vpow.pop %v3133
      %v3135 = vadd.f32 %v3128, 1.0
      %v3136 = vadd.f32 %v3130, 1.0
      %v3137 = vadd.f32 %v3132, 1.0
      %v3138 = vadd.f32 %v3134, 1.0
      %v3139 = vrcp.pop %v3135
      %v3140 = vmul.f32 1.0, %v3139
      %v3141 = vrcp.pop %v3136
      %v3142 = vmul.f32 1.0, %v3141
      %v3143 = vrcp.pop %v3137
      %v3144 = vmul.f32 1.0, %v3143
      %v3145 = vrcp.pop %v3138
      %v3146 = vmul.f32 1.0, %v3145
      %v3147 = vmul.f32 %v3072, %v3140
      %v3148 = vmul.f32 %v3074, %v3142
      %v3149 = vmul.f32 %v3113, %v3144
      %v3150 = vmul.f32 %v3115, %v3146
      %v3151 = vpack.c.bf16 %v3147, %v3147
      %v3152 = vpack.c.bf16 %v3148, %v3148
      %v3153 = vpack.c.bf16 %v3149, %v3149
      %v3154 = vpack.c.bf16 %v3150, %v3150
      %v3155 = vld [vmem:[%s820] sm:$0xf]
      %v3156 = vld [vmem:[%s820 + $0x4] sm:$0xf]
      %v3157 = vld [vmem:[%s820 + $0x8] sm:$0xf]
      %v3158 = vld [vmem:[%s820 + $0xc] sm:$0xf]
      %v3159 = vld [vmem:[%s820 + $0x10] sm:$0xf]
      %v3160 = vld [vmem:[%s820 + $0x14] sm:$0xf]
      %v3161 = vld [vmem:[%s820 + $0x18] sm:$0xf]
      %v3162 = vld [vmem:[%s820 + $0x1c] sm:$0xf]
      %v3163 = vld [vmem:[%s820 + $0x20] sm:$0xf]
      %v3164 = vld [vmem:[%s820 + $0x24] sm:$0xf]
      %v3165 = vld [vmem:[%s820 + $0x28] sm:$0xf]
      %v3166 = vld [vmem:[%s820 + $0x2c] sm:$0xf]
      %v3167 = vld [vmem:[%s820 + $0x30] sm:$0xf]
      %v3168 = vld [vmem:[%s820 + $0x34] sm:$0xf]
      %v3169 = vld [vmem:[%s820 + $0x38] sm:$0xf]
      %v3170 = vld [vmem:[%s820 + $0x3c] sm:$0xf]
      %v3171 = vld [vmem:[%s820 + $0x40] sm:$0xf]
      %v3172 = vld [vmem:[%s820 + $0x44] sm:$0xf]
      %v3173 = vld [vmem:[%s820 + $0x48] sm:$0xf]
      %v3174 = vld [vmem:[%s820 + $0x4c] sm:$0xf]
      %v3175 = vld [vmem:[%s820 + $0x50] sm:$0xf]
      %v3176 = vld [vmem:[%s820 + $0x54] sm:$0xf]
      %v3177 = vld [vmem:[%s820 + $0x58] sm:$0xf]
      %v3178 = vld [vmem:[%s820 + $0x5c] sm:$0xf]
      %v3179 = vld [vmem:[%s820 + $0x60] sm:$0xf]
      %v3180 = vld [vmem:[%s820 + $0x64] sm:$0xf]
      %v3181 = vld [vmem:[%s820 + $0x68] sm:$0xf]
      %v3182 = vld [vmem:[%s820 + $0x6c] sm:$0xf]
      %v3183 = vld [vmem:[%s820 + $0x70] sm:$0xf]
      %v3184 = vld [vmem:[%s820 + $0x74] sm:$0xf]
      %v3185 = vld [vmem:[%s820 + $0x78] sm:$0xf]
      %v3186 = vld [vmem:[%s820 + $0x7c] sm:$0xf]
      %v3187 = vld [vmem:[%s820 + $0x80] sm:$0xf]
      %v3188 = vld [vmem:[%s820 + $0x84] sm:$0xf]
      %v3189 = vld [vmem:[%s820 + $0x88] sm:$0xf]
      %v3190 = vld [vmem:[%s820 + $0x8c] sm:$0xf]
      %v3191 = vld [vmem:[%s820 + $0x90] sm:$0xf]
      %v3192 = vld [vmem:[%s820 + $0x94] sm:$0xf]
      %v3193 = vld [vmem:[%s820 + $0x98] sm:$0xf]
      %v3194 = vld [vmem:[%s820 + $0x9c] sm:$0xf]
      %v3195 = vld [vmem:[%s820 + $0xa0] sm:$0xf]
      %v3196 = vld [vmem:[%s820 + $0xa4] sm:$0xf]
      %v3197 = vld [vmem:[%s820 + $0xa8] sm:$0xf]
      %v3198 = vld [vmem:[%s820 + $0xac] sm:$0xf]
      %v3199 = vld [vmem:[%s820 + $0xb0] sm:$0xf]
      %v3200 = vld [vmem:[%s820 + $0xb4] sm:$0xf]
      %v3201 = vld [vmem:[%s820 + $0xb8] sm:$0xf]
      %v3202 = vld [vmem:[%s820 + $0xbc] sm:$0xf]
      %v3203 = vld [vmem:[%s820 + $0xc0] sm:$0xf]
      %v3204 = vld [vmem:[%s820 + $0xc4] sm:$0xf]
      %v3205 = vld [vmem:[%s820 + $0xc8] sm:$0xf]
      %v3206 = vld [vmem:[%s820 + $0xcc] sm:$0xf]
      %v3207 = vld [vmem:[%s820 + $0xd0] sm:$0xf]
      %v3208 = vld [vmem:[%s820 + $0xd4] sm:$0xf]
      %v3209 = vld [vmem:[%s820 + $0xd8] sm:$0xf]
      %v3210 = vld [vmem:[%s820 + $0xdc] sm:$0xf]
      %v3211 = vld [vmem:[%s820 + $0xe0] sm:$0xf]
      %v3212 = vld [vmem:[%s820 + $0xe4] sm:$0xf]
      %v3213 = vld [vmem:[%s820 + $0xe8] sm:$0xf]
      %v3214 = vld [vmem:[%s820 + $0xec] sm:$0xf]
      %v3215 = vld [vmem:[%s820 + $0xf0] sm:$0xf]
      %v3216 = vld [vmem:[%s820 + $0xf4] sm:$0xf]
      %v3217 = vld [vmem:[%s820 + $0xf8] sm:$0xf]
      %v3218 = vld [vmem:[%s820 + $0xfc] sm:$0xf]
      %v3219 = vld [vmem:[%s823] sm:$0x1]
      %v3221 = vlaneseq
      %v3222 = vshrl.u32 %v3221, 7
      %v3223 = vsub.s32 0, %v3222
      %v3224 = vrot.slane %v3219, %v3223
      %v3290 = vunpack.c.l.b16 %v3155
      %v3291 = vunpack.c.l.b16 %v3156
      %v3292 = vunpack.c.l.b16 %v3157
      %v3293 = vunpack.c.l.b16 %v3158
      %v3294 = vunpack.c.l.b16 %v3159
      %v3295 = vunpack.c.l.b16 %v3160
      %v3296 = vunpack.c.l.b16 %v3161
      %v3297 = vunpack.c.l.b16 %v3162
      %v3298 = vunpack.c.l.b16 %v3163
      %v3299 = vunpack.c.l.b16 %v3164
      %v3300 = vunpack.c.l.b16 %v3165
      %v3301 = vunpack.c.l.b16 %v3166
      %v3302 = vunpack.c.l.b16 %v3167
      %v3303 = vunpack.c.l.b16 %v3168
      %v3304 = vunpack.c.l.b16 %v3169
      %v3305 = vunpack.c.l.b16 %v3170
      %v3306 = vunpack.c.l.b16 %v3171
      %v3307 = vunpack.c.l.b16 %v3172
      %v3308 = vunpack.c.l.b16 %v3173
      %v3309 = vunpack.c.l.b16 %v3174
      %v3310 = vunpack.c.l.b16 %v3175
      %v3311 = vunpack.c.l.b16 %v3176
      %v3312 = vunpack.c.l.b16 %v3177
      %v3313 = vunpack.c.l.b16 %v3178
      %v3314 = vunpack.c.l.b16 %v3179
      %v3315 = vunpack.c.l.b16 %v3180
      %v3316 = vunpack.c.l.b16 %v3181
      %v3317 = vunpack.c.l.b16 %v3182
      %v3318 = vunpack.c.l.b16 %v3183
      %v3319 = vunpack.c.l.b16 %v3184
      %v3320 = vunpack.c.l.b16 %v3185
      %v3321 = vunpack.c.l.b16 %v3186
      %v3322 = vunpack.c.l.b16 %v3187
      %v3323 = vunpack.c.l.b16 %v3188
      %v3324 = vunpack.c.l.b16 %v3189
      %v3325 = vunpack.c.l.b16 %v3190
      %v3326 = vunpack.c.l.b16 %v3191
      %v3327 = vunpack.c.l.b16 %v3192
      %v3328 = vunpack.c.l.b16 %v3193
      %v3329 = vunpack.c.l.b16 %v3194
      %v3330 = vunpack.c.l.b16 %v3195
      %v3331 = vunpack.c.l.b16 %v3196
      %v3332 = vunpack.c.l.b16 %v3197
      %v3333 = vunpack.c.l.b16 %v3198
      %v3334 = vunpack.c.l.b16 %v3199
      %v3335 = vunpack.c.l.b16 %v3200
      %v3336 = vunpack.c.l.b16 %v3201
      %v3337 = vunpack.c.l.b16 %v3202
      %v3338 = vunpack.c.l.b16 %v3203
      %v3339 = vunpack.c.l.b16 %v3204
      %v3340 = vunpack.c.l.b16 %v3205
      %v3341 = vunpack.c.l.b16 %v3206
      %v3342 = vunpack.c.l.b16 %v3207
      %v3343 = vunpack.c.l.b16 %v3208
      %v3344 = vunpack.c.l.b16 %v3209
      %v3345 = vunpack.c.l.b16 %v3210
      %v3346 = vunpack.c.l.b16 %v3211
      %v3347 = vunpack.c.l.b16 %v3212
      %v3348 = vunpack.c.l.b16 %v3213
      %v3349 = vunpack.c.l.b16 %v3214
      %v3350 = vunpack.c.l.b16 %v3215
      %v3351 = vunpack.c.l.b16 %v3216
      %v3352 = vunpack.c.l.b16 %v3217
      %v3353 = vunpack.c.l.b16 %v3218
      %v3354 = vpack.c.b16 %v3291, %v3290
      %v3355 = vpack.c.b16 %v3293, %v3292
      %v3356 = vpack.c.b16 %v3295, %v3294
      %v3357 = vpack.c.b16 %v3297, %v3296
      %v3358 = vpack.c.b16 %v3299, %v3298
      %v3359 = vpack.c.b16 %v3301, %v3300
      %v3360 = vpack.c.b16 %v3303, %v3302
      %v3361 = vpack.c.b16 %v3305, %v3304
      %v3362 = vpack.c.b16 %v3307, %v3306
      %v3363 = vpack.c.b16 %v3309, %v3308
      %v3364 = vpack.c.b16 %v3311, %v3310
      %v3365 = vpack.c.b16 %v3313, %v3312
      %v3366 = vpack.c.b16 %v3315, %v3314
      %v3367 = vpack.c.b16 %v3317, %v3316
      %v3368 = vpack.c.b16 %v3319, %v3318
      %v3369 = vpack.c.b16 %v3321, %v3320
      %v3370 = vpack.c.b16 %v3323, %v3322
      %v3371 = vpack.c.b16 %v3325, %v3324
      %v3372 = vpack.c.b16 %v3327, %v3326
      %v3373 = vpack.c.b16 %v3329, %v3328
      %v3374 = vpack.c.b16 %v3331, %v3330
      %v3375 = vpack.c.b16 %v3333, %v3332
      %v3376 = vpack.c.b16 %v3335, %v3334
      %v3377 = vpack.c.b16 %v3337, %v3336
      %v3378 = vpack.c.b16 %v3339, %v3338
      %v3379 = vpack.c.b16 %v3341, %v3340
      %v3380 = vpack.c.b16 %v3343, %v3342
      %v3381 = vpack.c.b16 %v3345, %v3344
      %v3382 = vpack.c.b16 %v3347, %v3346
      %v3383 = vpack.c.b16 %v3349, %v3348
      %v3384 = vpack.c.b16 %v3351, %v3350
      %v3385 = vpack.c.b16 %v3353, %v3352
      %3418 = vmatprep.subr.bf16.mxu0 0
      %3419 = vmatpush1.bf16.msra.mxu0 %v3361
      %3420 = vmatprep.subr.bf16.mxu0 0
      %3421 = vmatpush1.bf16.msra.mxu0 %v3360
      %3422 = vmatprep.subr.bf16.mxu0 0
      %3423 = vmatpush1.bf16.msra.mxu0 %v3359
      %3424 = vmatprep.subr.bf16.mxu0 0
      %3425 = vmatpush1.bf16.msra.mxu0 %v3358
      %3426 = vmatprep.subr.bf16.mxu0 0
      %3427 = vmatpush1.bf16.msra.mxu0 %v3357
      %3428 = vmatprep.subr.bf16.mxu0 0
      %3429 = vmatpush1.bf16.msra.mxu0 %v3356
      %3430 = vmatprep.subr.bf16.mxu0 0
      %3431 = vmatpush1.bf16.msra.mxu0 %v3355
      %3432 = vmatprep.subr.bf16.mxu0 0
      %3433 = vmatpush1.bf16.msra.mxu0 %v3354
      %3434 = vmatprep.subr.bf16.mxu0 0
      %3435 = vmatpush2.bf16.msra.mxu0 %v3369
      %3436 = vmatprep.subr.bf16.mxu0 0
      %3437 = vmatpush2.bf16.msra.mxu0 %v3368
      %3438 = vmatprep.subr.bf16.mxu0 0
      %3439 = vmatpush2.bf16.msra.mxu0 %v3367
      %3440 = vmatprep.subr.bf16.mxu0 0
      %3441 = vmatpush2.bf16.msra.mxu0 %v3366
      %3442 = vmatprep.subr.bf16.mxu0 0
      %3443 = vmatpush2.bf16.msra.mxu0 %v3365
      %3444 = vmatprep.subr.bf16.mxu0 0
      %3445 = vmatpush2.bf16.msra.mxu0 %v3364
      %3446 = vmatprep.subr.bf16.mxu0 0
      %3447 = vmatpush2.bf16.msra.mxu0 %v3363
      %3448 = vmatprep.subr.bf16.mxu0 0
      %3449 = vmatpush2.bf16.msra.mxu0 %v3362
      %3450 = vmatprep.mubr.bf16.mxu0 %v3152
      %3451 = vmatmul.mubr.bf16.gmra.mxu0 %v3151
      %v3452 = vpop.f32.mrf.mxu0
      %v3453 = vadd.f32 %v3224, %v3452
      %v3454 = vpop.f32.mrf.mxu0
      %v3455 = vpop.f32.mrf.mxu0
      %v3456 = vpop.f32.mrf.mxu0
      %3457 = vdwg.mxu0
      %3458 = vmatprep.subr.bf16.mxu0 0
      %3459 = vmatpush1.bf16.msra.mxu0 %v3377
      %3460 = vmatprep.subr.bf16.mxu0 0
      %3461 = vmatpush1.bf16.msra.mxu0 %v3376
      %3462 = vmatprep.subr.bf16.mxu0 0
      %3463 = vmatpush1.bf16.msra.mxu0 %v3375
      %3464 = vmatprep.subr.bf16.mxu0 0
      %3465 = vmatpush1.bf16.msra.mxu0 %v3374
      %3466 = vmatprep.subr.bf16.mxu0 0
      %3467 = vmatpush1.bf16.msra.mxu0 %v3373
      %3468 = vmatprep.subr.bf16.mxu0 0
      %3469 = vmatpush1.bf16.msra.mxu0 %v3372
      %3470 = vmatprep.subr.bf16.mxu0 0
      %3471 = vmatpush1.bf16.msra.mxu0 %v3371
      %3472 = vmatprep.subr.bf16.mxu0 0
      %3473 = vmatpush1.bf16.msra.mxu0 %v3370
      %3474 = vmatprep.subr.bf16.mxu0 0
      %3475 = vmatpush2.bf16.msra.mxu0 %v3385
      %3476 = vmatprep.subr.bf16.mxu0 0
      %3477 = vmatpush2.bf16.msra.mxu0 %v3384
      %3478 = vmatprep.subr.bf16.mxu0 0
      %3479 = vmatpush2.bf16.msra.mxu0 %v3383
      %3480 = vmatprep.subr.bf16.mxu0 0
      %3481 = vmatpush2.bf16.msra.mxu0 %v3382
      %3482 = vmatprep.subr.bf16.mxu0 0
      %3483 = vmatpush2.bf16.msra.mxu0 %v3381
      %3484 = vmatprep.subr.bf16.mxu0 0
      %3485 = vmatpush2.bf16.msra.mxu0 %v3380
      %3486 = vmatprep.subr.bf16.mxu0 0
      %3487 = vmatpush2.bf16.msra.mxu0 %v3379
      %3488 = vmatprep.subr.bf16.mxu0 0
      %3489 = vmatpush2.bf16.msra.mxu0 %v3378
      %3490 = vmatprep.mubr.bf16.mxu0 %v3154
      %3491 = vmatmul.mubr.bf16.gmra.mxu0 %v3153
      %v3492 = vpop.f32.mrf.mxu0
      %v3493 = vadd.f32 %v3453, %v3492
      %v3494 = vpop.f32.mrf.mxu0
      %v3495 = vpop.f32.mrf.mxu0
      %v3496 = vpop.f32.mrf.mxu0
      %3497 = vdwg.mxu0
      %v3498 = vadd.f32 %v2794, %v3493
      %3499 = vst [vmem:[%s827] sm:$0xff] %v3498
      %p3500 = scmp.lt.s32.totalorder %s32, 1
      %s3501 = scalar_select %p3500, %s32, 1
      %s3502 = smul.addr %s3501, 8
      %s3503 = scalar_lea.vmem %s17, %s3502
      // Predicated region
      $region93: #{clip_text_forward.2} parent=87 // pred_check
        %p3504 = pneg %p500
      $region94: #{clip_text_forward.2} parent=87 // pred_check_branch
        %3506 = sbr.rel (%p3504) target = $region96
      $region95: #{clip_text_forward.2} parent=87 // pred_region
        _
      $region96: #{clip_text_forward.2} parent=87 // pred_fallthru
        _
    $region88: #{clip_text_forward.2} parent=5 // pred_fallthru
      _
    %p3507 = scmp.le.s32.totalorder 2, %s23
    // Predicated region
    $region97: #{clip_text_forward.2} parent=5 // pred_check
      %p3508 = pneg %p3507
    $region98: #{clip_text_forward.2} parent=5 // pred_check_branch
      %3510 = sbr.rel (%p3508) target = $region100
    $region99: #{clip_text_forward.2} parent=5 // pred_region
      %s3511 = ssub.s32 %s23, 2
      // Predicated region
      $region101: #{clip_text_forward.2} parent=99 // pred_check
        %p3512 = pneg %p506
      $region102: #{clip_text_forward.2} parent=99 // pred_check_branch
        %3514 = sbr.rel (%p3512) target = $region104
      $region103: #{clip_text_forward.2} parent=99 // pred_region
        %p3515 = scmp.lt.s32.totalorder %s34, 1
        %s3516 = scalar_select %p3515, %s34, 1
        %s3517 = smul.addr %s3516, 8
        %s3518 = scalar_lea.vmem %s17, %s3517
      $region104: #{clip_text_forward.2} parent=99 // pred_fallthru
        _
    $region100: #{clip_text_forward.2} parent=5 // pred_fallthru
      _
  $region6: #{clip_text_forward.2} parent=0 // loop_footer
    %s27 = sadd.s32 1, %s23
  $region7: #{clip_text_forward.2} parent=0 // loop_footer_branch
    %22 = sbr.rel target = $region3
  $region8: #{clip_text_forward.2} parent=0 // loop_exit
    _

</llo_original>
